<compile_context>
chip_gen: v7x
topology: tpu7x:2x2x1
jax: 0.10.0
libtpu: 0.0.40
codegen_flags: <defaults>
</compile_context>

<pallas_src>
import functools
import math

import jax
import jax.numpy as jnp
from jax.experimental import pallas as pl
from jax.experimental.pallas import tpu as pltpu


def _layernorm(v, g, b, eps=1e-5):
    mu = jnp.mean(v, axis=-1, keepdims=True)
    var = jnp.mean((v - mu) ** 2, axis=-1, keepdims=True)
    return (v - mu) * jax.lax.rsqrt(var + eps) * g + b


def _fused_transformer_kernel(num_layers, n_head,
                              x_ref, keep_col_ref, keep_row_ref,
                              vec_ref, bqkv_ref, b1_ref,
                              wqkv_ref, wo_ref, w1_ref, w2_ref,
                              norm_ref,
                              o_ref,
                              act_ref, bias_ref):
    """Grid = (batch_block, layer). One residual block per step; the activation
    block stays resident in act_ref across the layer axis; final LayerNorm is
    fused into the last layer step."""
    layer = pl.program_id(1)
    bt, L, d = x_ref.shape
    R = bt * L
    H = n_head
    dh = d // H

    # First layer of this batch block: pull activations into the resident VMEM
    # buffer and build the additive attention bias once (reused by all layers).
    # bias = 0 where both query & key valid, -1e30 otherwise
    # (== torch.logical_or(mask_q, mask_k) as an additive mask).
    @pl.when(layer == 0)
    def _():
        act_ref[...] = x_ref[...].reshape(R, d)
        bias_ref[...] = (keep_col_ref[...] * keep_row_ref[...] - 1.0) * 1e30

    x = act_ref[...]                       # (R, d) f32 residual stream
    keep_c = keep_col_ref[...]             # (bt, L, 1)  1.0 = valid token
    bias = bias_ref[...]                   # (bt, L, L)

    vec = vec_ref[0]                       # (6, d) per-layer small vectors
    ln1_g, ln1_b = vec[0:1], vec[1:2]
    ln2_g, ln2_b = vec[2:3], vec[3:4]
    bo, b2 = vec[4:5], vec[5:6]

    # ---------------- multi-head self-attention (pre-LN) ----------------
    h = _layernorm(x, ln1_g, ln1_b).astype(jnp.bfloat16)              # (R, d)
    # Single fused QKV projection (MXU N = 3d lanes); softmax scale is already
    # folded into the q columns / q bias at param-prep time.
    qkv = (jnp.dot(h, wqkv_ref[0], preferred_element_type=jnp.float32)
           + bqkv_ref[0]).astype(jnp.bfloat16)                         # (R, 3d)

    ctx_parts = []
    for hh in range(H):                    # per-(tile, head) attention core
        qh = qkv[:, 0 * d + hh * dh: 0 * d + (hh + 1) * dh].reshape(bt, L, dh)
        kh = qkv[:, 1 * d + hh * dh: 1 * d + (hh + 1) * dh].reshape(bt, L, dh)
        vh = qkv[:, 2 * d + hh * dh: 2 * d + (hh + 1) * dh].reshape(bt, L, dh)
        s = jnp.einsum('bqe,bke->bqk', qh, kh,
                       preferred_element_type=jnp.float32) + bias      # (bt, L, L)
        m = jnp.max(s, axis=-1, keepdims=True)
        e = jnp.exp(s - m)
        p = e * pl.reciprocal(jnp.sum(e, axis=-1, keepdims=True), approx=True)
        ch = jnp.einsum('bqk,bke->bqe', p.astype(jnp.bfloat16), vh,
                        preferred_element_type=jnp.float32)            # (bt, L, dh)
        ctx_parts.append(ch.reshape(R, dh))
    ctx = jnp.concatenate(ctx_parts, axis=-1).astype(jnp.bfloat16)     # (R, d)

    # Single fused output projection (contracts full K = d).
    attn = jnp.dot(ctx, wo_ref[0], preferred_element_type=jnp.float32) + bo
    x = x + attn

    # ---------------- MLP (pre-LN) ----------------
    h2 = _layernorm(x, ln2_g, ln2_b).astype(jnp.bfloat16)
    f = jnp.dot(h2, w1_ref[0], preferred_element_type=jnp.float32) + b1_ref[0]
    # tanh GELU runs on the EUP slot.
    # TODO(synk): switch to approximate=False if exact erf-GELU parity is required.
    f = jax.nn.gelu(f, approximate=True)
    f = jnp.dot(f.astype(jnp.bfloat16), w2_ref[0],
                preferred_element_type=jnp.float32) + b2
    x = x + f

    # Reference zeroes padded positions after every block:
    #   output = zeros_like(...); output[~mask] = output_temp[~mask]
    x = (x.reshape(bt, L, d) * keep_c).reshape(R, d)
    act_ref[...] = x

    # Last layer: fused output LayerNorm, single HBM writeback per batch block.
    @pl.when(layer == num_layers - 1)
    def _():
        o_ref[...] = _layernorm(x, norm_ref[0:1, :],
                                norm_ref[1:2, :]).reshape(bt, L, d)


def _pick_batch_tile(b, L, max_rows=512):
    """Largest divisor of b with >=2 batch blocks (feeds both v7x TensorCores)
    and a bounded number of resident rows."""
    best = 1
    for t in range(1, b + 1):
        if b % t:
            continue
        if t * L > max_rows:
            continue
        if b > 1 and b // t < 2:
            continue
        best = t
    return best


def _vmem_limit_bytes():
    """~75% of this generation's per-core VMEM (48 MiB on v7x, 96 MiB on v5e/v6e)."""
    cap = 128 * 1024 * 1024
    try:
        info = pltpu.get_tpu_info()
        cap = int(getattr(info, "vmem_capacity_bytes", cap)) or cap
    except Exception:
        pass
    return max(32 * 1024 * 1024, (cap // 4) * 3)


def semantic_transformer(x, mask, params, n_head, batch_tile=None):
    """x: (b, d, L) f32; mask: (b, L) bool (True == padding). Returns (b, d, L)."""
    b, d, L = x.shape
    num_layers = params["wqkv"].shape[0]
    dff = params["w1"].shape[-1]

    xt = jnp.transpose(x, (0, 2, 1)).astype(jnp.float32)      # (b, L, d)
    keep = (~mask).astype(jnp.float32)                        # 1.0 = valid
    keep_col = keep[:, :, None]                               # (b, L, 1)
    keep_row = keep[:, None, :]                               # (b, 1, L)

    bt = batch_tile if batch_tile is not None else _pick_batch_tile(b, L)
    assert b % bt == 0, "batch must be divisible by the batch tile"
    nb = b // bt

    kernel = functools.partial(_fused_transformer_kernel, num_layers, n_head)

    act_map = lambda i, l: (i, 0, 0)    # per-batch-block, layer-invariant
    lyr = lambda i, l: (l, 0, 0)        # per-layer stacked params
    cst = lambda i, l: (0, 0)           # final-norm params

    flops = int(num_layers * (2 * b * L * d * (4 * d + 2 * dff) + 4 * b * L * L * d))
    transcendentals = int(num_layers * b * (n_head * L * L + L * dff))
    w_bytes_per_layer = (4 * d * d + 2 * d * dff) * 2 + (9 * d + dff) * 4
    bytes_accessed = int(2 * b * L * d * 4 + 2 * b * L * 4
                         + nb * num_layers * w_bytes_per_layer)

    grid_spec = pltpu.PrefetchScalarGridSpec(
        num_scalar_prefetch=0,
        grid=(nb, num_layers),
        in_specs=[
            pl.BlockSpec((bt, L, d), act_map),              # x (read at layer 0)
            pl.BlockSpec((bt, L, 1), act_map),              # keep_col
            pl.BlockSpec((bt, 1, L), act_map),              # keep_row
            pl.BlockSpec((1, 6, d), lyr),                   # ln1g,ln1b,ln2g,ln2b,bo,b2
            pl.BlockSpec((1, 1, 3 * d), lyr),               # fused qkv bias
            pl.BlockSpec((1, 1, dff), lyr),                 # b1
            pl.BlockSpec((1, d, 3 * d), lyr),               # fused Wqkv (bf16)
            pl.BlockSpec((1, d, d), lyr),                   # Wo (bf16)
            pl.BlockSpec((1, d, dff), lyr),                 # W1 (bf16)
            pl.BlockSpec((1, dff, d), lyr),                 # W2 (bf16)
            pl.BlockSpec((2, d), cst),                      # out-norm gamma+beta
        ],
        out_specs=pl.BlockSpec((bt, L, d), act_map),
        scratch_shapes=[pltpu.VMEM((bt * L, d), jnp.float32),   # resident activation
                        pltpu.VMEM((bt, L, L), jnp.float32)],   # attention bias
    )

    out = pl.pallas_call(
        kernel,
        out_shape=jax.ShapeDtypeStruct((b, L, d), jnp.float32),
        grid_spec=grid_spec,
        compiler_params=pltpu.CompilerParams(
            dimension_semantics=("parallel", "arbitrary"),
            vmem_limit_bytes=_vmem_limit_bytes()),
        cost_estimate=pl.CostEstimate(flops=flops,
                                      transcendentals=transcendentals,
                                      bytes_accessed=bytes_accessed),
        input_output_aliases={0: 0},        # xt is a fresh transpose copy -> safe
    )(xt, keep_col, keep_row,
      params["vec"], params["bqkv"], params["b1"],
      params["wqkv"], params["wo"], params["w1"], params["w2"],
      params["norm"])

    return jnp.transpose(out, (0, 2, 1))                     # (b, d, L)


# ---------------------------------------------------------------------------
# Parameter plumbing: convert per-layer PyTorch-style weights into the stacked,
# fused, bf16 layout the kernel consumes.
# ---------------------------------------------------------------------------
def _prepare_params(layer_params, norm_g, norm_b, n_head):
    d = layer_params[0]["w_qkv"].shape[0]
    dh = d // n_head
    scale = 1.0 / math.sqrt(dh)

    acc = {k: [] for k in ("wqkv", "bqkv", "wo", "w1", "w2", "b1", "vec")}
    for p in layer_params:
        w_qkv = p["w_qkv"]                                  # (d, 3d), x @ W conv.
        b_qkv = p["b_qkv"]                                  # (3d,)
        # fold the softmax scale into the q columns / q bias (zero in-kernel cost)
        w_qkv = jnp.concatenate([w_qkv[:, :d] * scale, w_qkv[:, d:]], axis=1)
        b_qkv = jnp.concatenate([b_qkv[:d] * scale, b_qkv[d:]], axis=0)
        acc["wqkv"].append(w_qkv)
        acc["bqkv"].append(b_qkv.reshape(1, 3 * d))
        acc["wo"].append(p["w_out"])                        # (d, d), rows = (h, e)
        acc["w1"].append(p["w1"])
        acc["w2"].append(p["w2"])
        acc["b1"].append(p["b1"].reshape(1, -1))
        acc["vec"].append(jnp.stack([p["ln1_g"], p["ln1_b"],
                                     p["ln2_g"], p["ln2_b"],
                                     p["b_out"], p["b2"]], axis=0))   # (6, d)

    bf16_keys = {"wqkv", "wo", "w1", "w2"}
    out = {k: jnp.stack(v).astype(jnp.bfloat16 if k in bf16_keys else jnp.float32)
           for k, v in acc.items()}
    out["norm"] = jnp.stack([norm_g, norm_b], axis=0).astype(jnp.float32)  # (2, d)
    return out


def _init_raw_params(key, d_model, num_layers):
    dff = 4 * d_model
    k1, k2, k3, k4 = jax.random.split(key, 4)
    layer = {
        "ln1_g": jnp.ones((d_model,), jnp.float32),
        "ln1_b": jnp.zeros((d_model,), jnp.float32),
        # already transposed to (in, out) so the kernel computes x @ W
        "w_qkv": 0.02 * jax.random.normal(k1, (d_model, 3 * d_model), jnp.float32),
        "b_qkv": jnp.zeros((3 * d_model,), jnp.float32),
        "w_out": 0.02 * jax.random.normal(k2, (d_model, d_model), jnp.float32),
        "b_out": jnp.zeros((d_model,), jnp.float32),
        "ln2_g": jnp.ones((d_model,), jnp.float32),
        "ln2_b": jnp.zeros((d_model,), jnp.float32),
        "w1": 0.02 * jax.random.normal(k3, (d_model, dff), jnp.float32),
        "b1": jnp.zeros((dff,), jnp.float32),
        "w2": 0.02 * jax.random.normal(k4, (dff, d_model), jnp.float32),
        "b2": jnp.zeros((d_model,), jnp.float32),
    }
    # deepcopy in the PyTorch module -> all layers start with identical weights
    return {"layers": [layer for _ in range(num_layers)],
            "norm_g": jnp.ones((d_model,), jnp.float32),
            "norm_b": jnp.zeros((d_model,), jnp.float32)}


if __name__ == "__main__":
    # small, lane-dense config (d_model multiple of 128 fills lanes / MXU N dim)
    B, D_MODEL, N_HEAD, L, NUM_LAYERS = 4, 128, 4, 16, 2

    key = jax.random.PRNGKey(0)
    kx, kp = jax.random.split(key)
    x = jax.random.normal(kx, (B, D_MODEL, L), jnp.float32)          # (b, d, L)
    # mask: True for padding; varied padding per batch element.
    pos = jnp.arange(L)
    mask = jnp.stack([pos >= L, pos >= L - 3, pos >= L - 7, pos >= 5], axis=0)

    raw = _init_raw_params(kp, D_MODEL, NUM_LAYERS)
    params = _prepare_params(raw["layers"], raw["norm_g"], raw["norm_b"], N_HEAD)

    fwd = jax.jit(functools.partial(semantic_transformer, n_head=N_HEAD))
    out = fwd(x, mask, params)                                       # (b, d, L)
    out = jax.block_until_ready(out)
    assert out.shape == (B, D_MODEL, L)
    print("KERNEL_OK")
</pallas_src>

<mosaic_0001>
module attributes {stable_mosaic.version = 11 : i64} {
  func.func @_fused_transformer_kernel(%arg0: i32, %arg1: i32, %arg2: memref<2x16x128xf32, #tpu.memory_space<vmem>>, %arg3: memref<2x16x1xf32, #tpu.memory_space<vmem>>, %arg4: memref<2x1x16xf32, #tpu.memory_space<vmem>>, %arg5: memref<1x6x128xf32, #tpu.memory_space<vmem>>, %arg6: memref<1x1x384xf32, #tpu.memory_space<vmem>>, %arg7: memref<1x1x512xf32, #tpu.memory_space<vmem>>, %arg8: memref<1x128x384xbf16, #tpu.memory_space<vmem>>, %arg9: memref<1x128x128xbf16, #tpu.memory_space<vmem>>, %arg10: memref<1x128x512xbf16, #tpu.memory_space<vmem>>, %arg11: memref<1x512x128xbf16, #tpu.memory_space<vmem>>, %arg12: memref<2x128xf32, #tpu.memory_space<vmem>>, %arg13: memref<2x16x128xf32, #tpu.memory_space<vmem>>, %arg14: memref<32x128xf32, #tpu.memory_space<vmem>>, %arg15: memref<2x16x16xf32, #tpu.memory_space<vmem>>) attributes {dimension_semantics = [#tpu.dimension_semantics<parallel>, #tpu.dimension_semantics<arbitrary>], iteration_bounds = array<i64: 2, 2>, scalar_prefetch = 0 : i64, scratch_operands = 2 : i64, tpu.core_type = #tpu.core_type<tc>, window_params = [{transform_indices = @transform_0, window_bounds = array<i64: 2, 16, 128>}, {transform_indices = @transform_1, window_bounds = array<i64: 2, 16, 1>}, {transform_indices = @transform_2, window_bounds = array<i64: 2, 1, 16>}, {transform_indices = @transform_3, window_bounds = array<i64: 1, 6, 128>}, {transform_indices = @transform_4, window_bounds = array<i64: 1, 1, 384>}, {transform_indices = @transform_5, window_bounds = array<i64: 1, 1, 512>}, {transform_indices = @transform_6, window_bounds = array<i64: 1, 128, 384>}, {transform_indices = @transform_7, window_bounds = array<i64: 1, 128, 128>}, {transform_indices = @transform_8, window_bounds = array<i64: 1, 128, 512>}, {transform_indices = @transform_9, window_bounds = array<i64: 1, 512, 128>}, {pipeline_mode = #tpu.pipeline_mode<synchronous>, transform_indices = @transform_10, window_bounds = array<i64: 2, 128>}, {transform_indices = @transform_11, window_bounds = array<i64: 2, 16, 128>}]} {
    %c0_i32 = arith.constant 0 : i32
    %0 = arith.cmpi eq, %arg1, %c0_i32 : i32
    %1 = arith.extui %0 : i1 to i32
    %c0_i32_0 = arith.constant 0 : i32
    %2 = arith.cmpi ne, %1, %c0_i32_0 : i32
    scf.if %2 {
      %c0_65 = arith.constant 0 : index
      %c0_66 = arith.constant 0 : index
      %c0_67 = arith.constant 0 : index
      %195 = vector.load %arg2[%c0_65, %c0_66, %c0_67] : memref<2x16x128xf32, #tpu.memory_space<vmem>>, vector<2x16x128xf32>
      %196 = vector.shape_cast %195 : vector<2x16x128xf32> to vector<32x128xf32>
      %c0_68 = arith.constant 0 : index
      %c0_69 = arith.constant 0 : index
      %197 = vector.load %arg14[%c0_68, %c0_69] : memref<32x128xf32, #tpu.memory_space<vmem>>, vector<32x128xf32>
      tpu.vector_store %arg14[%c0_68, %c0_69], %196 {strides = array<i32>} : memref<32x128xf32, #tpu.memory_space<vmem>>, vector<32x128xf32>,
      %c0_70 = arith.constant 0 : index
      %c0_71 = arith.constant 0 : index
      %c0_72 = arith.constant 0 : index
      %198 = vector.load %arg3[%c0_70, %c0_71, %c0_72] : memref<2x16x1xf32, #tpu.memory_space<vmem>>, vector<2x16x1xf32>
      %c0_73 = arith.constant 0 : index
      %c0_74 = arith.constant 0 : index
      %c0_75 = arith.constant 0 : index
      %199 = vector.load %arg4[%c0_73, %c0_74, %c0_75] : memref<2x1x16xf32, #tpu.memory_space<vmem>>, vector<2x1x16xf32>
      %200 = vector.broadcast %198 : vector<2x16x1xf32> to vector<2x16x16xf32>
      %201 = vector.broadcast %199 : vector<2x1x16xf32> to vector<2x16x16xf32>
      %202 = arith.mulf %200, %201 : vector<2x16x16xf32>
      %cst_76 = arith.constant 1.000000e+00 : f32
      %203 = vector.broadcast %cst_76 : f32 to vector<2x16x16xf32>
      %204 = arith.subf %202, %203 : vector<2x16x16xf32>
      %cst_77 = arith.constant 1.000000e+30 : f32
      %205 = vector.broadcast %cst_77 : f32 to vector<2x16x16xf32>
      %206 = arith.mulf %204, %205 : vector<2x16x16xf32>
      %c0_78 = arith.constant 0 : index
      %c0_79 = arith.constant 0 : index
      %c0_80 = arith.constant 0 : index
      %207 = vector.load %arg15[%c0_78, %c0_79, %c0_80] : memref<2x16x16xf32, #tpu.memory_space<vmem>>, vector<2x16x16xf32>
      tpu.vector_store %arg15[%c0_78, %c0_79, %c0_80], %206 {strides = array<i32>} : memref<2x16x16xf32, #tpu.memory_space<vmem>>, vector<2x16x16xf32>,
    } else {
    }
    %c0 = arith.constant 0 : index
    %c0_1 = arith.constant 0 : index
    %3 = vector.load %arg14[%c0, %c0_1] : memref<32x128xf32, #tpu.memory_space<vmem>>, vector<32x128xf32>
    %c0_2 = arith.constant 0 : index
    %c0_3 = arith.constant 0 : index
    %c0_4 = arith.constant 0 : index
    %4 = vector.load %arg3[%c0_2, %c0_3, %c0_4] : memref<2x16x1xf32, #tpu.memory_space<vmem>>, vector<2x16x1xf32>
    %c0_5 = arith.constant 0 : index
    %c0_6 = arith.constant 0 : index
    %c0_7 = arith.constant 0 : index
    %5 = vector.load %arg15[%c0_5, %c0_6, %c0_7] : memref<2x16x16xf32, #tpu.memory_space<vmem>>, vector<2x16x16xf32>
    %c0_8 = arith.constant 0 : index
    %c0_9 = arith.constant 0 : index
    %c0_10 = arith.constant 0 : index
    %6 = vector.load %arg5[%c0_8, %c0_9, %c0_10] : memref<1x6x128xf32, #tpu.memory_space<vmem>>, vector<1x6x128xf32>
    %7 = vector.shape_cast %6 : vector<1x6x128xf32> to vector<6x128xf32>
    %8 = vector.extract_strided_slice %7 {offsets = [0, 0], sizes = [1, 128], strides = [1, 1]} : vector<6x128xf32> to vector<1x128xf32>
    %9 = vector.extract_strided_slice %7 {offsets = [1, 0], sizes = [1, 128], strides = [1, 1]} : vector<6x128xf32> to vector<1x128xf32>
    %10 = vector.extract_strided_slice %7 {offsets = [2, 0], sizes = [1, 128], strides = [1, 1]} : vector<6x128xf32> to vector<1x128xf32>
    %11 = vector.extract_strided_slice %7 {offsets = [3, 0], sizes = [1, 128], strides = [1, 1]} : vector<6x128xf32> to vector<1x128xf32>
    %12 = vector.extract_strided_slice %7 {offsets = [4, 0], sizes = [1, 128], strides = [1, 1]} : vector<6x128xf32> to vector<1x128xf32>
    %13 = vector.extract_strided_slice %7 {offsets = [5, 0], sizes = [1, 128], strides = [1, 1]} : vector<6x128xf32> to vector<1x128xf32>
    %cst = arith.constant dense<0.000000e+00> : vector<32xf32>
    %14 = vector.multi_reduction <add>, %3, %cst [1] : vector<32x128xf32> to vector<32xf32>
    %15 = vector.shape_cast %14 : vector<32xf32> to vector<32x1xf32>
    %cst_11 = arith.constant 1.280000e+02 : f32
    %16 = vector.broadcast %cst_11 : f32 to vector<32x1xf32>
    %17 = arith.divf %15, %16 : vector<32x1xf32>
    %18 = vector.broadcast %17 : vector<32x1xf32> to vector<32x128xf32>
    %19 = arith.subf %3, %18 : vector<32x128xf32>
    %20 = arith.mulf %19, %19 : vector<32x128xf32>
    %cst_12 = arith.constant dense<0.000000e+00> : vector<32xf32>
    %21 = vector.multi_reduction <add>, %20, %cst_12 [1] : vector<32x128xf32> to vector<32xf32>
    %22 = vector.shape_cast %21 : vector<32xf32> to vector<32x1xf32>
    %cst_13 = arith.constant 1.280000e+02 : f32
    %23 = vector.broadcast %cst_13 : f32 to vector<32x1xf32>
    %24 = arith.divf %22, %23 : vector<32x1xf32>
    %25 = vector.broadcast %17 : vector<32x1xf32> to vector<32x128xf32>
    %26 = arith.subf %3, %25 : vector<32x128xf32>
    %cst_14 = arith.constant 9.99999974E-6 : f32
    %27 = vector.broadcast %cst_14 : f32 to vector<32x1xf32>
    %28 = arith.addf %24, %27 : vector<32x1xf32>
    %29 = math.rsqrt %28 : vector<32x1xf32>
    %30 = vector.broadcast %29 : vector<32x1xf32> to vector<32x128xf32>
    %31 = arith.mulf %26, %30 : vector<32x128xf32>
    %32 = vector.broadcast %8 : vector<1x128xf32> to vector<32x128xf32>
    %33 = arith.mulf %31, %32 : vector<32x128xf32>
    %34 = vector.broadcast %9 : vector<1x128xf32> to vector<32x128xf32>
    %35 = arith.addf %33, %34 : vector<32x128xf32>
    %36 = arith.truncf %35 : vector<32x128xf32> to vector<32x128xbf16>
    %c0_15 = arith.constant 0 : index
    %c0_16 = arith.constant 0 : index
    %c0_17 = arith.constant 0 : index
    %37 = vector.load %arg8[%c0_15, %c0_16, %c0_17] : memref<1x128x384xbf16, #tpu.memory_space<vmem>>, vector<1x128x384xbf16>
    %38 = vector.shape_cast %37 : vector<1x128x384xbf16> to vector<128x384xbf16>
    %cst_18 = arith.constant dense<0.000000e+00> : vector<32x384xf32>
    %39 = tpu.matmul %36, %38, %cst_18 {dimension_numbers = #tpu.dot_dimension_numbers<[1], [0], [0], [1], [0, 0, 1, 1], [], []>} : vector<32x128xbf16>, vector<128x384xbf16>, vector<32x384xf32> -> vector<32x384xf32>
    %c0_19 = arith.constant 0 : index
    %c0_20 = arith.constant 0 : index
    %c0_21 = arith.constant 0 : index
    %40 = vector.load %arg6[%c0_19, %c0_20, %c0_21] : memref<1x1x384xf32, #tpu.memory_space<vmem>>, vector<1x1x384xf32>
    %41 = vector.shape_cast %40 : vector<1x1x384xf32> to vector<1x384xf32>
    %42 = vector.broadcast %41 : vector<1x384xf32> to vector<32x384xf32>
    %43 = arith.addf %39, %42 : vector<32x384xf32>
    %44 = arith.truncf %43 : vector<32x384xf32> to vector<32x384xbf16>
    %45 = vector.extract_strided_slice %44 {offsets = [0, 0], sizes = [32, 32], strides = [1, 1]} : vector<32x384xbf16> to vector<32x32xbf16>
    %46 = vector.shape_cast %45 : vector<32x32xbf16> to vector<2x16x32xbf16>
    %47 = vector.extract_strided_slice %44 {offsets = [0, 128], sizes = [32, 32], strides = [1, 1]} : vector<32x384xbf16> to vector<32x32xbf16>
    %48 = vector.shape_cast %47 : vector<32x32xbf16> to vector<2x16x32xbf16>
    %49 = vector.extract_strided_slice %44 {offsets = [0, 256], sizes = [32, 32], strides = [1, 1]} : vector<32x384xbf16> to vector<32x32xbf16>
    %50 = vector.shape_cast %49 : vector<32x32xbf16> to vector<2x16x32xbf16>
    "tpu.trace_start"() <{level = 10 : i32, message = "bqe,bke->bqk"}> : () -> ()
    %cst_22 = arith.constant dense<0.000000e+00> : vector<2x16x16xf32>
    %51 = tpu.matmul %46, %48, %cst_22 {dimension_numbers = #tpu.dot_dimension_numbers<[2], [2], [1], [1], [0, 0, 0, 1, 1, 1], [0], [0]>} : vector<2x16x32xbf16>, vector<2x16x32xbf16>, vector<2x16x16xf32> -> vector<2x16x16xf32>
    "tpu.trace_stop"() : () -> ()
    %52 = arith.addf %51, %5 : vector<2x16x16xf32>
    %cst_23 = arith.constant dense<0xFF800000> : vector<2x16xf32>
    %53 = vector.multi_reduction <maximumf>, %52, %cst_23 [2] : vector<2x16x16xf32> to vector<2x16xf32>
    %54 = vector.shape_cast %53 : vector<2x16xf32> to vector<2x16x1xf32>
    %55 = vector.broadcast %54 : vector<2x16x1xf32> to vector<2x16x16xf32>
    %56 = arith.subf %52, %55 : vector<2x16x16xf32>
    %57 = math.exp %56 : vector<2x16x16xf32>
    %cst_24 = arith.constant dense<0.000000e+00> : vector<2x16xf32>
    %58 = vector.multi_reduction <add>, %57, %cst_24 [2] : vector<2x16x16xf32> to vector<2x16xf32>
    %59 = vector.shape_cast %58 : vector<2x16xf32> to vector<2x16x1xf32>
    %60 = tpu.reciprocal %59 {approx = true} : vector<2x16x1xf32> -> vector<2x16x1xf32>
    %61 = vector.broadcast %60 : vector<2x16x1xf32> to vector<2x16x16xf32>
    %62 = arith.mulf %57, %61 : vector<2x16x16xf32>
    %63 = arith.truncf %62 : vector<2x16x16xf32> to vector<2x16x16xbf16>
    "tpu.trace_start"() <{level = 10 : i32, message = "bqk,bke->bqe"}> : () -> ()
    %cst_25 = arith.constant dense<0.000000e+00> : vector<2x16x32xf32>
    %64 = tpu.matmul %63, %50, %cst_25 {dimension_numbers = #tpu.dot_dimension_numbers<[2], [1], [1], [2], [0, 0, 0, 1, 1, 2], [0], [0]>} : vector<2x16x16xbf16>, vector<2x16x32xbf16>, vector<2x16x32xf32> -> vector<2x16x32xf32>
    "tpu.trace_stop"() : () -> ()
    %65 = vector.shape_cast %64 : vector<2x16x32xf32> to vector<32x32xf32>
    %66 = vector.extract_strided_slice %44 {offsets = [0, 32], sizes = [32, 32], strides = [1, 1]} : vector<32x384xbf16> to vector<32x32xbf16>
    %67 = vector.shape_cast %66 : vector<32x32xbf16> to vector<2x16x32xbf16>
    %68 = vector.extract_strided_slice %44 {offsets = [0, 160], sizes = [32, 32], strides = [1, 1]} : vector<32x384xbf16> to vector<32x32xbf16>
    %69 = vector.shape_cast %68 : vector<32x32xbf16> to vector<2x16x32xbf16>
    %70 = vector.extract_strided_slice %44 {offsets = [0, 288], sizes = [32, 32], strides = [1, 1]} : vector<32x384xbf16> to vector<32x32xbf16>
    %71 = vector.shape_cast %70 : vector<32x32xbf16> to vector<2x16x32xbf16>
    "tpu.trace_start"() <{level = 10 : i32, message = "bqe,bke->bqk"}> : () -> ()
    %cst_26 = arith.constant dense<0.000000e+00> : vector<2x16x16xf32>
    %72 = tpu.matmul %67, %69, %cst_26 {dimension_numbers = #tpu.dot_dimension_numbers<[2], [2], [1], [1], [0, 0, 0, 1, 1, 1], [0], [0]>} : vector<2x16x32xbf16>, vector<2x16x32xbf16>, vector<2x16x16xf32> -> vector<2x16x16xf32>
    "tpu.trace_stop"() : () -> ()
    %73 = arith.addf %72, %5 : vector<2x16x16xf32>
    %cst_27 = arith.constant dense<0xFF800000> : vector<2x16xf32>
    %74 = vector.multi_reduction <maximumf>, %73, %cst_27 [2] : vector<2x16x16xf32> to vector<2x16xf32>
    %75 = vector.shape_cast %74 : vector<2x16xf32> to vector<2x16x1xf32>
    %76 = vector.broadcast %75 : vector<2x16x1xf32> to vector<2x16x16xf32>
    %77 = arith.subf %73, %76 : vector<2x16x16xf32>
    %78 = math.exp %77 : vector<2x16x16xf32>
    %cst_28 = arith.constant dense<0.000000e+00> : vector<2x16xf32>
    %79 = vector.multi_reduction <add>, %78, %cst_28 [2] : vector<2x16x16xf32> to vector<2x16xf32>
    %80 = vector.shape_cast %79 : vector<2x16xf32> to vector<2x16x1xf32>
    %81 = tpu.reciprocal %80 {approx = true} : vector<2x16x1xf32> -> vector<2x16x1xf32>
    %82 = vector.broadcast %81 : vector<2x16x1xf32> to vector<2x16x16xf32>
    %83 = arith.mulf %78, %82 : vector<2x16x16xf32>
    %84 = arith.truncf %83 : vector<2x16x16xf32> to vector<2x16x16xbf16>
    "tpu.trace_start"() <{level = 10 : i32, message = "bqk,bke->bqe"}> : () -> ()
    %cst_29 = arith.constant dense<0.000000e+00> : vector<2x16x32xf32>
    %85 = tpu.matmul %84, %71, %cst_29 {dimension_numbers = #tpu.dot_dimension_numbers<[2], [1], [1], [2], [0, 0, 0, 1, 1, 2], [0], [0]>} : vector<2x16x16xbf16>, vector<2x16x32xbf16>, vector<2x16x32xf32> -> vector<2x16x32xf32>
    "tpu.trace_stop"() : () -> ()
    %86 = vector.shape_cast %85 : vector<2x16x32xf32> to vector<32x32xf32>
    %87 = vector.extract_strided_slice %44 {offsets = [0, 64], sizes = [32, 32], strides = [1, 1]} : vector<32x384xbf16> to vector<32x32xbf16>
    %88 = vector.shape_cast %87 : vector<32x32xbf16> to vector<2x16x32xbf16>
    %89 = vector.extract_strided_slice %44 {offsets = [0, 192], sizes = [32, 32], strides = [1, 1]} : vector<32x384xbf16> to vector<32x32xbf16>
    %90 = vector.shape_cast %89 : vector<32x32xbf16> to vector<2x16x32xbf16>
    %91 = vector.extract_strided_slice %44 {offsets = [0, 320], sizes = [32, 32], strides = [1, 1]} : vector<32x384xbf16> to vector<32x32xbf16>
    %92 = vector.shape_cast %91 : vector<32x32xbf16> to vector<2x16x32xbf16>
    "tpu.trace_start"() <{level = 10 : i32, message = "bqe,bke->bqk"}> : () -> ()
    %cst_30 = arith.constant dense<0.000000e+00> : vector<2x16x16xf32>
    %93 = tpu.matmul %88, %90, %cst_30 {dimension_numbers = #tpu.dot_dimension_numbers<[2], [2], [1], [1], [0, 0, 0, 1, 1, 1], [0], [0]>} : vector<2x16x32xbf16>, vector<2x16x32xbf16>, vector<2x16x16xf32> -> vector<2x16x16xf32>
    "tpu.trace_stop"() : () -> ()
    %94 = arith.addf %93, %5 : vector<2x16x16xf32>
    %cst_31 = arith.constant dense<0xFF800000> : vector<2x16xf32>
    %95 = vector.multi_reduction <maximumf>, %94, %cst_31 [2] : vector<2x16x16xf32> to vector<2x16xf32>
    %96 = vector.shape_cast %95 : vector<2x16xf32> to vector<2x16x1xf32>
    %97 = vector.broadcast %96 : vector<2x16x1xf32> to vector<2x16x16xf32>
    %98 = arith.subf %94, %97 : vector<2x16x16xf32>
    %99 = math.exp %98 : vector<2x16x16xf32>
    %cst_32 = arith.constant dense<0.000000e+00> : vector<2x16xf32>
    %100 = vector.multi_reduction <add>, %99, %cst_32 [2] : vector<2x16x16xf32> to vector<2x16xf32>
    %101 = vector.shape_cast %100 : vector<2x16xf32> to vector<2x16x1xf32>
    %102 = tpu.reciprocal %101 {approx = true} : vector<2x16x1xf32> -> vector<2x16x1xf32>
    %103 = vector.broadcast %102 : vector<2x16x1xf32> to vector<2x16x16xf32>
    %104 = arith.mulf %99, %103 : vector<2x16x16xf32>
    %105 = arith.truncf %104 : vector<2x16x16xf32> to vector<2x16x16xbf16>
    "tpu.trace_start"() <{level = 10 : i32, message = "bqk,bke->bqe"}> : () -> ()
    %cst_33 = arith.constant dense<0.000000e+00> : vector<2x16x32xf32>
    %106 = tpu.matmul %105, %92, %cst_33 {dimension_numbers = #tpu.dot_dimension_numbers<[2], [1], [1], [2], [0, 0, 0, 1, 1, 2], [0], [0]>} : vector<2x16x16xbf16>, vector<2x16x32xbf16>, vector<2x16x32xf32> -> vector<2x16x32xf32>
    "tpu.trace_stop"() : () -> ()
    %107 = vector.shape_cast %106 : vector<2x16x32xf32> to vector<32x32xf32>
    %108 = vector.extract_strided_slice %44 {offsets = [0, 96], sizes = [32, 32], strides = [1, 1]} : vector<32x384xbf16> to vector<32x32xbf16>
    %109 = vector.shape_cast %108 : vector<32x32xbf16> to vector<2x16x32xbf16>
    %110 = vector.extract_strided_slice %44 {offsets = [0, 224], sizes = [32, 32], strides = [1, 1]} : vector<32x384xbf16> to vector<32x32xbf16>
    %111 = vector.shape_cast %110 : vector<32x32xbf16> to vector<2x16x32xbf16>
    %112 = vector.extract_strided_slice %44 {offsets = [0, 352], sizes = [32, 32], strides = [1, 1]} : vector<32x384xbf16> to vector<32x32xbf16>
    %113 = vector.shape_cast %112 : vector<32x32xbf16> to vector<2x16x32xbf16>
    "tpu.trace_start"() <{level = 10 : i32, message = "bqe,bke->bqk"}> : () -> ()
    %cst_34 = arith.constant dense<0.000000e+00> : vector<2x16x16xf32>
    %114 = tpu.matmul %109, %111, %cst_34 {dimension_numbers = #tpu.dot_dimension_numbers<[2], [2], [1], [1], [0, 0, 0, 1, 1, 1], [0], [0]>} : vector<2x16x32xbf16>, vector<2x16x32xbf16>, vector<2x16x16xf32> -> vector<2x16x16xf32>
    "tpu.trace_stop"() : () -> ()
    %115 = arith.addf %114, %5 : vector<2x16x16xf32>
    %cst_35 = arith.constant dense<0xFF800000> : vector<2x16xf32>
    %116 = vector.multi_reduction <maximumf>, %115, %cst_35 [2] : vector<2x16x16xf32> to vector<2x16xf32>
    %117 = vector.shape_cast %116 : vector<2x16xf32> to vector<2x16x1xf32>
    %118 = vector.broadcast %117 : vector<2x16x1xf32> to vector<2x16x16xf32>
    %119 = arith.subf %115, %118 : vector<2x16x16xf32>
    %120 = math.exp %119 : vector<2x16x16xf32>
    %cst_36 = arith.constant dense<0.000000e+00> : vector<2x16xf32>
    %121 = vector.multi_reduction <add>, %120, %cst_36 [2] : vector<2x16x16xf32> to vector<2x16xf32>
    %122 = vector.shape_cast %121 : vector<2x16xf32> to vector<2x16x1xf32>
    %123 = tpu.reciprocal %122 {approx = true} : vector<2x16x1xf32> -> vector<2x16x1xf32>
    %124 = vector.broadcast %123 : vector<2x16x1xf32> to vector<2x16x16xf32>
    %125 = arith.mulf %120, %124 : vector<2x16x16xf32>
    %126 = arith.truncf %125 : vector<2x16x16xf32> to vector<2x16x16xbf16>
    "tpu.trace_start"() <{level = 10 : i32, message = "bqk,bke->bqe"}> : () -> ()
    %cst_37 = arith.constant dense<0.000000e+00> : vector<2x16x32xf32>
    %127 = tpu.matmul %126, %113, %cst_37 {dimension_numbers = #tpu.dot_dimension_numbers<[2], [1], [1], [2], [0, 0, 0, 1, 1, 2], [0], [0]>} : vector<2x16x16xbf16>, vector<2x16x32xbf16>, vector<2x16x32xf32> -> vector<2x16x32xf32>
    "tpu.trace_stop"() : () -> ()
    %128 = vector.shape_cast %127 : vector<2x16x32xf32> to vector<32x32xf32>
    %129 = tpu.concatenate %65, %86, %107, %128 in 1 : vector<32x32xf32>, vector<32x32xf32>, vector<32x32xf32>, vector<32x32xf32> -> vector<32x128xf32>
    %130 = arith.truncf %129 : vector<32x128xf32> to vector<32x128xbf16>
    %c0_38 = arith.constant 0 : index
    %c0_39 = arith.constant 0 : index
    %c0_40 = arith.constant 0 : index
    %131 = vector.load %arg9[%c0_38, %c0_39, %c0_40] : memref<1x128x128xbf16, #tpu.memory_space<vmem>>, vector<1x128x128xbf16>
    %132 = vector.shape_cast %131 : vector<1x128x128xbf16> to vector<128x128xbf16>
    %cst_41 = arith.constant dense<0.000000e+00> : vector<32x128xf32>
    %133 = tpu.matmul %130, %132, %cst_41 {dimension_numbers = #tpu.dot_dimension_numbers<[1], [0], [0], [1], [0, 0, 1, 1], [], []>} : vector<32x128xbf16>, vector<128x128xbf16>, vector<32x128xf32> -> vector<32x128xf32>
    %134 = vector.broadcast %12 : vector<1x128xf32> to vector<32x128xf32>
    %135 = arith.addf %133, %134 : vector<32x128xf32>
    %136 = arith.addf %3, %135 : vector<32x128xf32>
    %cst_42 = arith.constant dense<0.000000e+00> : vector<32xf32>
    %137 = vector.multi_reduction <add>, %136, %cst_42 [1] : vector<32x128xf32> to vector<32xf32>
    %138 = vector.shape_cast %137 : vector<32xf32> to vector<32x1xf32>
    %cst_43 = arith.constant 1.280000e+02 : f32
    %139 = vector.broadcast %cst_43 : f32 to vector<32x1xf32>
    %140 = arith.divf %138, %139 : vector<32x1xf32>
    %141 = vector.broadcast %140 : vector<32x1xf32> to vector<32x128xf32>
    %142 = arith.subf %136, %141 : vector<32x128xf32>
    %143 = arith.mulf %142, %142 : vector<32x128xf32>
    %cst_44 = arith.constant dense<0.000000e+00> : vector<32xf32>
    %144 = vector.multi_reduction <add>, %143, %cst_44 [1] : vector<32x128xf32> to vector<32xf32>
    %145 = vector.shape_cast %144 : vector<32xf32> to vector<32x1xf32>
    %cst_45 = arith.constant 1.280000e+02 : f32
    %146 = vector.broadcast %cst_45 : f32 to vector<32x1xf32>
    %147 = arith.divf %145, %146 : vector<32x1xf32>
    %148 = vector.broadcast %140 : vector<32x1xf32> to vector<32x128xf32>
    %149 = arith.subf %136, %148 : vector<32x128xf32>
    %cst_46 = arith.constant 9.99999974E-6 : f32
    %150 = vector.broadcast %cst_46 : f32 to vector<32x1xf32>
    %151 = arith.addf %147, %150 : vector<32x1xf32>
    %152 = math.rsqrt %151 : vector<32x1xf32>
    %153 = vector.broadcast %152 : vector<32x1xf32> to vector<32x128xf32>
    %154 = arith.mulf %149, %153 : vector<32x128xf32>
    %155 = vector.broadcast %10 : vector<1x128xf32> to vector<32x128xf32>
    %156 = arith.mulf %154, %155 : vector<32x128xf32>
    %157 = vector.broadcast %11 : vector<1x128xf32> to vector<32x128xf32>
    %158 = arith.addf %156, %157 : vector<32x128xf32>
    %159 = arith.truncf %158 : vector<32x128xf32> to vector<32x128xbf16>
    %c0_47 = arith.constant 0 : index
    %c0_48 = arith.constant 0 : index
    %c0_49 = arith.constant 0 : index
    %160 = vector.load %arg10[%c0_47, %c0_48, %c0_49] : memref<1x128x512xbf16, #tpu.memory_space<vmem>>, vector<1x128x512xbf16>
    %161 = vector.shape_cast %160 : vector<1x128x512xbf16> to vector<128x512xbf16>
    %cst_50 = arith.constant dense<0.000000e+00> : vector<32x512xf32>
    %162 = tpu.matmul %159, %161, %cst_50 {dimension_numbers = #tpu.dot_dimension_numbers<[1], [0], [0], [1], [0, 0, 1, 1], [], []>} : vector<32x128xbf16>, vector<128x512xbf16>, vector<32x512xf32> -> vector<32x512xf32>
    %c0_51 = arith.constant 0 : index
    %c0_52 = arith.constant 0 : index
    %c0_53 = arith.constant 0 : index
    %163 = vector.load %arg7[%c0_51, %c0_52, %c0_53] : memref<1x1x512xf32, #tpu.memory_space<vmem>>, vector<1x1x512xf32>
    %164 = vector.shape_cast %163 : vector<1x1x512xf32> to vector<1x512xf32>
    %165 = vector.broadcast %164 : vector<1x512xf32> to vector<32x512xf32>
    %166 = arith.addf %162, %165 : vector<32x512xf32>
    %167 = arith.mulf %166, %166 : vector<32x512xf32>
    %168 = arith.mulf %166, %167 : vector<32x512xf32>
    %cst_54 = arith.constant 4.471500e-02 : f32
    %169 = vector.broadcast %cst_54 : f32 to vector<32x512xf32>
    %170 = arith.mulf %169, %168 : vector<32x512xf32>
    %171 = arith.addf %166, %170 : vector<32x512xf32>
    %cst_55 = arith.constant 0.797884583 : f32
    %172 = vector.broadcast %cst_55 : f32 to vector<32x512xf32>
    %173 = arith.mulf %172, %171 : vector<32x512xf32>
    %174 = math.tanh %173 : vector<32x512xf32>
    %cst_56 = arith.constant 1.000000e+00 : f32
    %175 = vector.broadcast %cst_56 : f32 to vector<32x512xf32>
    %176 = arith.addf %175, %174 : vector<32x512xf32>
    %cst_57 = arith.constant 5.000000e-01 : f32
    %177 = vector.broadcast %cst_57 : f32 to vector<32x512xf32>
    %178 = arith.mulf %177, %176 : vector<32x512xf32>
    %179 = arith.mulf %166, %178 : vector<32x512xf32>
    %180 = arith.truncf %179 : vector<32x512xf32> to vector<32x512xbf16>
    %c0_58 = arith.constant 0 : index
    %c0_59 = arith.constant 0 : index
    %c0_60 = arith.constant 0 : index
    %181 = vector.load %arg11[%c0_58, %c0_59, %c0_60] : memref<1x512x128xbf16, #tpu.memory_space<vmem>>, vector<1x512x128xbf16>
    %182 = vector.shape_cast %181 : vector<1x512x128xbf16> to vector<512x128xbf16>
    %cst_61 = arith.constant dense<0.000000e+00> : vector<32x128xf32>
    %183 = tpu.matmul %180, %182, %cst_61 {dimension_numbers = #tpu.dot_dimension_numbers<[1], [0], [0], [1], [0, 0, 1, 1], [], []>} : vector<32x512xbf16>, vector<512x128xbf16>, vector<32x128xf32> -> vector<32x128xf32>
    %184 = vector.broadcast %13 : vector<1x128xf32> to vector<32x128xf32>
    %185 = arith.addf %183, %184 : vector<32x128xf32>
    %186 = arith.addf %136, %185 : vector<32x128xf32>
    %187 = vector.shape_cast %186 : vector<32x128xf32> to vector<2x16x128xf32>
    %188 = vector.broadcast %4 : vector<2x16x1xf32> to vector<2x16x128xf32>
    %189 = arith.mulf %187, %188 : vector<2x16x128xf32>
    %190 = vector.shape_cast %189 : vector<2x16x128xf32> to vector<32x128xf32>
    %c0_62 = arith.constant 0 : index
    %c0_63 = arith.constant 0 : index
    %191 = vector.load %arg14[%c0_62, %c0_63] : memref<32x128xf32, #tpu.memory_space<vmem>>, vector<32x128xf32>
    tpu.vector_store %arg14[%c0_62, %c0_63], %190 {strides = array<i32>} : memref<32x128xf32, #tpu.memory_space<vmem>>, vector<32x128xf32>,
    %c1_i32 = arith.constant 1 : i32
    %192 = arith.cmpi eq, %arg1, %c1_i32 : i32
    %193 = arith.extui %192 : i1 to i32
    %c0_i32_64 = arith.constant 0 : i32
    %194 = arith.cmpi ne, %193, %c0_i32_64 : i32
    scf.if %194 {
      %c0_65 = arith.constant 0 : index
      %c0_66 = arith.constant 0 : index
      %195 = vector.load %arg12[%c0_65, %c0_66] : memref<2x128xf32, #tpu.memory_space<vmem>>, vector<1x128xf32>
      %c1 = arith.constant 1 : index
      %c0_67 = arith.constant 0 : index
      %196 = vector.load %arg12[%c1, %c0_67] : memref<2x128xf32, #tpu.memory_space<vmem>>, vector<1x128xf32>
      %cst_68 = arith.constant dense<0.000000e+00> : vector<32xf32>
      %197 = vector.multi_reduction <add>, %190, %cst_68 [1] : vector<32x128xf32> to vector<32xf32>
      %198 = vector.shape_cast %197 : vector<32xf32> to vector<32x1xf32>
      %cst_69 = arith.constant 1.280000e+02 : f32
      %199 = vector.broadcast %cst_69 : f32 to vector<32x1xf32>
      %200 = arith.divf %198, %199 : vector<32x1xf32>
      %201 = vector.broadcast %200 : vector<32x1xf32> to vector<32x128xf32>
      %202 = arith.subf %190, %201 : vector<32x128xf32>
      %203 = arith.mulf %202, %202 : vector<32x128xf32>
      %cst_70 = arith.constant dense<0.000000e+00> : vector<32xf32>
      %204 = vector.multi_reduction <add>, %203, %cst_70 [1] : vector<32x128xf32> to vector<32xf32>
      %205 = vector.shape_cast %204 : vector<32xf32> to vector<32x1xf32>
      %cst_71 = arith.constant 1.280000e+02 : f32
      %206 = vector.broadcast %cst_71 : f32 to vector<32x1xf32>
      %207 = arith.divf %205, %206 : vector<32x1xf32>
      %208 = vector.broadcast %200 : vector<32x1xf32> to vector<32x128xf32>
      %209 = arith.subf %190, %208 : vector<32x128xf32>
      %cst_72 = arith.constant 9.99999974E-6 : f32
      %210 = vector.broadcast %cst_72 : f32 to vector<32x1xf32>
      %211 = arith.addf %207, %210 : vector<32x1xf32>
      %212 = math.rsqrt %211 : vector<32x1xf32>
      %213 = vector.broadcast %212 : vector<32x1xf32> to vector<32x128xf32>
      %214 = arith.mulf %209, %213 : vector<32x128xf32>
      %215 = vector.broadcast %195 : vector<1x128xf32> to vector<32x128xf32>
      %216 = arith.mulf %214, %215 : vector<32x128xf32>
      %217 = vector.broadcast %196 : vector<1x128xf32> to vector<32x128xf32>
      %218 = arith.addf %216, %217 : vector<32x128xf32>
      %219 = vector.shape_cast %218 : vector<32x128xf32> to vector<2x16x128xf32>
      %c0_73 = arith.constant 0 : index
      %c0_74 = arith.constant 0 : index
      %c0_75 = arith.constant 0 : index
      %220 = vector.load %arg13[%c0_73, %c0_74, %c0_75] : memref<2x16x128xf32, #tpu.memory_space<vmem>>, vector<2x16x128xf32>
      tpu.vector_store %arg13[%c0_73, %c0_74, %c0_75], %219 {strides = array<i32>} : memref<2x16x128xf32, #tpu.memory_space<vmem>>, vector<2x16x128xf32>,
    } else {
    }
    return
  }
  func.func @transform_0(%arg0: i32, %arg1: i32) -> (i32, i32, i32) {
    %c0_i32 = arith.constant 0 : i32
    %c0_i32_0 = arith.constant 0 : i32
    %c0_i32_1 = arith.constant 0 : i32
    return %arg0, %c0_i32, %c0_i32_0 : i32, i32, i32
  }
  func.func @transform_1(%arg0: i32, %arg1: i32) -> (i32, i32, i32) {
    %c0_i32 = arith.constant 0 : i32
    %c0_i32_0 = arith.constant 0 : i32
    %c0_i32_1 = arith.constant 0 : i32
    return %arg0, %c0_i32, %c0_i32_0 : i32, i32, i32
  }
  func.func @transform_2(%arg0: i32, %arg1: i32) -> (i32, i32, i32) {
    %c0_i32 = arith.constant 0 : i32
    %c0_i32_0 = arith.constant 0 : i32
    %c0_i32_1 = arith.constant 0 : i32
    return %arg0, %c0_i32, %c0_i32_0 : i32, i32, i32
  }
  func.func @transform_3(%arg0: i32, %arg1: i32) -> (i32, i32, i32) {
    %c0_i32 = arith.constant 0 : i32
    %c0_i32_0 = arith.constant 0 : i32
    %c0_i32_1 = arith.constant 0 : i32
    return %arg1, %c0_i32, %c0_i32_0 : i32, i32, i32
  }
  func.func @transform_4(%arg0: i32, %arg1: i32) -> (i32, i32, i32) {
    %c0_i32 = arith.constant 0 : i32
    %c0_i32_0 = arith.constant 0 : i32
    %c0_i32_1 = arith.constant 0 : i32
    return %arg1, %c0_i32, %c0_i32_0 : i32, i32, i32
  }
  func.func @transform_5(%arg0: i32, %arg1: i32) -> (i32, i32, i32) {
    %c0_i32 = arith.constant 0 : i32
    %c0_i32_0 = arith.constant 0 : i32
    %c0_i32_1 = arith.constant 0 : i32
    return %arg1, %c0_i32, %c0_i32_0 : i32, i32, i32
  }
  func.func @transform_6(%arg0: i32, %arg1: i32) -> (i32, i32, i32) {
    %c0_i32 = arith.constant 0 : i32
    %c0_i32_0 = arith.constant 0 : i32
    %c0_i32_1 = arith.constant 0 : i32
    return %arg1, %c0_i32, %c0_i32_0 : i32, i32, i32
  }
  func.func @transform_7(%arg0: i32, %arg1: i32) -> (i32, i32, i32) {
    %c0_i32 = arith.constant 0 : i32
    %c0_i32_0 = arith.constant 0 : i32
    %c0_i32_1 = arith.constant 0 : i32
    return %arg1, %c0_i32, %c0_i32_0 : i32, i32, i32
  }
  func.func @transform_8(%arg0: i32, %arg1: i32) -> (i32, i32, i32) {
    %c0_i32 = arith.constant 0 : i32
    %c0_i32_0 = arith.constant 0 : i32
    %c0_i32_1 = arith.constant 0 : i32
    return %arg1, %c0_i32, %c0_i32_0 : i32, i32, i32
  }
  func.func @transform_9(%arg0: i32, %arg1: i32) -> (i32, i32, i32) {
    %c0_i32 = arith.constant 0 : i32
    %c0_i32_0 = arith.constant 0 : i32
    %c0_i32_1 = arith.constant 0 : i32
    return %arg1, %c0_i32, %c0_i32_0 : i32, i32, i32
  }
  func.func @transform_10(%arg0: i32, %arg1: i32) -> (i32, i32) {
    %c0_i32 = arith.constant 0 : i32
    %c0_i32_0 = arith.constant 0 : i32
    %c0_i32_1 = arith.constant 0 : i32
    return %c0_i32, %c0_i32_0 : i32, i32
  }
  func.func @transform_11(%arg0: i32, %arg1: i32) -> (i32, i32, i32) {
    %c0_i32 = arith.constant 0 : i32
    %c0_i32_0 = arith.constant 0 : i32
    %c0_i32_1 = arith.constant 0 : i32
    return %arg0, %c0_i32, %c0_i32_0 : i32, i32, i32
  }
}

</mosaic_0001>

<llo_original>
// kernel: semantic_transformer.1
$region0: #{semantic_transformer.1}
  #allocation0 [shape = 'u32[]', space=smem, size = 0x4, offset = 0x4, fixed_abs, tag = 'smem constant byte address 0x4 - core index']
  #allocation1 [shape = 'u32[144,128]{1,0:T(1,128)}', space=vmem, size = 0x12000, scoped, tag = 'internal scratch']
  #allocation2 [shape = 'f32[32,128]{1,0:T(8,128)}', space=vmem, size = 0x4000, scoped, tag = 'scratch operand']
  #allocation3 [shape = 'f32[2,16,16]{2,1,0:T(8,128)}', space=vmem, size = 0x4000, scoped, tag = 'scratch operand']
  %s0 = inlined_call_operand.hbm [shape: f32[4,16,128], index: 0, kind: input, shape index: {}, may-alias: {0,11}]
  %s1 = inlined_call_operand.hbm [shape: f32[4,16,1], index: 1, kind: input, shape index: {}]
  %s2 = inlined_call_operand.hbm [shape: f32[4,1,16], index: 2, kind: input, shape index: {}]
  %s3 = inlined_call_operand.hbm [shape: f32[2,6,128], index: 3, kind: input, shape index: {}]
  %s4 = inlined_call_operand.hbm [shape: f32[2,1,384], index: 4, kind: input, shape index: {}]
  %s5 = inlined_call_operand.hbm [shape: f32[2,1,512], index: 5, kind: input, shape index: {}]
  %s6 = inlined_call_operand.hbm [shape: bf16[2,128,384], index: 6, kind: input, shape index: {}]
  %s7 = inlined_call_operand.hbm [shape: bf16[2,128,128], index: 7, kind: input, shape index: {}]
  %s8 = inlined_call_operand.hbm [shape: bf16[2,128,512], index: 8, kind: input, shape index: {}]
  %s9 = inlined_call_operand.hbm [shape: bf16[2,512,128], index: 9, kind: input, shape index: {}]
  %s10 = inlined_call_operand.hbm [shape: f32[2,128], index: 10, kind: input, shape index: {}]
  %s11 = inlined_call_operand.hbm [shape: f32[4,16,128], index: 11, kind: output, shape index: {}, may-alias: {0,11}]
  %s12 = sld [smem:[#allocation0]]
  $region129: #{semantic_transformer.1} parent=0
    _
  %s14 = ssub.s32 1, %s12
  %s15 = scalar_select 0, %s14, %s12
  $region1: #{semantic_transformer.1} parent=0
    #allocation4 [shape = 'u8[32768]{0}', space=vmem, size = 0x8000, scoped, tag = 'input window, operand 0']
    #allocation5 [shape = 's32[2]{0}', space=sflag, size = 0x8, scoped, tag = 'scoped memory for semantic_transformer.1']
    #allocation6 [shape = 's32[2]{0}', space=sflag, size = 0x8, scoped, tag = 'scoped memory for semantic_transformer.1']
    #allocation7 [shape = 'u8[32768]{0}', space=vmem, size = 0x8000, scoped, tag = 'input window, operand 1']
    #allocation8 [shape = 's32[2]{0}', space=sflag, size = 0x8, scoped, tag = 'scoped memory for semantic_transformer.1']
    #allocation9 [shape = 'u8[2048]{0}', space=vmem, size = 0x800, scoped, tag = 'input window, operand 2']
    #allocation10 [shape = 'u8[8192]{0}', space=vmem, size = 0x2000, scoped, tag = 'input window, operand 3']
    #allocation11 [shape = 's32[2]{0}', space=sflag, size = 0x8, scoped, tag = 'scoped memory for semantic_transformer.1']
    #allocation12 [shape = 'u8[3072]{0}', space=vmem, size = 0xc00, scoped, tag = 'input window, operand 4']
    #allocation13 [shape = 'u8[4096]{0}', space=vmem, size = 0x1000, scoped, tag = 'input window, operand 5']
    #allocation14 [shape = 's32[2]{0}', space=sflag, size = 0x8, scoped, tag = 'scoped memory for semantic_transformer.1']
    #allocation15 [shape = 'u8[196608]{0}', space=vmem, size = 0x30000, scoped, tag = 'input window, operand 6']
    #allocation16 [shape = 'u8[65536]{0}', space=vmem, size = 0x10000, scoped, tag = 'input window, operand 7']
    #allocation17 [shape = 's32[2]{0}', space=sflag, size = 0x8, scoped, tag = 'scoped memory for semantic_transformer.1']
    #allocation18 [shape = 'u8[262144]{0}', space=vmem, size = 0x40000, scoped, tag = 'input window, operand 8']
    #allocation19 [shape = 'u8[262144]{0}', space=vmem, size = 0x40000, scoped, tag = 'input window, operand 9']
    #allocation20 [shape = 's32[2]{0}', space=sflag, size = 0x8, scoped, tag = 'scoped memory for semantic_transformer.1']
    #allocation21 [shape = 'u8[1024]{0}', space=vmem, size = 0x400, scoped, tag = 'input window, operand 10, single buffered']
    #allocation22 [shape = 'u8[32768]{0}', space=vmem, size = 0x8000, scoped, tag = 'output window, operand 0']
    %16 = vsyncpa [#allocation5], 0
    %s17 = scalar_lea.sflag [#allocation5], 1
    %18 = vsyncpa %s17, 0
    %19 = vsyncpa [#allocation8], 0
    %s20 = scalar_lea.sflag [#allocation8], 1
    %21 = vsyncpa %s20, 0
    %22 = vsyncpa [#allocation11], 0
    %s23 = scalar_lea.sflag [#allocation11], 1
    %24 = vsyncpa %s23, 0
    %25 = vsyncpa [#allocation14], 0
    %s26 = scalar_lea.sflag [#allocation14], 1
    %27 = vsyncpa %s26, 0
    %28 = vsyncpa [#allocation17], 0
    %s29 = scalar_lea.sflag [#allocation17], 1
    %30 = vsyncpa %s29, 0
    %31 = vsyncpa [#allocation20], 0
    %s32 = scalar_lea.sflag [#allocation20], 1
    %33 = vsyncpa %s32, 0
    %34 = vsyncpa [#allocation6], 0
    %s35 = scalar_lea.sflag [#allocation6], 1
    %36 = vsyncpa %s35, 0
    loop: start=0, step=1, limit=6
    $region2: #{semantic_transformer.1} parent=1 // loop_pre_header
      _
    $region3: #{semantic_transformer.1} parent=1 // loop_header
      %s38 = sphi 0, %s42
      %p39 = scmp.ge.s32.totalorder %s38, 6
      %s45 = sphi 0, %s57
      %s46 = sphi 0, %s53
      %s47 = sphi 0, %s45
      %s48 = sphi 0, %s46
      %s49 = sphi 0, %s47
      %s50 = sphi 0, %s48
      %s60 = sphi 0, %s62
      %s63 = sphi 0, %s60
      %s64 = sphi 0, %s63
      %s80 = sphi 0, %s64
      %s86 = sphi 0, %s88
      %s89 = sphi 0, %s86
      %s90 = sphi 0, %s89
      %s106 = sphi 0, %s90
      %s112 = sphi 0, %s114
      %s115 = sphi 0, %s112
      %s116 = sphi 0, %s115
      %s132 = sphi 0, %s116
      %s138 = sphi 0, %s140
      %s141 = sphi 0, %s138
      %s142 = sphi 0, %s141
      %s158 = sphi 0, %s142
      %s164 = sphi 0, %s166
      %s167 = sphi 0, %s164
      %s168 = sphi 0, %s167
      %s184 = sphi 0, %s168
      %s190 = sphi 0, %s192
      %s193 = sphi 0, %s190
      %s194 = sphi 0, %s193
      %s210 = sphi 0, %s194
      %s216 = sphi 0, %s218
      %s219 = sphi 0, %s216
      %s220 = sphi 0, %s219
      %s236 = sphi 0, %s220
      %s242 = sphi 0, %s244
      %s245 = sphi 0, %s242
      %s246 = sphi 0, %s245
      %s262 = sphi 0, %s246
      %s268 = sphi 0, %s270
      %s271 = sphi 0, %s268
      %s272 = sphi 0, %s271
      %s288 = sphi 0, %s272
      %s294 = sphi 0, %s296
      %s297 = sphi 0, %s294
      %s298 = sphi 0, %s297
      %s314 = sphi 0, %s298
      %s318 = sphi 0, %s318
      %s320 = sphi 0, %s318
      %s321 = sphi 0, %s320
      %s335 = sphi 0, %s321
      %s341 = sphi 0, %s343
      %s344 = sphi 0, %s341
      %s345 = sphi 0, %s344
      %s361 = sphi 0, %s345
    $region4: #{semantic_transformer.1} parent=1 // loop_header_branch
      %41 = sbr.rel (%p39) target = $region8
    $region5: #{semantic_transformer.1} parent=1 // loop_body
      %s43 = ssub.s32 %s38, 1
      %s44 = ssub.s32 %s38, 2
      %s51 = sadd.s32 1, %s46
      %p52 = scmp.ge.s32.totalorder %s51, 2
      %s53 = scalar_select %p52, 0, %s51
      %s54 = sadd.s32 1, %s45
      %s55 = scalar_select %p52, %s54, %s45
      %p56 = scmp.ge.s32.totalorder %s55, 2
      %s57 = scalar_select %p56, 0, %s55
      %s58 = ssub.s32 %s45, %s57
      %p59 = scmp.eq.s32.totalorder %s58, 0
      %s61 = sadd.s32 %s60, 1
      %s62 = scalar_select %p59, %s60, %s61
      %p65 = pneg %p59
      %p66 = scmp.eq.s32.totalorder %s38, 3
      %p67 = por %p65, %p66
      %p68 = scmp.ne.s32.totalorder %s60, %s63
      %p69 = scmp.eq.s32.totalorder %s38, 0
      %p70 = por %p68, %p69
      %p71 = scmp.ne.s32.totalorder %s60, %s63
      %p72 = scmp.eq.s32.totalorder %s43, 3
      %p73 = por %p71, %p72
      %p74 = scmp.ne.s32.totalorder %s63, %s64
      %p75 = scmp.eq.s32.totalorder %s43, 0
      %p76 = por %p74, %p75
      %p77 = scmp.ne.s32.totalorder %s63, %s64
      %p78 = scmp.eq.s32.totalorder %s44, 3
      %p79 = por %p77, %p78
      %p81 = scmp.ne.s32.totalorder %s64, %s80
      %p82 = scmp.eq.s32.totalorder %s44, 0
      %p83 = por %p81, %p82
      %s84 = ssub.s32 %s45, %s57
      %p85 = scmp.eq.s32.totalorder %s84, 0
      %s87 = sadd.s32 %s86, 1
      %s88 = scalar_select %p85, %s86, %s87
      %p91 = pneg %p85
      %p92 = scmp.eq.s32.totalorder %s38, 3
      %p93 = por %p91, %p92
      %p94 = scmp.ne.s32.totalorder %s86, %s89
      %p95 = scmp.eq.s32.totalorder %s38, 0
      %p96 = por %p94, %p95
      %p97 = scmp.ne.s32.totalorder %s86, %s89
      %p98 = scmp.eq.s32.totalorder %s43, 3
      %p99 = por %p97, %p98
      %p100 = scmp.ne.s32.totalorder %s89, %s90
      %p101 = scmp.eq.s32.totalorder %s43, 0
      %p102 = por %p100, %p101
      %p103 = scmp.ne.s32.totalorder %s89, %s90
      %p104 = scmp.eq.s32.totalorder %s44, 3
      %p105 = por %p103, %p104
      %p107 = scmp.ne.s32.totalorder %s90, %s106
      %p108 = scmp.eq.s32.totalorder %s44, 0
      %p109 = por %p107, %p108
      %s110 = ssub.s32 %s45, %s57
      %p111 = scmp.eq.s32.totalorder %s110, 0
      %s113 = sadd.s32 %s112, 1
      %s114 = scalar_select %p111, %s112, %s113
      %p117 = pneg %p111
      %p118 = scmp.eq.s32.totalorder %s38, 3
      %p119 = por %p117, %p118
      %p120 = scmp.ne.s32.totalorder %s112, %s115
      %p121 = scmp.eq.s32.totalorder %s38, 0
      %p122 = por %p120, %p121
      %p123 = scmp.ne.s32.totalorder %s112, %s115
      %p124 = scmp.eq.s32.totalorder %s43, 3
      %p125 = por %p123, %p124
      %p126 = scmp.ne.s32.totalorder %s115, %s116
      %p127 = scmp.eq.s32.totalorder %s43, 0
      %p128 = por %p126, %p127
      %p129 = scmp.ne.s32.totalorder %s115, %s116
      %p130 = scmp.eq.s32.totalorder %s44, 3
      %p131 = por %p129, %p130
      %p133 = scmp.ne.s32.totalorder %s116, %s132
      %p134 = scmp.eq.s32.totalorder %s44, 0
      %p135 = por %p133, %p134
      %s136 = ssub.s32 %s46, %s53
      %p137 = scmp.eq.s32.totalorder %s136, 0
      %s139 = sadd.s32 %s138, 1
      %s140 = scalar_select %p137, %s138, %s139
      %p143 = pneg %p137
      %p144 = scmp.eq.s32.totalorder %s38, 3
      %p145 = por %p143, %p144
      %p146 = scmp.ne.s32.totalorder %s138, %s141
      %p147 = scmp.eq.s32.totalorder %s38, 0
      %p148 = por %p146, %p147
      %p149 = scmp.ne.s32.totalorder %s138, %s141
      %p150 = scmp.eq.s32.totalorder %s43, 3
      %p151 = por %p149, %p150
      %p152 = scmp.ne.s32.totalorder %s141, %s142
      %p153 = scmp.eq.s32.totalorder %s43, 0
      %p154 = por %p152, %p153
      %p155 = scmp.ne.s32.totalorder %s141, %s142
      %p156 = scmp.eq.s32.totalorder %s44, 3
      %p157 = por %p155, %p156
      %p159 = scmp.ne.s32.totalorder %s142, %s158
      %p160 = scmp.eq.s32.totalorder %s44, 0
      %p161 = por %p159, %p160
      %s162 = ssub.s32 %s46, %s53
      %p163 = scmp.eq.s32.totalorder %s162, 0
      %s165 = sadd.s32 %s164, 1
      %s166 = scalar_select %p163, %s164, %s165
      %p169 = pneg %p163
      %p170 = scmp.eq.s32.totalorder %s38, 3
      %p171 = por %p169, %p170
      %p172 = scmp.ne.s32.totalorder %s164, %s167
      %p173 = scmp.eq.s32.totalorder %s38, 0
      %p174 = por %p172, %p173
      %p175 = scmp.ne.s32.totalorder %s164, %s167
      %p176 = scmp.eq.s32.totalorder %s43, 3
      %p177 = por %p175, %p176
      %p178 = scmp.ne.s32.totalorder %s167, %s168
      %p179 = scmp.eq.s32.totalorder %s43, 0
      %p180 = por %p178, %p179
      %p181 = scmp.ne.s32.totalorder %s167, %s168
      %p182 = scmp.eq.s32.totalorder %s44, 3
      %p183 = por %p181, %p182
      %p185 = scmp.ne.s32.totalorder %s168, %s184
      %p186 = scmp.eq.s32.totalorder %s44, 0
      %p187 = por %p185, %p186
      %s188 = ssub.s32 %s46, %s53
      %p189 = scmp.eq.s32.totalorder %s188, 0
      %s191 = sadd.s32 %s190, 1
      %s192 = scalar_select %p189, %s190, %s191
      %p195 = pneg %p189
      %p196 = scmp.eq.s32.totalorder %s38, 3
      %p197 = por %p195, %p196
      %p198 = scmp.ne.s32.totalorder %s190, %s193
      %p199 = scmp.eq.s32.totalorder %s38, 0
      %p200 = por %p198, %p199
      %p201 = scmp.ne.s32.totalorder %s190, %s193
      %p202 = scmp.eq.s32.totalorder %s43, 3
      %p203 = por %p201, %p202
      %p204 = scmp.ne.s32.totalorder %s193, %s194
      %p205 = scmp.eq.s32.totalorder %s43, 0
      %p206 = por %p204, %p205
      %p207 = scmp.ne.s32.totalorder %s193, %s194
      %p208 = scmp.eq.s32.totalorder %s44, 3
      %p209 = por %p207, %p208
      %p211 = scmp.ne.s32.totalorder %s194, %s210
      %p212 = scmp.eq.s32.totalorder %s44, 0
      %p213 = por %p211, %p212
      %s214 = ssub.s32 %s46, %s53
      %p215 = scmp.eq.s32.totalorder %s214, 0
      %s217 = sadd.s32 %s216, 1
      %s218 = scalar_select %p215, %s216, %s217
      %p221 = pneg %p215
      %p222 = scmp.eq.s32.totalorder %s38, 3
      %p223 = por %p221, %p222
      %p224 = scmp.ne.s32.totalorder %s216, %s219
      %p225 = scmp.eq.s32.totalorder %s38, 0
      %p226 = por %p224, %p225
      %p227 = scmp.ne.s32.totalorder %s216, %s219
      %p228 = scmp.eq.s32.totalorder %s43, 3
      %p229 = por %p227, %p228
      %p230 = scmp.ne.s32.totalorder %s219, %s220
      %p231 = scmp.eq.s32.totalorder %s43, 0
      %p232 = por %p230, %p231
      %p233 = scmp.ne.s32.totalorder %s219, %s220
      %p234 = scmp.eq.s32.totalorder %s44, 3
      %p235 = por %p233, %p234
      %p237 = scmp.ne.s32.totalorder %s220, %s236
      %p238 = scmp.eq.s32.totalorder %s44, 0
      %p239 = por %p237, %p238
      %s240 = ssub.s32 %s46, %s53
      %p241 = scmp.eq.s32.totalorder %s240, 0
      %s243 = sadd.s32 %s242, 1
      %s244 = scalar_select %p241, %s242, %s243
      %p247 = pneg %p241
      %p248 = scmp.eq.s32.totalorder %s38, 3
      %p249 = por %p247, %p248
      %p250 = scmp.ne.s32.totalorder %s242, %s245
      %p251 = scmp.eq.s32.totalorder %s38, 0
      %p252 = por %p250, %p251
      %p253 = scmp.ne.s32.totalorder %s242, %s245
      %p254 = scmp.eq.s32.totalorder %s43, 3
      %p255 = por %p253, %p254
      %p256 = scmp.ne.s32.totalorder %s245, %s246
      %p257 = scmp.eq.s32.totalorder %s43, 0
      %p258 = por %p256, %p257
      %p259 = scmp.ne.s32.totalorder %s245, %s246
      %p260 = scmp.eq.s32.totalorder %s44, 3
      %p261 = por %p259, %p260
      %p263 = scmp.ne.s32.totalorder %s246, %s262
      %p264 = scmp.eq.s32.totalorder %s44, 0
      %p265 = por %p263, %p264
      %s266 = ssub.s32 %s46, %s53
      %p267 = scmp.eq.s32.totalorder %s266, 0
      %s269 = sadd.s32 %s268, 1
      %s270 = scalar_select %p267, %s268, %s269
      %p273 = pneg %p267
      %p274 = scmp.eq.s32.totalorder %s38, 3
      %p275 = por %p273, %p274
      %p276 = scmp.ne.s32.totalorder %s268, %s271
      %p277 = scmp.eq.s32.totalorder %s38, 0
      %p278 = por %p276, %p277
      %p279 = scmp.ne.s32.totalorder %s268, %s271
      %p280 = scmp.eq.s32.totalorder %s43, 3
      %p281 = por %p279, %p280
      %p282 = scmp.ne.s32.totalorder %s271, %s272
      %p283 = scmp.eq.s32.totalorder %s43, 0
      %p284 = por %p282, %p283
      %p285 = scmp.ne.s32.totalorder %s271, %s272
      %p286 = scmp.eq.s32.totalorder %s44, 3
      %p287 = por %p285, %p286
      %p289 = scmp.ne.s32.totalorder %s272, %s288
      %p290 = scmp.eq.s32.totalorder %s44, 0
      %p291 = por %p289, %p290
      %s292 = ssub.s32 %s46, %s53
      %p293 = scmp.eq.s32.totalorder %s292, 0
      %s295 = sadd.s32 %s294, 1
      %s296 = scalar_select %p293, %s294, %s295
      %p299 = pneg %p293
      %p300 = scmp.eq.s32.totalorder %s38, 3
      %p301 = por %p299, %p300
      %p302 = scmp.ne.s32.totalorder %s294, %s297
      %p303 = scmp.eq.s32.totalorder %s38, 0
      %p304 = por %p302, %p303
      %p305 = scmp.ne.s32.totalorder %s294, %s297
      %p306 = scmp.eq.s32.totalorder %s43, 3
      %p307 = por %p305, %p306
      %p308 = scmp.ne.s32.totalorder %s297, %s298
      %p309 = scmp.eq.s32.totalorder %s43, 0
      %p310 = por %p308, %p309
      %p311 = scmp.ne.s32.totalorder %s297, %s298
      %p312 = scmp.eq.s32.totalorder %s44, 3
      %p313 = por %p311, %p312
      %p315 = scmp.ne.s32.totalorder %s298, %s314
      %p316 = scmp.eq.s32.totalorder %s44, 0
      %p317 = por %p315, %p316
      %s319 = sadd.s32 %s318, 1
      %p322 = scmp.eq.s32.totalorder %s38, 3
      %p323 = scmp.ne.s32.totalorder %s318, %s320
      %p324 = scmp.eq.s32.totalorder %s38, 0
      %p325 = por %p323, %p324
      %p326 = scmp.ne.s32.totalorder %s318, %s320
      %p327 = scmp.eq.s32.totalorder %s43, 3
      %p328 = por %p326, %p327
      %p329 = scmp.ne.s32.totalorder %s320, %s321
      %p330 = scmp.eq.s32.totalorder %s43, 0
      %p331 = por %p329, %p330
      %p332 = scmp.ne.s32.totalorder %s320, %s321
      %p333 = scmp.eq.s32.totalorder %s44, 3
      %p334 = por %p332, %p333
      %p336 = scmp.ne.s32.totalorder %s321, %s335
      %p337 = scmp.eq.s32.totalorder %s44, 0
      %p338 = por %p336, %p337
      %s339 = ssub.s32 %s45, %s57
      %p340 = scmp.eq.s32.totalorder %s339, 0
      %s342 = sadd.s32 %s341, 1
      %s343 = scalar_select %p340, %s341, %s342
      %p346 = pneg %p340
      %p347 = scmp.eq.s32.totalorder %s38, 3
      %p348 = por %p346, %p347
      %p349 = scmp.ne.s32.totalorder %s341, %s344
      %p350 = scmp.eq.s32.totalorder %s38, 0
      %p351 = por %p349, %p350
      %p352 = scmp.ne.s32.totalorder %s341, %s344
      %p353 = scmp.eq.s32.totalorder %s43, 3
      %p354 = por %p352, %p353
      %p355 = scmp.ne.s32.totalorder %s344, %s345
      %p356 = scmp.eq.s32.totalorder %s43, 0
      %p357 = por %p355, %p356
      %p358 = scmp.ne.s32.totalorder %s344, %s345
      %p359 = scmp.eq.s32.totalorder %s44, 3
      %p360 = por %p358, %p359
      %p362 = scmp.ne.s32.totalorder %s345, %s361
      %p363 = scmp.eq.s32.totalorder %s44, 0
      %p364 = por %p362, %p363
      %p365 = scmp.le.s32.totalorder 1, %s38
      %p366 = scmp.lt.s32.totalorder %s38, 5
      %p367 = pnand %p365, %p366
      %p368 = pneg %p367
      // Predicated region
      $region9: #{semantic_transformer.1} parent=5 // pred_check
        _
      $region10: #{semantic_transformer.1} parent=5 // pred_check_branch
        %370 = sbr.rel (%p367) target = $region12
      $region11: #{semantic_transformer.1} parent=5 // pred_region
        %s371 = ssub.s32 %s38, 1
        // Predicated region
        $region13: #{semantic_transformer.1} parent=11 // pred_check
          %p372 = pneg %p331
        $region14: #{semantic_transformer.1} parent=11 // pred_check_branch
          %374 = sbr.rel (%p372) target = $region16
        $region15: #{semantic_transformer.1} parent=11 // pred_region
          %s376 = ssub.s32 32, 32
          %377 = vsyncadd [#allocation20], %s376
          %s379 = sshll.u32 [#allocation21], 4
          %s380 = int_to_ptr.vmem [resolvable:$true] %s379
          %382 = dma.hbm_to_vmem [thread:$0]  %s10, 32, %s380, [#allocation20]
        $region16: #{semantic_transformer.1} parent=11 // pred_fallthru
          _
      $region12: #{semantic_transformer.1} parent=5 // pred_fallthru
        _
      %p383 = scmp.lt.s32.totalorder %s38, 4
      // Predicated region
      $region17: #{semantic_transformer.1} parent=5 // pred_check
        %p384 = pneg %p383
      $region18: #{semantic_transformer.1} parent=5 // pred_check_branch
        %386 = sbr.rel (%p384) target = $region20
      $region19: #{semantic_transformer.1} parent=5 // pred_region
        // Predicated region
        $region21: #{semantic_transformer.1} parent=19 // pred_check
          %p387 = pneg %p70
        $region22: #{semantic_transformer.1} parent=19 // pred_check_branch
          %389 = sbr.rel (%p387) target = $region24
        $region23: #{semantic_transformer.1} parent=19 // pred_region
          %s390 = sand.u32 %s60, 1
          %s391 = scalar_lea.sflag [#allocation5], %s390
          %s392 = sand.u32 %s60, 1
          %s393 = smul.addr %s392, 32
          %s394 = scalar_lea.vmem [#allocation4], %s393
          %s395 = smul.u32 2, %s45
          %s397 = ssub.s32 512, 512
          %398 = vsyncadd %s391, %s397
          %s399 = smul.addr %s395, 2
          %s400 = smul.addr %s399, 128
          %s401 = scalar_lea.hbm %s0, %s400
          %s402 = sshll.u32 %s394, 4
          %s403 = int_to_ptr.vmem [resolvable:$true] %s402
          %408 = dma.hbm_to_vmem [thread:$0]  %s401, 512, %s403, %s391, 128, 128, 8
        $region24: #{semantic_transformer.1} parent=19 // pred_fallthru
          _
        // Predicated region
        $region25: #{semantic_transformer.1} parent=19 // pred_check
          %p409 = pneg %p96
        $region26: #{semantic_transformer.1} parent=19 // pred_check_branch
          %411 = sbr.rel (%p409) target = $region28
        $region27: #{semantic_transformer.1} parent=19 // pred_region
          %s412 = sand.u32 %s38, 1
          %s413 = scalar_lea.sflag [#allocation8], %s412
          %s414 = sand.u32 %s86, 1
          %s415 = smul.addr %s414, 32
          %s416 = scalar_lea.vmem [#allocation7], %s415
          %s417 = smul.u32 2, %s45
          %s419 = ssub.s32 512, 512
          %420 = vsyncadd %s413, %s419
          %s421 = smul.addr %s417, 2
          %s422 = smul.addr %s421, 128
          %s423 = scalar_lea.hbm %s1, %s422
          %s424 = sshll.u32 %s416, 4
          %s425 = int_to_ptr.vmem [resolvable:$true] %s424
          %430 = dma.hbm_to_vmem [thread:$0]  %s423, 512, %s425, %s413, 128, 128, 8
        $region28: #{semantic_transformer.1} parent=19 // pred_fallthru
          _
        // Predicated region
        $region29: #{semantic_transformer.1} parent=19 // pred_check
          %p431 = pneg %p122
        $region30: #{semantic_transformer.1} parent=19 // pred_check_branch
          %433 = sbr.rel (%p431) target = $region32
        $region31: #{semantic_transformer.1} parent=19 // pred_region
          %s434 = sand.u32 %s38, 1
          %s435 = scalar_lea.sflag [#allocation8], %s434
          %s436 = sand.u32 %s112, 1
          %s437 = smul.addr %s436, 2
          %s438 = scalar_lea.vmem [#allocation9], %s437
          %s439 = smul.u32 2, %s45
          %s441 = ssub.s32 32, 32
          %442 = vsyncadd %s435, %s441
          %s443 = smul.addr %s439, 16
          %s444 = scalar_lea.hbm %s2, %s443
          %s445 = sshll.u32 %s438, 4
          %s446 = int_to_ptr.vmem [resolvable:$true] %s445
          %451 = dma.hbm_to_vmem [thread:$0]  %s444, 32, %s446, %s435, 16, 16, 1
        $region32: #{semantic_transformer.1} parent=19 // pred_fallthru
          _
        // Predicated region
        $region33: #{semantic_transformer.1} parent=19 // pred_check
          %p452 = pneg %p148
        $region34: #{semantic_transformer.1} parent=19 // pred_check_branch
          %454 = sbr.rel (%p452) target = $region36
        $region35: #{semantic_transformer.1} parent=19 // pred_region
          %s455 = sand.u32 %s38, 1
          %s456 = scalar_lea.sflag [#allocation11], %s455
          %s457 = sand.u32 %s138, 1
          %s458 = smul.addr %s457, 8
          %s459 = scalar_lea.vmem [#allocation10], %s458
          %s461 = ssub.s32 128, 128
          %462 = vsyncadd %s456, %s461
          %s463 = smul.addr %s46, 128
          %s464 = scalar_lea.hbm %s3, %s463
          %s466 = sshll.u32 %s459, 4
          %s467 = int_to_ptr.vmem [resolvable:$true] %s466
          %469 = dma.hbm_to_vmem [thread:$0]  %s464, 128, %s467, %s456
        $region36: #{semantic_transformer.1} parent=19 // pred_fallthru
          _
        // Predicated region
        $region37: #{semantic_transformer.1} parent=19 // pred_check
          %p470 = pneg %p174
        $region38: #{semantic_transformer.1} parent=19 // pred_check_branch
          %472 = sbr.rel (%p470) target = $region40
        $region39: #{semantic_transformer.1} parent=19 // pred_region
          %s473 = sand.u32 %s38, 1
          %s474 = scalar_lea.sflag [#allocation11], %s473
          %s475 = sand.u32 %s164, 1
          %s476 = smul.addr %s475, 3
          %s477 = scalar_lea.vmem [#allocation12], %s476
          %s479 = ssub.s32 48, 48
          %480 = vsyncadd %s474, %s479
          %s481 = smul.addr %s46, 3
          %s482 = smul.addr %s481, 16
          %s483 = scalar_lea.hbm %s4, %s482
          %s485 = sshll.u32 %s477, 4
          %s486 = int_to_ptr.vmem [resolvable:$true] %s485
          %488 = dma.hbm_to_vmem [thread:$0]  %s483, 48, %s486, %s474
        $region40: #{semantic_transformer.1} parent=19 // pred_fallthru
          _
        // Predicated region
        $region41: #{semantic_transformer.1} parent=19 // pred_check
          %p489 = pneg %p200
        $region42: #{semantic_transformer.1} parent=19 // pred_check_branch
          %491 = sbr.rel (%p489) target = $region44
        $region43: #{semantic_transformer.1} parent=19 // pred_region
          %s492 = sand.u32 %s38, 1
          %s493 = scalar_lea.sflag [#allocation14], %s492
          %s494 = sand.u32 %s190, 1
          %s495 = smul.addr %s494, 4
          %s496 = scalar_lea.vmem [#allocation13], %s495
          %s498 = ssub.s32 64, 64
          %499 = vsyncadd %s493, %s498
          %s500 = smul.addr %s46, 4
          %s501 = smul.addr %s500, 16
          %s502 = scalar_lea.hbm %s5, %s501
          %s504 = sshll.u32 %s496, 4
          %s505 = int_to_ptr.vmem [resolvable:$true] %s504
          %507 = dma.hbm_to_vmem [thread:$0]  %s502, 64, %s505, %s493
        $region44: #{semantic_transformer.1} parent=19 // pred_fallthru
          _
        // Predicated region
        $region45: #{semantic_transformer.1} parent=19 // pred_check
          %p508 = pneg %p226
        $region46: #{semantic_transformer.1} parent=19 // pred_check_branch
          %510 = sbr.rel (%p508) target = $region48
        $region47: #{semantic_transformer.1} parent=19 // pred_region
          %s511 = sand.u32 %s38, 1
          %s512 = scalar_lea.sflag [#allocation14], %s511
          %s513 = sand.u32 %s216, 1
          %s514 = smul.addr %s513, 192
          %s515 = scalar_lea.vmem [#allocation15], %s514
          %s517 = ssub.s32 3072, 3072
          %518 = vsyncadd %s512, %s517
          %s519 = smul.addr %s46, 48
          %s520 = smul.addr %s519, 64
          %s521 = scalar_lea.hbm %s6, %s520
          %s522 = sshll.u32 %s515, 4
          %s523 = int_to_ptr.vmem [resolvable:$true] %s522
          %528 = dma.hbm_to_vmem [thread:$0]  %s521, 3072, %s523, %s512, 192, 192, 12
        $region48: #{semantic_transformer.1} parent=19 // pred_fallthru
          _
        // Predicated region
        $region49: #{semantic_transformer.1} parent=19 // pred_check
          %p529 = pneg %p252
        $region50: #{semantic_transformer.1} parent=19 // pred_check_branch
          %531 = sbr.rel (%p529) target = $region52
        $region51: #{semantic_transformer.1} parent=19 // pred_region
          %s532 = sand.u32 %s38, 1
          %s533 = scalar_lea.sflag [#allocation17], %s532
          %s534 = sand.u32 %s242, 1
          %s535 = smul.addr %s534, 64
          %s536 = scalar_lea.vmem [#allocation16], %s535
          %s538 = ssub.s32 1024, 1024
          %539 = vsyncadd %s533, %s538
          %s540 = smul.addr %s46, 16
          %s541 = smul.addr %s540, 64
          %s542 = scalar_lea.hbm %s7, %s541
          %s543 = sshll.u32 %s536, 4
          %s544 = int_to_ptr.vmem [resolvable:$true] %s543
          %549 = dma.hbm_to_vmem [thread:$0]  %s542, 1024, %s544, %s533, 64, 64, 4
        $region52: #{semantic_transformer.1} parent=19 // pred_fallthru
          _
        // Predicated region
        $region53: #{semantic_transformer.1} parent=19 // pred_check
          %p550 = pneg %p278
        $region54: #{semantic_transformer.1} parent=19 // pred_check_branch
          %552 = sbr.rel (%p550) target = $region56
        $region55: #{semantic_transformer.1} parent=19 // pred_region
          %s553 = sand.u32 %s38, 1
          %s554 = scalar_lea.sflag [#allocation17], %s553
          %s555 = sand.u32 %s268, 1
          %s556 = smul.addr %s555, 256
          %s557 = scalar_lea.vmem [#allocation18], %s556
          %s559 = ssub.s32 4096, 4096
          %560 = vsyncadd %s554, %s559
          %s561 = smul.addr %s46, 64
          %s562 = smul.addr %s561, 64
          %s563 = scalar_lea.hbm %s8, %s562
          %s564 = sshll.u32 %s557, 4
          %s565 = int_to_ptr.vmem [resolvable:$true] %s564
          %570 = dma.hbm_to_vmem [thread:$0]  %s563, 4096, %s565, %s554, 256, 256, 16
        $region56: #{semantic_transformer.1} parent=19 // pred_fallthru
          _
        // Predicated region
        $region57: #{semantic_transformer.1} parent=19 // pred_check
          %p571 = pneg %p304
        $region58: #{semantic_transformer.1} parent=19 // pred_check_branch
          %573 = sbr.rel (%p571) target = $region60
        $region59: #{semantic_transformer.1} parent=19 // pred_region
          %s574 = sand.u32 %s38, 1
          %s575 = scalar_lea.sflag [#allocation20], %s574
          %s576 = sand.u32 %s294, 1
          %s577 = smul.addr %s576, 256
          %s578 = scalar_lea.vmem [#allocation19], %s577
          %s580 = ssub.s32 4096, 4096
          %581 = vsyncadd %s575, %s580
          %s582 = smul.addr %s46, 64
          %s583 = smul.addr %s582, 64
          %s584 = scalar_lea.hbm %s9, %s583
          %s585 = sshll.u32 %s578, 4
          %s586 = int_to_ptr.vmem [resolvable:$true] %s585
          %591 = dma.hbm_to_vmem [thread:$0]  %s584, 4096, %s586, %s575, 64, 64, 4
        $region60: #{semantic_transformer.1} parent=19 // pred_fallthru
          _
      $region20: #{semantic_transformer.1} parent=5 // pred_fallthru
        _
      %p592 = scmp.le.s32.totalorder 1, %s38
      %p593 = scmp.lt.s32.totalorder %s38, 5
      %p594 = pnand %p592, %p593
      %p595 = pneg %p594
      // Predicated region
      $region61: #{semantic_transformer.1} parent=5 // pred_check
        _
      $region62: #{semantic_transformer.1} parent=5 // pred_check_branch
        %597 = sbr.rel (%p594) target = $region64
      $region63: #{semantic_transformer.1} parent=5 // pred_region
        %s598 = ssub.s32 %s38, 1
        %s599 = sand.u32 %s63, 1
        %s600 = scalar_lea.sflag [#allocation5], %s599
        %s601 = sand.u32 %s63, 1
        %s602 = smul.addr %s601, 32
        %s603 = scalar_lea.vmem [#allocation4], %s602
        // Predicated region
        $region65: #{semantic_transformer.1} parent=63 // pred_check
          %p604 = pneg %p76
        $region66: #{semantic_transformer.1} parent=63 // pred_check_branch
          %606 = sbr.rel (%p604) target = $region68
        $region67: #{semantic_transformer.1} parent=63 // pred_region
          %607 = dma.done %s600, 512
        $region68: #{semantic_transformer.1} parent=63 // pred_fallthru
          _
        %s608 = sand.u32 %s43, 1
        %s609 = scalar_lea.sflag [#allocation8], %s608
        %s610 = sand.u32 %s89, 1
        %s611 = smul.addr %s610, 32
        %s612 = scalar_lea.vmem [#allocation7], %s611
        // Predicated region
        $region69: #{semantic_transformer.1} parent=63 // pred_check
          %p613 = pneg %p102
        $region70: #{semantic_transformer.1} parent=63 // pred_check_branch
          %615 = sbr.rel (%p613) target = $region72
        $region71: #{semantic_transformer.1} parent=63 // pred_region
          %616 = dma.done %s609, 512
        $region72: #{semantic_transformer.1} parent=63 // pred_fallthru
          _
        %s617 = sand.u32 %s43, 1
        %s618 = scalar_lea.sflag [#allocation8], %s617
        %s619 = sand.u32 %s115, 1
        %s620 = smul.addr %s619, 2
        %s621 = scalar_lea.vmem [#allocation9], %s620
        // Predicated region
        $region73: #{semantic_transformer.1} parent=63 // pred_check
          %p622 = pneg %p128
        $region74: #{semantic_transformer.1} parent=63 // pred_check_branch
          %624 = sbr.rel (%p622) target = $region76
        $region75: #{semantic_transformer.1} parent=63 // pred_region
          %625 = dma.done %s618, 32
        $region76: #{semantic_transformer.1} parent=63 // pred_fallthru
          _
        %s626 = sand.u32 %s43, 1
        %s627 = scalar_lea.sflag [#allocation11], %s626
        %s628 = sand.u32 %s141, 1
        %s629 = smul.addr %s628, 8
        %s630 = scalar_lea.vmem [#allocation10], %s629
        // Predicated region
        $region77: #{semantic_transformer.1} parent=63 // pred_check
          %p631 = pneg %p154
        $region78: #{semantic_transformer.1} parent=63 // pred_check_branch
          %633 = sbr.rel (%p631) target = $region80
        $region79: #{semantic_transformer.1} parent=63 // pred_region
          %634 = dma.done %s627, 128
        $region80: #{semantic_transformer.1} parent=63 // pred_fallthru
          _
        %s635 = sand.u32 %s43, 1
        %s636 = scalar_lea.sflag [#allocation11], %s635
        %s637 = sand.u32 %s167, 1
        %s638 = smul.addr %s637, 3
        %s639 = scalar_lea.vmem [#allocation12], %s638
        // Predicated region
        $region81: #{semantic_transformer.1} parent=63 // pred_check
          %p640 = pneg %p180
        $region82: #{semantic_transformer.1} parent=63 // pred_check_branch
          %642 = sbr.rel (%p640) target = $region84
        $region83: #{semantic_transformer.1} parent=63 // pred_region
          %643 = dma.done %s636, 48
        $region84: #{semantic_transformer.1} parent=63 // pred_fallthru
          _
        %s644 = sand.u32 %s43, 1
        %s645 = scalar_lea.sflag [#allocation14], %s644
        %s646 = sand.u32 %s193, 1
        %s647 = smul.addr %s646, 4
        %s648 = scalar_lea.vmem [#allocation13], %s647
        // Predicated region
        $region85: #{semantic_transformer.1} parent=63 // pred_check
          %p649 = pneg %p206
        $region86: #{semantic_transformer.1} parent=63 // pred_check_branch
          %651 = sbr.rel (%p649) target = $region88
        $region87: #{semantic_transformer.1} parent=63 // pred_region
          %652 = dma.done %s645, 64
        $region88: #{semantic_transformer.1} parent=63 // pred_fallthru
          _
        %s653 = sand.u32 %s43, 1
        %s654 = scalar_lea.sflag [#allocation14], %s653
        %s655 = sand.u32 %s219, 1
        %s656 = smul.addr %s655, 192
        %s657 = scalar_lea.vmem [#allocation15], %s656
        // Predicated region
        $region89: #{semantic_transformer.1} parent=63 // pred_check
          %p658 = pneg %p232
        $region90: #{semantic_transformer.1} parent=63 // pred_check_branch
          %660 = sbr.rel (%p658) target = $region92
        $region91: #{semantic_transformer.1} parent=63 // pred_region
          %661 = dma.done %s654, 3072
        $region92: #{semantic_transformer.1} parent=63 // pred_fallthru
          _
        %s662 = sand.u32 %s43, 1
        %s663 = scalar_lea.sflag [#allocation17], %s662
        %s664 = sand.u32 %s245, 1
        %s665 = smul.addr %s664, 64
        %s666 = scalar_lea.vmem [#allocation16], %s665
        // Predicated region
        $region93: #{semantic_transformer.1} parent=63 // pred_check
          %p667 = pneg %p258
        $region94: #{semantic_transformer.1} parent=63 // pred_check_branch
          %669 = sbr.rel (%p667) target = $region96
        $region95: #{semantic_transformer.1} parent=63 // pred_region
          %670 = dma.done %s663, 1024
        $region96: #{semantic_transformer.1} parent=63 // pred_fallthru
          _
        %s671 = sand.u32 %s43, 1
        %s672 = scalar_lea.sflag [#allocation17], %s671
        %s673 = sand.u32 %s271, 1
        %s674 = smul.addr %s673, 256
        %s675 = scalar_lea.vmem [#allocation18], %s674
        // Predicated region
        $region97: #{semantic_transformer.1} parent=63 // pred_check
          %p676 = pneg %p284
        $region98: #{semantic_transformer.1} parent=63 // pred_check_branch
          %678 = sbr.rel (%p676) target = $region100
        $region99: #{semantic_transformer.1} parent=63 // pred_region
          %679 = dma.done %s672, 4096
        $region100: #{semantic_transformer.1} parent=63 // pred_fallthru
          _
        %s680 = sand.u32 %s43, 1
        %s681 = scalar_lea.sflag [#allocation20], %s680
        %s682 = sand.u32 %s297, 1
        %s683 = smul.addr %s682, 256
        %s684 = scalar_lea.vmem [#allocation19], %s683
        // Predicated region
        $region101: #{semantic_transformer.1} parent=63 // pred_check
          %p685 = pneg %p310
        $region102: #{semantic_transformer.1} parent=63 // pred_check_branch
          %687 = sbr.rel (%p685) target = $region104
        $region103: #{semantic_transformer.1} parent=63 // pred_region
          %688 = dma.done %s681, 4096
        $region104: #{semantic_transformer.1} parent=63 // pred_fallthru
          _
        // Predicated region
        $region105: #{semantic_transformer.1} parent=63 // pred_check
          %p689 = pneg %p331
        $region106: #{semantic_transformer.1} parent=63 // pred_check_branch
          %691 = sbr.rel (%p689) target = $region108
        $region107: #{semantic_transformer.1} parent=63 // pred_region
          %692 = dma.done [#allocation20], 32
        $region108: #{semantic_transformer.1} parent=63 // pred_fallthru
          _
        %s693 = sand.u32 %s63, 1
        %s694 = scalar_lea.sflag [#allocation5], %s693
        %s695 = sand.u32 %s63, 1
        %s696 = smul.addr %s695, 32
        %s697 = scalar_lea.vmem [#allocation4], %s696
        %p698 = pneg %p76
        %p699 = pneg %p73
        %s700 = sand.u32 %s43, 1
        %s701 = scalar_lea.sflag [#allocation8], %s700
        %s702 = sand.u32 %s89, 1
        %s703 = smul.addr %s702, 32
        %s704 = scalar_lea.vmem [#allocation7], %s703
        %p705 = pneg %p102
        %p706 = pneg %p99
        %s707 = sand.u32 %s43, 1
        %s708 = scalar_lea.sflag [#allocation8], %s707
        %s709 = sand.u32 %s115, 1
        %s710 = smul.addr %s709, 2
        %s711 = scalar_lea.vmem [#allocation9], %s710
        %p712 = pneg %p128
        %p713 = pneg %p125
        %s714 = sand.u32 %s43, 1
        %s715 = scalar_lea.sflag [#allocation11], %s714
        %s716 = sand.u32 %s141, 1
        %s717 = smul.addr %s716, 8
        %s718 = scalar_lea.vmem [#allocation10], %s717
        %p719 = pneg %p154
        %p720 = pneg %p151
        %s721 = sand.u32 %s43, 1
        %s722 = scalar_lea.sflag [#allocation11], %s721
        %s723 = sand.u32 %s167, 1
        %s724 = smul.addr %s723, 3
        %s725 = scalar_lea.vmem [#allocation12], %s724
        %p726 = pneg %p180
        %p727 = pneg %p177
        %s728 = sand.u32 %s43, 1
        %s729 = scalar_lea.sflag [#allocation14], %s728
        %s730 = sand.u32 %s193, 1
        %s731 = smul.addr %s730, 4
        %s732 = scalar_lea.vmem [#allocation13], %s731
        %p733 = pneg %p206
        %p734 = pneg %p203
        %s735 = sand.u32 %s43, 1
        %s736 = scalar_lea.sflag [#allocation14], %s735
        %s737 = sand.u32 %s219, 1
        %s738 = smul.addr %s737, 192
        %s739 = scalar_lea.vmem [#allocation15], %s738
        %p740 = pneg %p232
        %p741 = pneg %p229
        %s742 = sand.u32 %s43, 1
        %s743 = scalar_lea.sflag [#allocation17], %s742
        %s744 = sand.u32 %s245, 1
        %s745 = smul.addr %s744, 64
        %s746 = scalar_lea.vmem [#allocation16], %s745
        %p747 = pneg %p258
        %p748 = pneg %p255
        %s749 = sand.u32 %s43, 1
        %s750 = scalar_lea.sflag [#allocation17], %s749
        %s751 = sand.u32 %s271, 1
        %s752 = smul.addr %s751, 256
        %s753 = scalar_lea.vmem [#allocation18], %s752
        %p754 = pneg %p284
        %p755 = pneg %p281
        %s756 = sand.u32 %s43, 1
        %s757 = scalar_lea.sflag [#allocation20], %s756
        %s758 = sand.u32 %s297, 1
        %s759 = smul.addr %s758, 256
        %s760 = scalar_lea.vmem [#allocation19], %s759
        %p761 = pneg %p310
        %p762 = pneg %p307
        %p763 = pneg %p331
        %p764 = pneg %p328
        %p765 = pneg %p357
        %p766 = pneg %p354
        %s767 = sand.u32 %s344, 1
        %s768 = scalar_lea.sflag [#allocation6], %s767
        %s769 = sand.u32 %s344, 1
        %s770 = smul.addr %s769, 32
        %s771 = scalar_lea.vmem [#allocation22], %s770
        %s772 = smul.u32 2, %s47
        %s773 = smul.u32 2, %s47
        %s774 = smul.u32 2, %s47
        %s775 = smul.u32 2, %s47
        %p777 = scmp.eq.s32.totalorder %s48, 0
        // Predicated region
        $region109: #{semantic_transformer.1} parent=63 // pred_check
          %p778 = pneg %p777
        $region110: #{semantic_transformer.1} parent=63 // pred_check_branch
          %780 = sbr.rel (%p778) target = $region112
        $region111: #{semantic_transformer.1} parent=63 // pred_region
          %v781 = vld [vmem:[%s603] sm:$0xff]
          %v782 = vld [vmem:[%s603 + $0x8] sm:$0xff]
          %v783 = vld [vmem:[%s603 + $0x10] sm:$0xff]
          %v784 = vld [vmem:[%s603 + $0x18] sm:$0xff]
          %785 = vst [vmem:[#allocation2] sm:$0xff] %v781
          %786 = vst [vmem:[#allocation2 + $0x8] sm:$0xff] %v782
          %787 = vst [vmem:[#allocation2 + $0x10] sm:$0xff] %v783
          %788 = vst [vmem:[#allocation2 + $0x18] sm:$0xff] %v784
          %v789 = vld [vmem:[%s612] sm:$0xff]
          %v790 = vld [vmem:[%s612 + $0x8] sm:$0xff]
          %v791 = vld [vmem:[%s612 + $0x10] sm:$0xff]
          %v792 = vld [vmem:[%s612 + $0x18] sm:$0xff]
          %v793 = vld [vmem:[%s621] sm:$0x1]
          %v794 = vld [vmem:[%s621 + $0x1] sm:$0x1]
          %796 = vset.pattern.permute.xlu0 0
          %797 = vperm.xlu0 %796, %v789
          %v798 = vpop.permute.xlu0 %797
          %801 = vset.pattern.permute.xlu0 0
          %802 = vperm.xlu0 %801, %v790
          %v803 = vpop.permute.xlu0 %802
          %806 = vset.pattern.permute.xlu0 0
          %807 = vperm.xlu0 %806, %v791
          %v808 = vpop.permute.xlu0 %807
          %811 = vset.pattern.permute.xlu0 0
          %812 = vperm.xlu0 %811, %v792
          %v813 = vpop.permute.xlu0 %812
          %v817 = vlaneseq
          %v818 = vshrl.u32 %v817, 7
          %v819 = vsub.s32 0, %v818
          %v820 = vrot.slane %v793, %v819
          %v821 = vlaneseq
          %v822 = vshrl.u32 %v821, 7
          %v823 = vsub.s32 0, %v822
          %v824 = vrot.slane %v794, %v823
          %v827 = vmul.f32 %v798, %v820
          %v828 = vmul.f32 %v803, %v820
          %v829 = vmul.f32 %v808, %v824
          %v830 = vmul.f32 %v813, %v824
          %v831 = vsub.f32 %v827, 1.0
          %v832 = vsub.f32 %v828, 1.0
          %v833 = vsub.f32 %v829, 1.0
          %v834 = vsub.f32 %v830, 1.0
          %v835 = vmul.f32 %v831, 1e+30
          %v836 = vmul.f32 %v832, 1e+30
          %v837 = vmul.f32 %v833, 1e+30
          %v838 = vmul.f32 %v834, 1e+30
          %vm839 = vcmask 130048
          %840 = vst.msk [vmem:[#allocation3] sm:$0xff] %vm839, %v835
          %841 = vst.msk [vmem:[#allocation3 + $0x8] sm:$0xff] %vm839, %v836
          %842 = vst.msk [vmem:[#allocation3 + $0x10] sm:$0xff] %vm839, %v837
          %843 = vst.msk [vmem:[#allocation3 + $0x18] sm:$0xff] %vm839, %v838
        $region112: #{semantic_transformer.1} parent=63 // pred_fallthru
          _
        %v844 = vld [vmem:[#allocation2] sm:$0xff]
        %v845 = vld [vmem:[#allocation2 + $0x8] sm:$0xff]
        %v846 = vld [vmem:[#allocation2 + $0x10] sm:$0xff]
        %v847 = vld [vmem:[#allocation2 + $0x18] sm:$0xff]
        %v848 = vld [vmem:[%s612] sm:$0xff]
        %v849 = vld [vmem:[%s612 + $0x8] sm:$0xff]
        %v850 = vld [vmem:[%s612 + $0x10] sm:$0xff]
        %v851 = vld [vmem:[%s612 + $0x18] sm:$0xff]
        %v852 = vld [vmem:[#allocation3] sm:$0xff]
        %v853 = vld [vmem:[#allocation3 + $0x8] sm:$0xff]
        %v854 = vld [vmem:[#allocation3 + $0x10] sm:$0xff]
        %v855 = vld [vmem:[#allocation3 + $0x18] sm:$0xff]
        %v856 = vld [vmem:[%s630] sm:$0x3f]
        %857 = vadd.xlane.f32.xlu0 %v844
        %v858 = vpop.xlane.xlu0 %857
        %859 = vadd.xlane.f32.xlu0 %v845
        %v860 = vpop.xlane.xlu0 %859
        %861 = vadd.xlane.f32.xlu0 %v846
        %v862 = vpop.xlane.xlu0 %861
        %863 = vadd.xlane.f32.xlu0 %v847
        %v864 = vpop.xlane.xlu0 %863
        %v865 = vrcp.pop 128.0
        %v866 = vmul.f32 %v858, %v865
        %v867 = vmul.f32 %v860, %v865
        %v868 = vmul.f32 %v862, %v865
        %v869 = vmul.f32 %v864, %v865
        %v870 = vsub.f32 %v844, %v866
        %v871 = vsub.f32 %v845, %v867
        %v872 = vsub.f32 %v846, %v868
        %v873 = vsub.f32 %v847, %v869
        %v874 = vmul.f32 %v870, %v870
        %v875 = vmul.f32 %v871, %v871
        %v876 = vmul.f32 %v872, %v872
        %v877 = vmul.f32 %v873, %v873
        %878 = vadd.xlane.f32.xlu0 %v874
        %v879 = vpop.xlane.xlu0 %878
        %880 = vadd.xlane.f32.xlu0 %v875
        %v881 = vpop.xlane.xlu0 %880
        %882 = vadd.xlane.f32.xlu0 %v876
        %v883 = vpop.xlane.xlu0 %882
        %884 = vadd.xlane.f32.xlu0 %v877
        %v885 = vpop.xlane.xlu0 %884
        %v886 = vmul.f32 %v879, %v865
        %v887 = vmul.f32 %v881, %v865
        %v888 = vmul.f32 %v883, %v865
        %v889 = vmul.f32 %v885, %v865
        %v890 = vadd.f32 %v886, 1e-05
        %v891 = vadd.f32 %v887, 1e-05
        %v892 = vadd.f32 %v888, 1e-05
        %v893 = vadd.f32 %v889, 1e-05
        %v894 = vrsqrt.pop %v890
        %v895 = vrsqrt.pop %v891
        %v896 = vrsqrt.pop %v892
        %v897 = vrsqrt.pop %v893
        %v898 = vmul.f32 %v870, %v894
        %v899 = vmul.f32 %v871, %v895
        %v900 = vmul.f32 %v872, %v896
        %v901 = vmul.f32 %v873, %v897
        %v902 = vlaneseq
        %v903 = vshrl.u32 %v902, 7
        %v904 = vsub.s32 0, %v903
        %v905 = vrot.slane %v856, %v904
        %v906 = vmul.f32 %v898, %v905
        %v907 = vmul.f32 %v899, %v905
        %v908 = vmul.f32 %v900, %v905
        %v909 = vmul.f32 %v901, %v905
        %v910 = vlaneseq
        %v911 = vshrl.u32 %v910, 7
        %v912 = vsub.s32 1, %v911
        %v913 = vrot.slane %v856, %v912
        %v914 = vadd.f32 %v906, %v913
        %v915 = vadd.f32 %v907, %v913
        %v916 = vadd.f32 %v908, %v913
        %v917 = vadd.f32 %v909, %v913
        %v918 = vpack.c.bf16 %v915, %v914
        %v919 = vpack.c.bf16 %v917, %v916
        %v920 = vld [vmem:[%s657] sm:$0xff]
        %v921 = vld [vmem:[%s657 + $0x8] sm:$0xf]
        %v922 = vld [vmem:[%s657 + $0xc] sm:$0xff]
        %v923 = vld [vmem:[%s657 + $0x14] sm:$0xf]
        %v924 = vld [vmem:[%s657 + $0x18] sm:$0xff]
        %v925 = vld [vmem:[%s657 + $0x20] sm:$0xf]
        %v926 = vld [vmem:[%s657 + $0x24] sm:$0xff]
        %v927 = vld [vmem:[%s657 + $0x2c] sm:$0xf]
        %v928 = vld [vmem:[%s657 + $0x30] sm:$0xff]
        %v929 = vld [vmem:[%s657 + $0x38] sm:$0xf]
        %v930 = vld [vmem:[%s657 + $0x3c] sm:$0xff]
        %v931 = vld [vmem:[%s657 + $0x44] sm:$0xf]
        %v932 = vld [vmem:[%s657 + $0x48] sm:$0xff]
        %v933 = vld [vmem:[%s657 + $0x50] sm:$0xf]
        %v934 = vld [vmem:[%s657 + $0x54] sm:$0xff]
        %v935 = vld [vmem:[%s657 + $0x5c] sm:$0xf]
        %v936 = vld [vmem:[%s657 + $0x60] sm:$0xff]
        %v937 = vld [vmem:[%s657 + $0x68] sm:$0xf]
        %v938 = vld [vmem:[%s657 + $0x6c] sm:$0xff]
        %v939 = vld [vmem:[%s657 + $0x74] sm:$0xf]
        %v940 = vld [vmem:[%s657 + $0x78] sm:$0xff]
        %v941 = vld [vmem:[%s657 + $0x80] sm:$0xf]
        %v942 = vld [vmem:[%s657 + $0x84] sm:$0xff]
        %v943 = vld [vmem:[%s657 + $0x8c] sm:$0xf]
        %v944 = vld [vmem:[%s657 + $0x90] sm:$0xff]
        %v945 = vld [vmem:[%s657 + $0x98] sm:$0xf]
        %v946 = vld [vmem:[%s657 + $0x9c] sm:$0xff]
        %v947 = vld [vmem:[%s657 + $0xa4] sm:$0xf]
        %v948 = vld [vmem:[%s657 + $0xa8] sm:$0xff]
        %v949 = vld [vmem:[%s657 + $0xb0] sm:$0xf]
        %v950 = vld [vmem:[%s657 + $0xb4] sm:$0xff]
        %v951 = vld [vmem:[%s657 + $0xbc] sm:$0xf]
        %v952 = vld [vmem:[%s639] sm:$0x7]
        %v954 = vlaneseq
        %v955 = vshrl.u32 %v954, 7
        %v956 = vsub.s32 0, %v955
        %v957 = vrot.slane %v952, %v956
        %v958 = vlaneseq
        %v959 = vshrl.u32 %v958, 7
        %v960 = vsub.s32 1, %v959
        %v961 = vrot.slane %v952, %v960
        %v962 = vlaneseq
        %v963 = vshrl.u32 %v962, 7
        %v964 = vsub.s32 2, %v963
        %v965 = vrot.slane %v952, %v964
        %v1001 = vunpack.c.l.b16 %v920
        %v1002 = vunpack.c.h.b16 %v920
        %v1003 = vunpack.c.l.b16 %v921
        %v1004 = vunpack.c.l.b16 %v922
        %v1005 = vunpack.c.h.b16 %v922
        %v1006 = vunpack.c.l.b16 %v923
        %v1007 = vunpack.c.l.b16 %v924
        %v1008 = vunpack.c.h.b16 %v924
        %v1009 = vunpack.c.l.b16 %v925
        %v1010 = vunpack.c.l.b16 %v926
        %v1011 = vunpack.c.h.b16 %v926
        %v1012 = vunpack.c.l.b16 %v927
        %v1013 = vunpack.c.l.b16 %v928
        %v1014 = vunpack.c.h.b16 %v928
        %v1015 = vunpack.c.l.b16 %v929
        %v1016 = vunpack.c.l.b16 %v930
        %v1017 = vunpack.c.h.b16 %v930
        %v1018 = vunpack.c.l.b16 %v931
        %v1019 = vunpack.c.l.b16 %v932
        %v1020 = vunpack.c.h.b16 %v932
        %v1021 = vunpack.c.l.b16 %v933
        %v1022 = vunpack.c.l.b16 %v934
        %v1023 = vunpack.c.h.b16 %v934
        %v1024 = vunpack.c.l.b16 %v935
        %v1025 = vunpack.c.l.b16 %v936
        %v1026 = vunpack.c.h.b16 %v936
        %v1027 = vunpack.c.l.b16 %v937
        %v1028 = vunpack.c.l.b16 %v938
        %v1029 = vunpack.c.h.b16 %v938
        %v1030 = vunpack.c.l.b16 %v939
        %v1031 = vunpack.c.l.b16 %v940
        %v1032 = vunpack.c.h.b16 %v940
        %v1033 = vunpack.c.l.b16 %v941
        %v1034 = vunpack.c.l.b16 %v942
        %v1035 = vunpack.c.h.b16 %v942
        %v1036 = vunpack.c.l.b16 %v943
        %v1037 = vunpack.c.l.b16 %v944
        %v1038 = vunpack.c.h.b16 %v944
        %v1039 = vunpack.c.l.b16 %v945
        %v1040 = vunpack.c.l.b16 %v946
        %v1041 = vunpack.c.h.b16 %v946
        %v1042 = vunpack.c.l.b16 %v947
        %v1043 = vunpack.c.l.b16 %v948
        %v1044 = vunpack.c.h.b16 %v948
        %v1045 = vunpack.c.l.b16 %v949
        %v1046 = vunpack.c.l.b16 %v950
        %v1047 = vunpack.c.h.b16 %v950
        %v1048 = vunpack.c.l.b16 %v951
        %v1049 = vpack.c.b16 %v1004, %v1001
        %v1050 = vpack.c.b16 %v1005, %v1002
        %v1051 = vpack.c.b16 %v1006, %v1003
        %v1052 = vpack.c.b16 %v1010, %v1007
        %v1053 = vpack.c.b16 %v1011, %v1008
        %v1054 = vpack.c.b16 %v1012, %v1009
        %v1055 = vpack.c.b16 %v1016, %v1013
        %v1056 = vpack.c.b16 %v1017, %v1014
        %v1057 = vpack.c.b16 %v1018, %v1015
        %v1058 = vpack.c.b16 %v1022, %v1019
        %v1059 = vpack.c.b16 %v1023, %v1020
        %v1060 = vpack.c.b16 %v1024, %v1021
        %v1061 = vpack.c.b16 %v1028, %v1025
        %v1062 = vpack.c.b16 %v1029, %v1026
        %v1063 = vpack.c.b16 %v1030, %v1027
        %v1064 = vpack.c.b16 %v1034, %v1031
        %v1065 = vpack.c.b16 %v1035, %v1032
        %v1066 = vpack.c.b16 %v1036, %v1033
        %v1067 = vpack.c.b16 %v1040, %v1037
        %v1068 = vpack.c.b16 %v1041, %v1038
        %v1069 = vpack.c.b16 %v1042, %v1039
        %v1070 = vpack.c.b16 %v1046, %v1043
        %v1071 = vpack.c.b16 %v1047, %v1044
        %v1072 = vpack.c.b16 %v1048, %v1045
        %1097 = vmatprep.subr.bf16.mxu0 %v1050
        %1098 = vmatpush1.bf16.msra.mxu0 %v1049
        %1099 = vmatprep.subr.bf16.mxu0 %v1053
        %1100 = vmatpush1.bf16.msra.mxu0 %v1052
        %1101 = vmatprep.subr.bf16.mxu0 %v1056
        %1102 = vmatpush1.bf16.msra.mxu0 %v1055
        %1103 = vmatprep.subr.bf16.mxu0 %v1059
        %1104 = vmatpush1.bf16.msra.mxu0 %v1058
        %1105 = vmatprep.subr.bf16.mxu0 %v1062
        %1106 = vmatpush1.bf16.msra.mxu0 %v1061
        %1107 = vmatprep.subr.bf16.mxu0 %v1065
        %1108 = vmatpush1.bf16.msra.mxu0 %v1064
        %1109 = vmatprep.subr.bf16.mxu0 %v1068
        %1110 = vmatpush1.bf16.msra.mxu0 %v1067
        %1111 = vmatprep.subr.bf16.mxu0 %v1071
        %1112 = vmatpush1.bf16.msra.mxu0 %v1070
        %1113 = vmatprep.subr.bf16.mxu0 0
        %1114 = vmatpush1.bf16.msra.mxu0 0
        %1115 = vmatprep.subr.bf16.mxu0 0
        %1116 = vmatpush1.bf16.msra.mxu0 0
        %1117 = vmatprep.subr.bf16.mxu0 0
        %1118 = vmatpush1.bf16.msra.mxu0 0
        %1119 = vmatprep.subr.bf16.mxu0 0
        %1120 = vmatpush1.bf16.msra.mxu0 0
        %1121 = vmatprep.subr.bf16.mxu0 0
        %1122 = vmatpush1.bf16.msra.mxu0 0
        %1123 = vmatprep.subr.bf16.mxu0 0
        %1124 = vmatpush1.bf16.msra.mxu0 0
        %1125 = vmatprep.subr.bf16.mxu0 0
        %1126 = vmatpush1.bf16.msra.mxu0 0
        %1127 = vmatprep.subr.bf16.mxu0 0
        %1128 = vmatpush1.bf16.msra.mxu0 0
        %1129 = vmatprep.mubr.bf16.mxu0 0
        %1130 = vmatmul.mubr.bf16.gmra.mrb[0].mxu0 %v918
        %v1131 = vpop.f32.mrb[0].mxu0
        %v1132 = vadd.f32 %v957, %v1131
        %v1133 = vpop.f32.mrb[0].mxu0
        %v1134 = vadd.f32 %v961, %v1133
        %v1135 = vpop.f32.mrb[0].mxu0
        %v1136 = vadd.f32 %v957, %v1135
        %v1137 = vpop.f32.mrb[0].mxu0
        %v1138 = vadd.f32 %v961, %v1137
        %1139 = vmatprep.mubr.bf16.mxu0 0
        %1140 = vmatmul.mubr.bf16.gmra.mrb[0].mxu0 %v919
        %v1141 = vpop.f32.mrb[0].mxu0
        %v1142 = vadd.f32 %v957, %v1141
        %v1143 = vpop.f32.mrb[0].mxu0
        %v1144 = vadd.f32 %v961, %v1143
        %v1145 = vpop.f32.mrb[0].mxu0
        %v1146 = vadd.f32 %v957, %v1145
        %v1147 = vpop.f32.mrb[0].mxu0
        %v1148 = vadd.f32 %v961, %v1147
        %1149 = vdwg.mxu0
        %1150 = vmatprep.subr.bf16.mxu0 0
        %1151 = vmatpush1.bf16.msra.mxu0 %v1051
        %1152 = vmatprep.subr.bf16.mxu0 0
        %1153 = vmatpush1.bf16.msra.mxu0 %v1054
        %1154 = vmatprep.subr.bf16.mxu0 0
        %1155 = vmatpush1.bf16.msra.mxu0 %v1057
        %1156 = vmatprep.subr.bf16.mxu0 0
        %1157 = vmatpush1.bf16.msra.mxu0 %v1060
        %1158 = vmatprep.subr.bf16.mxu0 0
        %1159 = vmatpush1.bf16.msra.mxu0 %v1063
        %1160 = vmatprep.subr.bf16.mxu0 0
        %1161 = vmatpush1.bf16.msra.mxu0 %v1066
        %1162 = vmatprep.subr.bf16.mxu0 0
        %1163 = vmatpush1.bf16.msra.mxu0 %v1069
        %1164 = vmatprep.subr.bf16.mxu0 0
        %1165 = vmatpush1.bf16.msra.mxu0 %v1072
        %1166 = vmatprep.subr.bf16.mxu0 0
        %1167 = vmatpush1.bf16.msra.mxu0 0
        %1168 = vmatprep.subr.bf16.mxu0 0
        %1169 = vmatpush1.bf16.msra.mxu0 0
        %1170 = vmatprep.subr.bf16.mxu0 0
        %1171 = vmatpush1.bf16.msra.mxu0 0
        %1172 = vmatprep.subr.bf16.mxu0 0
        %1173 = vmatpush1.bf16.msra.mxu0 0
        %1174 = vmatprep.subr.bf16.mxu0 0
        %1175 = vmatpush1.bf16.msra.mxu0 0
        %1176 = vmatprep.subr.bf16.mxu0 0
        %1177 = vmatpush1.bf16.msra.mxu0 0
        %1178 = vmatprep.subr.bf16.mxu0 0
        %1179 = vmatpush1.bf16.msra.mxu0 0
        %1180 = vmatprep.subr.bf16.mxu0 0
        %1181 = vmatpush1.bf16.msra.mxu0 0
        %1182 = vmatprep.mubr.bf16.mxu0 0
        %1183 = vmatmul.mubr.bf16.gmra.mrb[0].mxu0 %v918
        %v1184 = vpop.f32.mrb[0].mxu0
        %v1185 = vadd.f32 %v965, %v1184
        %v1186 = vpop.f32.mrb[0].mxu0
        %v1187 = vpop.f32.mrb[0].mxu0
        %v1188 = vadd.f32 %v965, %v1187
        %v1189 = vpop.f32.mrb[0].mxu0
        %1190 = vmatprep.mubr.bf16.mxu0 0
        %1191 = vmatmul.mubr.bf16.gmra.mrb[0].mxu0 %v919
        %v1192 = vpop.f32.mrb[0].mxu0
        %v1193 = vadd.f32 %v965, %v1192
        %v1194 = vpop.f32.mrb[0].mxu0
        %v1195 = vpop.f32.mrb[0].mxu0
        %v1196 = vadd.f32 %v965, %v1195
        %v1197 = vpop.f32.mrb[0].mxu0
        %1198 = vdwg.mxu0
        %v1199 = vpack.c.bf16 %v1136, %v1132
        %v1200 = vpack.c.bf16 %v1138, %v1134
        %v1201 = vpack.c.bf16 %v1188, %v1185
        %v1202 = vpack.c.bf16 %v1146, %v1142
        %v1203 = vpack.c.bf16 %v1148, %v1144
        %v1204 = vpack.c.bf16 %v1196, %v1193
        %vm1205 = vcmask 261120
        %v1207 = vsel %vm1205, %v1199, 0
        %v1210 = vsel %vm1205, %v1200, 0
        %1212 = vmatprep.subr.bf16.mxu0 0
        %1213 = vmatpush1.bf16.xpose.msra.mxu0 %v1210
        %1214 = vmatprep.subr.bf16.mxu0 0
        %1215 = vmatpush1.bf16.xpose.msra.mxu0 0
        %1216 = vmatprep.subr.bf16.mxu0 0
        %1217 = vmatpush1.bf16.xpose.msra.mxu0 0
        %1218 = vmatprep.subr.bf16.mxu0 0
        %1219 = vmatpush1.bf16.xpose.msra.mxu0 0
        %1220 = vmatprep.subr.bf16.mxu0 0
        %1221 = vmatpush1.bf16.xpose.msra.mxu0 0
        %1222 = vmatprep.subr.bf16.mxu0 0
        %1223 = vmatpush1.bf16.xpose.msra.mxu0 0
        %1224 = vmatprep.subr.bf16.mxu0 0
        %1225 = vmatpush1.bf16.xpose.msra.mxu0 0
        %1226 = vmatprep.subr.bf16.mxu0 0
        %1227 = vmatpush1.bf16.xpose.msra.mxu0 0
        %1228 = vmatprep.subr.bf16.mxu0 0
        %1229 = vmatpush1.bf16.xpose.msra.mxu0 0
        %1230 = vmatprep.subr.bf16.mxu0 0
        %1231 = vmatpush1.bf16.xpose.msra.mxu0 0
        %1232 = vmatprep.subr.bf16.mxu0 0
        %1233 = vmatpush1.bf16.xpose.msra.mxu0 0
        %1234 = vmatprep.subr.bf16.mxu0 0
        %1235 = vmatpush1.bf16.xpose.msra.mxu0 0
        %1236 = vmatprep.subr.bf16.mxu0 0
        %1237 = vmatpush1.bf16.xpose.msra.mxu0 0
        %1238 = vmatprep.subr.bf16.mxu0 0
        %1239 = vmatpush1.bf16.xpose.msra.mxu0 0
        %1240 = vmatprep.subr.bf16.mxu0 0
        %1241 = vmatpush1.bf16.xpose.msra.mxu0 0
        %1242 = vmatprep.subr.bf16.mxu0 0
        %1243 = vmatpush1.bf16.xpose.msra.mxu0 0
        %1244 = vmatprep.mubr.bf16.mxu0 0
        %1245 = vmatmul.mubr.bf16.gmra.mrb[0].mxu0 %v1207
        %v1246 = vpop.f32.mrb[0].mxu0
        %v1247 = vadd.f32 %v852, %v1246
        %v1248 = vpop.f32.mrb[0].mxu0
        %v1249 = vpop.f32.mrb[0].mxu0
        %v1250 = vadd.f32 %v853, %v1249
        %v1251 = vpop.f32.mrb[0].mxu0
        %1252 = vdwg.mxu0
        %v1254 = vsel %vm1205, %v1202, 0
        %v1257 = vsel %vm1205, %v1203, 0
        %1259 = vmatprep.subr.bf16.mxu0 0
        %1260 = vmatpush1.bf16.xpose.msra.mxu0 %v1257
        %1261 = vmatprep.subr.bf16.mxu0 0
        %1262 = vmatpush1.bf16.xpose.msra.mxu0 0
        %1263 = vmatprep.subr.bf16.mxu0 0
        %1264 = vmatpush1.bf16.xpose.msra.mxu0 0
        %1265 = vmatprep.subr.bf16.mxu0 0
        %1266 = vmatpush1.bf16.xpose.msra.mxu0 0
        %1267 = vmatprep.subr.bf16.mxu0 0
        %1268 = vmatpush1.bf16.xpose.msra.mxu0 0
        %1269 = vmatprep.subr.bf16.mxu0 0
        %1270 = vmatpush1.bf16.xpose.msra.mxu0 0
        %1271 = vmatprep.subr.bf16.mxu0 0
        %1272 = vmatpush1.bf16.xpose.msra.mxu0 0
        %1273 = vmatprep.subr.bf16.mxu0 0
        %1274 = vmatpush1.bf16.xpose.msra.mxu0 0
        %1275 = vmatprep.subr.bf16.mxu0 0
        %1276 = vmatpush1.bf16.xpose.msra.mxu0 0
        %1277 = vmatprep.subr.bf16.mxu0 0
        %1278 = vmatpush1.bf16.xpose.msra.mxu0 0
        %1279 = vmatprep.subr.bf16.mxu0 0
        %1280 = vmatpush1.bf16.xpose.msra.mxu0 0
        %1281 = vmatprep.subr.bf16.mxu0 0
        %1282 = vmatpush1.bf16.xpose.msra.mxu0 0
        %1283 = vmatprep.subr.bf16.mxu0 0
        %1284 = vmatpush1.bf16.xpose.msra.mxu0 0
        %1285 = vmatprep.subr.bf16.mxu0 0
        %1286 = vmatpush1.bf16.xpose.msra.mxu0 0
        %1287 = vmatprep.subr.bf16.mxu0 0
        %1288 = vmatpush1.bf16.xpose.msra.mxu0 0
        %1289 = vmatprep.subr.bf16.mxu0 0
        %1290 = vmatpush1.bf16.xpose.msra.mxu0 0
        %1291 = vmatprep.mubr.bf16.mxu0 0
        %1292 = vmatmul.mubr.bf16.gmra.mrb[0].mxu0 %v1254
        %v1293 = vpop.f32.mrb[0].mxu0
        %v1294 = vadd.f32 %v854, %v1293
        %v1295 = vpop.f32.mrb[0].mxu0
        %v1296 = vpop.f32.mrb[0].mxu0
        %v1297 = vadd.f32 %v855, %v1296
        %v1298 = vpop.f32.mrb[0].mxu0
        %1299 = vdwg.mxu0
        %vm1300 = vcmask 130048
        %v1301 = vsel %vm1300, %v1247, -inf
        %1302 = vmax.xlane.f32.xlu0 %v1301
        %v1303 = vpop.xlane.xlu0 %1302
        %v1304 = vsel %vm1300, %v1250, -inf
        %1305 = vmax.xlane.f32.xlu0 %v1304
        %v1306 = vpop.xlane.xlu0 %1305
        %v1307 = vsel %vm1300, %v1294, -inf
        %1308 = vmax.xlane.f32.xlu0 %v1307
        %v1309 = vpop.xlane.xlu0 %1308
        %v1310 = vsel %vm1300, %v1297, -inf
        %1311 = vmax.xlane.f32.xlu0 %v1310
        %v1312 = vpop.xlane.xlu0 %1311
        %v1313 = vsub.f32 %v1247, %v1303
        %v1314 = vsub.f32 %v1250, %v1306
        %v1315 = vsub.f32 %v1294, %v1309
        %v1316 = vsub.f32 %v1297, %v1312
        %v1317 = vmul.f32 %v1313, 1.442695
        %v1318 = vpow.pop %v1317
        %v1319 = vmul.f32 %v1314, 1.442695
        %v1320 = vpow.pop %v1319
        %v1321 = vmul.f32 %v1315, 1.442695
        %v1322 = vpow.pop %v1321
        %v1323 = vmul.f32 %v1316, 1.442695
        %v1324 = vpow.pop %v1323
        %v1325 = vsel %vm1300, %v1318, 0.0
        %1326 = vadd.xlane.f32.xlu0 %v1325
        %v1327 = vpop.xlane.xlu0 %1326
        %v1328 = vsel %vm1300, %v1320, 0.0
        %1329 = vadd.xlane.f32.xlu0 %v1328
        %v1330 = vpop.xlane.xlu0 %1329
        %v1331 = vsel %vm1300, %v1322, 0.0
        %1332 = vadd.xlane.f32.xlu0 %v1331
        %v1333 = vpop.xlane.xlu0 %1332
        %v1334 = vsel %vm1300, %v1324, 0.0
        %1335 = vadd.xlane.f32.xlu0 %v1334
        %v1336 = vpop.xlane.xlu0 %1335
        %v1337 = vrcp.pop %v1327
        %v1338 = vrcp.pop %v1330
        %v1339 = vrcp.pop %v1333
        %v1340 = vrcp.pop %v1336
        %v1341 = vmul.f32 %v1318, %v1337
        %v1342 = vmul.f32 %v1320, %v1338
        %v1343 = vmul.f32 %v1322, %v1339
        %v1344 = vmul.f32 %v1324, %v1340
        %v1345 = vpack.c.bf16 %v1342, %v1341
        %v1346 = vpack.c.bf16 %v1344, %v1343
        %v1348 = vsel %vm1300, %v1345, 0
        %1350 = vmatprep.subr.bf16.mxu0 0
        %1351 = vmatpush1.bf16.msra.mxu0 %v1201
        %1352 = vmatprep.subr.bf16.mxu0 0
        %1353 = vmatpush1.bf16.msra.mxu0 0
        %1354 = vmatprep.subr.bf16.mxu0 0
        %1355 = vmatpush1.bf16.msra.mxu0 0
        %1356 = vmatprep.subr.bf16.mxu0 0
        %1357 = vmatpush1.bf16.msra.mxu0 0
        %1358 = vmatprep.subr.bf16.mxu0 0
        %1359 = vmatpush1.bf16.msra.mxu0 0
        %1360 = vmatprep.subr.bf16.mxu0 0
        %1361 = vmatpush1.bf16.msra.mxu0 0
        %1362 = vmatprep.subr.bf16.mxu0 0
        %1363 = vmatpush1.bf16.msra.mxu0 0
        %1364 = vmatprep.subr.bf16.mxu0 0
        %1365 = vmatpush1.bf16.msra.mxu0 0
        %1366 = vmatprep.subr.bf16.mxu0 0
        %1367 = vmatpush1.bf16.msra.mxu0 0
        %1368 = vmatprep.subr.bf16.mxu0 0
        %1369 = vmatpush1.bf16.msra.mxu0 0
        %1370 = vmatprep.subr.bf16.mxu0 0
        %1371 = vmatpush1.bf16.msra.mxu0 0
        %1372 = vmatprep.subr.bf16.mxu0 0
        %1373 = vmatpush1.bf16.msra.mxu0 0
        %1374 = vmatprep.subr.bf16.mxu0 0
        %1375 = vmatpush1.bf16.msra.mxu0 0
        %1376 = vmatprep.subr.bf16.mxu0 0
        %1377 = vmatpush1.bf16.msra.mxu0 0
        %1378 = vmatprep.subr.bf16.mxu0 0
        %1379 = vmatpush1.bf16.msra.mxu0 0
        %1380 = vmatprep.subr.bf16.mxu0 0
        %1381 = vmatpush1.bf16.msra.mxu0 0
        %1382 = vmatprep.mubr.bf16.mxu0 0
        %1383 = vmatmul.mubr.bf16.gmra.mrb[0].mxu0 %v1348
        %v1384 = vpop.f32.mrb[0].mxu0
        %v1385 = vadd.f32 0.0, %v1384
        %v1386 = vpop.f32.mrb[0].mxu0
        %v1387 = vpop.f32.mrb[0].mxu0
        %v1388 = vadd.f32 0.0, %v1387
        %v1389 = vpop.f32.mrb[0].mxu0
        %1390 = vdwg.mxu0
        %v1392 = vsel %vm1300, %v1346, 0
        %1394 = vmatprep.subr.bf16.mxu0 0
        %1395 = vmatpush1.bf16.msra.mxu0 %v1204
        %1396 = vmatprep.subr.bf16.mxu0 0
        %1397 = vmatpush1.bf16.msra.mxu0 0
        %1398 = vmatprep.subr.bf16.mxu0 0
        %1399 = vmatpush1.bf16.msra.mxu0 0
        %1400 = vmatprep.subr.bf16.mxu0 0
        %1401 = vmatpush1.bf16.msra.mxu0 0
        %1402 = vmatprep.subr.bf16.mxu0 0
        %1403 = vmatpush1.bf16.msra.mxu0 0
        %1404 = vmatprep.subr.bf16.mxu0 0
        %1405 = vmatpush1.bf16.msra.mxu0 0
        %1406 = vmatprep.subr.bf16.mxu0 0
        %1407 = vmatpush1.bf16.msra.mxu0 0
        %1408 = vmatprep.subr.bf16.mxu0 0
        %1409 = vmatpush1.bf16.msra.mxu0 0
        %1410 = vmatprep.subr.bf16.mxu0 0
        %1411 = vmatpush1.bf16.msra.mxu0 0
        %1412 = vmatprep.subr.bf16.mxu0 0
        %1413 = vmatpush1.bf16.msra.mxu0 0
        %1414 = vmatprep.subr.bf16.mxu0 0
        %1415 = vmatpush1.bf16.msra.mxu0 0
        %1416 = vmatprep.subr.bf16.mxu0 0
        %1417 = vmatpush1.bf16.msra.mxu0 0
        %1418 = vmatprep.subr.bf16.mxu0 0
        %1419 = vmatpush1.bf16.msra.mxu0 0
        %1420 = vmatprep.subr.bf16.mxu0 0
        %1421 = vmatpush1.bf16.msra.mxu0 0
        %1422 = vmatprep.subr.bf16.mxu0 0
        %1423 = vmatpush1.bf16.msra.mxu0 0
        %1424 = vmatprep.subr.bf16.mxu0 0
        %1425 = vmatpush1.bf16.msra.mxu0 0
        %1426 = vmatprep.mubr.bf16.mxu0 0
        %1427 = vmatmul.mubr.bf16.gmra.mrb[0].mxu0 %v1392
        %v1428 = vpop.f32.mrb[0].mxu0
        %v1429 = vadd.f32 0.0, %v1428
        %v1430 = vpop.f32.mrb[0].mxu0
        %v1431 = vpop.f32.mrb[0].mxu0
        %v1432 = vadd.f32 0.0, %v1431
        %v1433 = vpop.f32.mrb[0].mxu0
        %1434 = vdwg.mxu0
        %1436 = vrot.lane.b32.xlu0 %v1199, 96
        %v1437 = vpop.permute.xlu0 %1436
        %1439 = vrot.lane.b32.xlu0 %v1200, 96
        %v1440 = vpop.permute.xlu0 %1439
        %v1442 = vsel %vm1205, %v1437, 0
        %v1445 = vsel %vm1205, %v1440, 0
        %1447 = vmatprep.subr.bf16.mxu0 0
        %1448 = vmatpush1.bf16.xpose.msra.mxu0 %v1445
        %1449 = vmatprep.subr.bf16.mxu0 0
        %1450 = vmatpush1.bf16.xpose.msra.mxu0 0
        %1451 = vmatprep.subr.bf16.mxu0 0
        %1452 = vmatpush1.bf16.xpose.msra.mxu0 0
        %1453 = vmatprep.subr.bf16.mxu0 0
        %1454 = vmatpush1.bf16.xpose.msra.mxu0 0
        %1455 = vmatprep.subr.bf16.mxu0 0
        %1456 = vmatpush1.bf16.xpose.msra.mxu0 0
        %1457 = vmatprep.subr.bf16.mxu0 0
        %1458 = vmatpush1.bf16.xpose.msra.mxu0 0
        %1459 = vmatprep.subr.bf16.mxu0 0
        %1460 = vmatpush1.bf16.xpose.msra.mxu0 0
        %1461 = vmatprep.subr.bf16.mxu0 0
        %1462 = vmatpush1.bf16.xpose.msra.mxu0 0
        %1463 = vmatprep.subr.bf16.mxu0 0
        %1464 = vmatpush1.bf16.xpose.msra.mxu0 0
        %1465 = vmatprep.subr.bf16.mxu0 0
        %1466 = vmatpush1.bf16.xpose.msra.mxu0 0
        %1467 = vmatprep.subr.bf16.mxu0 0
        %1468 = vmatpush1.bf16.xpose.msra.mxu0 0
        %1469 = vmatprep.subr.bf16.mxu0 0
        %1470 = vmatpush1.bf16.xpose.msra.mxu0 0
        %1471 = vmatprep.subr.bf16.mxu0 0
        %1472 = vmatpush1.bf16.xpose.msra.mxu0 0
        %1473 = vmatprep.subr.bf16.mxu0 0
        %1474 = vmatpush1.bf16.xpose.msra.mxu0 0
        %1475 = vmatprep.subr.bf16.mxu0 0
        %1476 = vmatpush1.bf16.xpose.msra.mxu0 0
        %1477 = vmatprep.subr.bf16.mxu0 0
        %1478 = vmatpush1.bf16.xpose.msra.mxu0 0
        %1479 = vmatprep.mubr.bf16.mxu0 0
        %1480 = vmatmul.mubr.bf16.gmra.mrb[0].mxu0 %v1442
        %v1481 = vpop.f32.mrb[0].mxu0
        %v1482 = vadd.f32 %v852, %v1481
        %v1483 = vpop.f32.mrb[0].mxu0
        %v1484 = vpop.f32.mrb[0].mxu0
        %v1485 = vadd.f32 %v853, %v1484
        %v1486 = vpop.f32.mrb[0].mxu0
        %1487 = vdwg.mxu0
        %1489 = vrot.lane.b32.xlu0 %v1202, 96
        %v1490 = vpop.permute.xlu0 %1489
        %1492 = vrot.lane.b32.xlu0 %v1203, 96
        %v1493 = vpop.permute.xlu0 %1492
        %v1495 = vsel %vm1205, %v1490, 0
        %v1498 = vsel %vm1205, %v1493, 0
        %1500 = vmatprep.subr.bf16.mxu0 0
        %1501 = vmatpush1.bf16.xpose.msra.mxu0 %v1498
        %1502 = vmatprep.subr.bf16.mxu0 0
        %1503 = vmatpush1.bf16.xpose.msra.mxu0 0
        %1504 = vmatprep.subr.bf16.mxu0 0
        %1505 = vmatpush1.bf16.xpose.msra.mxu0 0
        %1506 = vmatprep.subr.bf16.mxu0 0
        %1507 = vmatpush1.bf16.xpose.msra.mxu0 0
        %1508 = vmatprep.subr.bf16.mxu0 0
        %1509 = vmatpush1.bf16.xpose.msra.mxu0 0
        %1510 = vmatprep.subr.bf16.mxu0 0
        %1511 = vmatpush1.bf16.xpose.msra.mxu0 0
        %1512 = vmatprep.subr.bf16.mxu0 0
        %1513 = vmatpush1.bf16.xpose.msra.mxu0 0
        %1514 = vmatprep.subr.bf16.mxu0 0
        %1515 = vmatpush1.bf16.xpose.msra.mxu0 0
        %1516 = vmatprep.subr.bf16.mxu0 0
        %1517 = vmatpush1.bf16.xpose.msra.mxu0 0
        %1518 = vmatprep.subr.bf16.mxu0 0
        %1519 = vmatpush1.bf16.xpose.msra.mxu0 0
        %1520 = vmatprep.subr.bf16.mxu0 0
        %1521 = vmatpush1.bf16.xpose.msra.mxu0 0
        %1522 = vmatprep.subr.bf16.mxu0 0
        %1523 = vmatpush1.bf16.xpose.msra.mxu0 0
        %1524 = vmatprep.subr.bf16.mxu0 0
        %1525 = vmatpush1.bf16.xpose.msra.mxu0 0
        %1526 = vmatprep.subr.bf16.mxu0 0
        %1527 = vmatpush1.bf16.xpose.msra.mxu0 0
        %1528 = vmatprep.subr.bf16.mxu0 0
        %1529 = vmatpush1.bf16.xpose.msra.mxu0 0
        %1530 = vmatprep.subr.bf16.mxu0 0
        %1531 = vmatpush1.bf16.xpose.msra.mxu0 0
        %1532 = vmatprep.mubr.bf16.mxu0 0
        %1533 = vmatmul.mubr.bf16.gmra.mrb[0].mxu0 %v1495
        %v1534 = vpop.f32.mrb[0].mxu0
        %v1535 = vadd.f32 %v854, %v1534
        %v1536 = vpop.f32.mrb[0].mxu0
        %v1537 = vpop.f32.mrb[0].mxu0
        %v1538 = vadd.f32 %v855, %v1537
        %v1539 = vpop.f32.mrb[0].mxu0
        %1540 = vdwg.mxu0
        %v1541 = vsel %vm1300, %v1482, -inf
        %1542 = vmax.xlane.f32.xlu0 %v1541
        %v1543 = vpop.xlane.xlu0 %1542
        %v1544 = vsel %vm1300, %v1485, -inf
        %1545 = vmax.xlane.f32.xlu0 %v1544
        %v1546 = vpop.xlane.xlu0 %1545
        %v1547 = vsel %vm1300, %v1535, -inf
        %1548 = vmax.xlane.f32.xlu0 %v1547
        %v1549 = vpop.xlane.xlu0 %1548
        %v1550 = vsel %vm1300, %v1538, -inf
        %1551 = vmax.xlane.f32.xlu0 %v1550
        %v1552 = vpop.xlane.xlu0 %1551
        %v1553 = vsub.f32 %v1482, %v1543
        %v1554 = vsub.f32 %v1485, %v1546
        %v1555 = vsub.f32 %v1535, %v1549
        %v1556 = vsub.f32 %v1538, %v1552
        %v1557 = vmul.f32 %v1553, 1.442695
        %v1558 = vpow.pop %v1557
        %v1559 = vmul.f32 %v1554, 1.442695
        %v1560 = vpow.pop %v1559
        %v1561 = vmul.f32 %v1555, 1.442695
        %v1562 = vpow.pop %v1561
        %v1563 = vmul.f32 %v1556, 1.442695
        %v1564 = vpow.pop %v1563
        %v1565 = vsel %vm1300, %v1558, 0.0
        %1566 = vadd.xlane.f32.xlu0 %v1565
        %v1567 = vpop.xlane.xlu0 %1566
        %v1568 = vsel %vm1300, %v1560, 0.0
        %1569 = vadd.xlane.f32.xlu0 %v1568
        %v1570 = vpop.xlane.xlu0 %1569
        %v1571 = vsel %vm1300, %v1562, 0.0
        %1572 = vadd.xlane.f32.xlu0 %v1571
        %v1573 = vpop.xlane.xlu0 %1572
        %v1574 = vsel %vm1300, %v1564, 0.0
        %1575 = vadd.xlane.f32.xlu0 %v1574
        %v1576 = vpop.xlane.xlu0 %1575
        %v1577 = vrcp.pop %v1567
        %v1578 = vrcp.pop %v1570
        %v1579 = vrcp.pop %v1573
        %v1580 = vrcp.pop %v1576
        %v1581 = vmul.f32 %v1558, %v1577
        %v1582 = vmul.f32 %v1560, %v1578
        %v1583 = vmul.f32 %v1562, %v1579
        %v1584 = vmul.f32 %v1564, %v1580
        %v1585 = vpack.c.bf16 %v1582, %v1581
        %v1586 = vpack.c.bf16 %v1584, %v1583
        %1588 = vrot.lane.b32.xlu0 %v1201, 96
        %v1589 = vpop.permute.xlu0 %1588
        %v1592 = vsel %vm1300, %v1585, 0
        %1594 = vmatprep.subr.bf16.mxu0 0
        %1595 = vmatpush1.bf16.msra.mxu0 %v1589
        %1596 = vmatprep.subr.bf16.mxu0 0
        %1597 = vmatpush1.bf16.msra.mxu0 0
        %1598 = vmatprep.subr.bf16.mxu0 0
        %1599 = vmatpush1.bf16.msra.mxu0 0
        %1600 = vmatprep.subr.bf16.mxu0 0
        %1601 = vmatpush1.bf16.msra.mxu0 0
        %1602 = vmatprep.subr.bf16.mxu0 0
        %1603 = vmatpush1.bf16.msra.mxu0 0
        %1604 = vmatprep.subr.bf16.mxu0 0
        %1605 = vmatpush1.bf16.msra.mxu0 0
        %1606 = vmatprep.subr.bf16.mxu0 0
        %1607 = vmatpush1.bf16.msra.mxu0 0
        %1608 = vmatprep.subr.bf16.mxu0 0
        %1609 = vmatpush1.bf16.msra.mxu0 0
        %1610 = vmatprep.subr.bf16.mxu0 0
        %1611 = vmatpush1.bf16.msra.mxu0 0
        %1612 = vmatprep.subr.bf16.mxu0 0
        %1613 = vmatpush1.bf16.msra.mxu0 0
        %1614 = vmatprep.subr.bf16.mxu0 0
        %1615 = vmatpush1.bf16.msra.mxu0 0
        %1616 = vmatprep.subr.bf16.mxu0 0
        %1617 = vmatpush1.bf16.msra.mxu0 0
        %1618 = vmatprep.subr.bf16.mxu0 0
        %1619 = vmatpush1.bf16.msra.mxu0 0
        %1620 = vmatprep.subr.bf16.mxu0 0
        %1621 = vmatpush1.bf16.msra.mxu0 0
        %1622 = vmatprep.subr.bf16.mxu0 0
        %1623 = vmatpush1.bf16.msra.mxu0 0
        %1624 = vmatprep.subr.bf16.mxu0 0
        %1625 = vmatpush1.bf16.msra.mxu0 0
        %1626 = vmatprep.mubr.bf16.mxu0 0
        %1627 = vmatmul.mubr.bf16.gmra.mrb[0].mxu0 %v1592
        %v1628 = vpop.f32.mrb[0].mxu0
        %v1629 = vadd.f32 0.0, %v1628
        %v1630 = vpop.f32.mrb[0].mxu0
        %v1631 = vpop.f32.mrb[0].mxu0
        %v1632 = vadd.f32 0.0, %v1631
        %v1633 = vpop.f32.mrb[0].mxu0
        %1634 = vdwg.mxu0
        %1636 = vrot.lane.b32.xlu0 %v1204, 96
        %v1637 = vpop.permute.xlu0 %1636
        %v1640 = vsel %vm1300, %v1586, 0
        %1642 = vmatprep.subr.bf16.mxu0 0
        %1643 = vmatpush1.bf16.msra.mxu0 %v1637
        %1644 = vmatprep.subr.bf16.mxu0 0
        %1645 = vmatpush1.bf16.msra.mxu0 0
        %1646 = vmatprep.subr.bf16.mxu0 0
        %1647 = vmatpush1.bf16.msra.mxu0 0
        %1648 = vmatprep.subr.bf16.mxu0 0
        %1649 = vmatpush1.bf16.msra.mxu0 0
        %1650 = vmatprep.subr.bf16.mxu0 0
        %1651 = vmatpush1.bf16.msra.mxu0 0
        %1652 = vmatprep.subr.bf16.mxu0 0
        %1653 = vmatpush1.bf16.msra.mxu0 0
        %1654 = vmatprep.subr.bf16.mxu0 0
        %1655 = vmatpush1.bf16.msra.mxu0 0
        %1656 = vmatprep.subr.bf16.mxu0 0
        %1657 = vmatpush1.bf16.msra.mxu0 0
        %1658 = vmatprep.subr.bf16.mxu0 0
        %1659 = vmatpush1.bf16.msra.mxu0 0
        %1660 = vmatprep.subr.bf16.mxu0 0
        %1661 = vmatpush1.bf16.msra.mxu0 0
        %1662 = vmatprep.subr.bf16.mxu0 0
        %1663 = vmatpush1.bf16.msra.mxu0 0
        %1664 = vmatprep.subr.bf16.mxu0 0
        %1665 = vmatpush1.bf16.msra.mxu0 0
        %1666 = vmatprep.subr.bf16.mxu0 0
        %1667 = vmatpush1.bf16.msra.mxu0 0
        %1668 = vmatprep.subr.bf16.mxu0 0
        %1669 = vmatpush1.bf16.msra.mxu0 0
        %1670 = vmatprep.subr.bf16.mxu0 0
        %1671 = vmatpush1.bf16.msra.mxu0 0
        %1672 = vmatprep.subr.bf16.mxu0 0
        %1673 = vmatpush1.bf16.msra.mxu0 0
        %1674 = vmatprep.mubr.bf16.mxu0 0
        %1675 = vmatmul.mubr.bf16.gmra.mrb[0].mxu0 %v1640
        %v1676 = vpop.f32.mrb[0].mxu0
        %v1677 = vadd.f32 0.0, %v1676
        %v1678 = vpop.f32.mrb[0].mxu0
        %v1679 = vpop.f32.mrb[0].mxu0
        %v1680 = vadd.f32 0.0, %v1679
        %v1681 = vpop.f32.mrb[0].mxu0
        %1682 = vdwg.mxu0
        %1683 = vrot.lane.b32.xlu0 %v1199, 64
        %v1684 = vpop.permute.xlu0 %1683
        %1685 = vrot.lane.b32.xlu0 %v1200, 64
        %v1686 = vpop.permute.xlu0 %1685
        %v1688 = vsel %vm1205, %v1684, 0
        %v1691 = vsel %vm1205, %v1686, 0
        %1693 = vmatprep.subr.bf16.mxu0 0
        %1694 = vmatpush1.bf16.xpose.msra.mxu0 %v1691
        %1695 = vmatprep.subr.bf16.mxu0 0
        %1696 = vmatpush1.bf16.xpose.msra.mxu0 0
        %1697 = vmatprep.subr.bf16.mxu0 0
        %1698 = vmatpush1.bf16.xpose.msra.mxu0 0
        %1699 = vmatprep.subr.bf16.mxu0 0
        %1700 = vmatpush1.bf16.xpose.msra.mxu0 0
        %1701 = vmatprep.subr.bf16.mxu0 0
        %1702 = vmatpush1.bf16.xpose.msra.mxu0 0
        %1703 = vmatprep.subr.bf16.mxu0 0
        %1704 = vmatpush1.bf16.xpose.msra.mxu0 0
        %1705 = vmatprep.subr.bf16.mxu0 0
        %1706 = vmatpush1.bf16.xpose.msra.mxu0 0
        %1707 = vmatprep.subr.bf16.mxu0 0
        %1708 = vmatpush1.bf16.xpose.msra.mxu0 0
        %1709 = vmatprep.subr.bf16.mxu0 0
        %1710 = vmatpush1.bf16.xpose.msra.mxu0 0
        %1711 = vmatprep.subr.bf16.mxu0 0
        %1712 = vmatpush1.bf16.xpose.msra.mxu0 0
        %1713 = vmatprep.subr.bf16.mxu0 0
        %1714 = vmatpush1.bf16.xpose.msra.mxu0 0
        %1715 = vmatprep.subr.bf16.mxu0 0
        %1716 = vmatpush1.bf16.xpose.msra.mxu0 0
        %1717 = vmatprep.subr.bf16.mxu0 0
        %1718 = vmatpush1.bf16.xpose.msra.mxu0 0
        %1719 = vmatprep.subr.bf16.mxu0 0
        %1720 = vmatpush1.bf16.xpose.msra.mxu0 0
        %1721 = vmatprep.subr.bf16.mxu0 0
        %1722 = vmatpush1.bf16.xpose.msra.mxu0 0
        %1723 = vmatprep.subr.bf16.mxu0 0
        %1724 = vmatpush1.bf16.xpose.msra.mxu0 0
        %1725 = vmatprep.mubr.bf16.mxu0 0
        %1726 = vmatmul.mubr.bf16.gmra.mrb[0].mxu0 %v1688
        %v1727 = vpop.f32.mrb[0].mxu0
        %v1728 = vadd.f32 %v852, %v1727
        %v1729 = vpop.f32.mrb[0].mxu0
        %v1730 = vpop.f32.mrb[0].mxu0
        %v1731 = vadd.f32 %v853, %v1730
        %v1732 = vpop.f32.mrb[0].mxu0
        %1733 = vdwg.mxu0
        %1734 = vrot.lane.b32.xlu0 %v1202, 64
        %v1735 = vpop.permute.xlu0 %1734
        %1736 = vrot.lane.b32.xlu0 %v1203, 64
        %v1737 = vpop.permute.xlu0 %1736
        %v1739 = vsel %vm1205, %v1735, 0
        %v1742 = vsel %vm1205, %v1737, 0
        %1744 = vmatprep.subr.bf16.mxu0 0
        %1745 = vmatpush1.bf16.xpose.msra.mxu0 %v1742
        %1746 = vmatprep.subr.bf16.mxu0 0
        %1747 = vmatpush1.bf16.xpose.msra.mxu0 0
        %1748 = vmatprep.subr.bf16.mxu0 0
        %1749 = vmatpush1.bf16.xpose.msra.mxu0 0
        %1750 = vmatprep.subr.bf16.mxu0 0
        %1751 = vmatpush1.bf16.xpose.msra.mxu0 0
        %1752 = vmatprep.subr.bf16.mxu0 0
        %1753 = vmatpush1.bf16.xpose.msra.mxu0 0
        %1754 = vmatprep.subr.bf16.mxu0 0
        %1755 = vmatpush1.bf16.xpose.msra.mxu0 0
        %1756 = vmatprep.subr.bf16.mxu0 0
        %1757 = vmatpush1.bf16.xpose.msra.mxu0 0
        %1758 = vmatprep.subr.bf16.mxu0 0
        %1759 = vmatpush1.bf16.xpose.msra.mxu0 0
        %1760 = vmatprep.subr.bf16.mxu0 0
        %1761 = vmatpush1.bf16.xpose.msra.mxu0 0
        %1762 = vmatprep.subr.bf16.mxu0 0
        %1763 = vmatpush1.bf16.xpose.msra.mxu0 0
        %1764 = vmatprep.subr.bf16.mxu0 0
        %1765 = vmatpush1.bf16.xpose.msra.mxu0 0
        %1766 = vmatprep.subr.bf16.mxu0 0
        %1767 = vmatpush1.bf16.xpose.msra.mxu0 0
        %1768 = vmatprep.subr.bf16.mxu0 0
        %1769 = vmatpush1.bf16.xpose.msra.mxu0 0
        %1770 = vmatprep.subr.bf16.mxu0 0
        %1771 = vmatpush1.bf16.xpose.msra.mxu0 0
        %1772 = vmatprep.subr.bf16.mxu0 0
        %1773 = vmatpush1.bf16.xpose.msra.mxu0 0
        %1774 = vmatprep.subr.bf16.mxu0 0
        %1775 = vmatpush1.bf16.xpose.msra.mxu0 0
        %1776 = vmatprep.mubr.bf16.mxu0 0
        %1777 = vmatmul.mubr.bf16.gmra.mrb[0].mxu0 %v1739
        %v1778 = vpop.f32.mrb[0].mxu0
        %v1779 = vadd.f32 %v854, %v1778
        %v1780 = vpop.f32.mrb[0].mxu0
        %v1781 = vpop.f32.mrb[0].mxu0
        %v1782 = vadd.f32 %v855, %v1781
        %v1783 = vpop.f32.mrb[0].mxu0
        %1784 = vdwg.mxu0
        %v1785 = vsel %vm1300, %v1728, -inf
        %1786 = vmax.xlane.f32.xlu0 %v1785
        %v1787 = vpop.xlane.xlu0 %1786
        %v1788 = vsel %vm1300, %v1731, -inf
        %1789 = vmax.xlane.f32.xlu0 %v1788
        %v1790 = vpop.xlane.xlu0 %1789
        %v1791 = vsel %vm1300, %v1779, -inf
        %1792 = vmax.xlane.f32.xlu0 %v1791
        %v1793 = vpop.xlane.xlu0 %1792
        %v1794 = vsel %vm1300, %v1782, -inf
        %1795 = vmax.xlane.f32.xlu0 %v1794
        %v1796 = vpop.xlane.xlu0 %1795
        %v1797 = vsub.f32 %v1728, %v1787
        %v1798 = vsub.f32 %v1731, %v1790
        %v1799 = vsub.f32 %v1779, %v1793
        %v1800 = vsub.f32 %v1782, %v1796
        %v1801 = vmul.f32 %v1797, 1.442695
        %v1802 = vpow.pop %v1801
        %v1803 = vmul.f32 %v1798, 1.442695
        %v1804 = vpow.pop %v1803
        %v1805 = vmul.f32 %v1799, 1.442695
        %v1806 = vpow.pop %v1805
        %v1807 = vmul.f32 %v1800, 1.442695
        %v1808 = vpow.pop %v1807
        %v1809 = vsel %vm1300, %v1802, 0.0
        %1810 = vadd.xlane.f32.xlu0 %v1809
        %v1811 = vpop.xlane.xlu0 %1810
        %v1812 = vsel %vm1300, %v1804, 0.0
        %1813 = vadd.xlane.f32.xlu0 %v1812
        %v1814 = vpop.xlane.xlu0 %1813
        %v1815 = vsel %vm1300, %v1806, 0.0
        %1816 = vadd.xlane.f32.xlu0 %v1815
        %v1817 = vpop.xlane.xlu0 %1816
        %v1818 = vsel %vm1300, %v1808, 0.0
        %1819 = vadd.xlane.f32.xlu0 %v1818
        %v1820 = vpop.xlane.xlu0 %1819
        %v1821 = vrcp.pop %v1811
        %v1822 = vrcp.pop %v1814
        %v1823 = vrcp.pop %v1817
        %v1824 = vrcp.pop %v1820
        %v1825 = vmul.f32 %v1802, %v1821
        %v1826 = vmul.f32 %v1804, %v1822
        %v1827 = vmul.f32 %v1806, %v1823
        %v1828 = vmul.f32 %v1808, %v1824
        %v1829 = vpack.c.bf16 %v1826, %v1825
        %v1830 = vpack.c.bf16 %v1828, %v1827
        %1831 = vrot.lane.b32.xlu0 %v1201, 64
        %v1832 = vpop.permute.xlu0 %1831
        %v1835 = vsel %vm1300, %v1829, 0
        %1837 = vmatprep.subr.bf16.mxu0 0
        %1838 = vmatpush1.bf16.msra.mxu0 %v1832
        %1839 = vmatprep.subr.bf16.mxu0 0
        %1840 = vmatpush1.bf16.msra.mxu0 0
        %1841 = vmatprep.subr.bf16.mxu0 0
        %1842 = vmatpush1.bf16.msra.mxu0 0
        %1843 = vmatprep.subr.bf16.mxu0 0
        %1844 = vmatpush1.bf16.msra.mxu0 0
        %1845 = vmatprep.subr.bf16.mxu0 0
        %1846 = vmatpush1.bf16.msra.mxu0 0
        %1847 = vmatprep.subr.bf16.mxu0 0
        %1848 = vmatpush1.bf16.msra.mxu0 0
        %1849 = vmatprep.subr.bf16.mxu0 0
        %1850 = vmatpush1.bf16.msra.mxu0 0
        %1851 = vmatprep.subr.bf16.mxu0 0
        %1852 = vmatpush1.bf16.msra.mxu0 0
        %1853 = vmatprep.subr.bf16.mxu0 0
        %1854 = vmatpush1.bf16.msra.mxu0 0
        %1855 = vmatprep.subr.bf16.mxu0 0
        %1856 = vmatpush1.bf16.msra.mxu0 0
        %1857 = vmatprep.subr.bf16.mxu0 0
        %1858 = vmatpush1.bf16.msra.mxu0 0
        %1859 = vmatprep.subr.bf16.mxu0 0
        %1860 = vmatpush1.bf16.msra.mxu0 0
        %1861 = vmatprep.subr.bf16.mxu0 0
        %1862 = vmatpush1.bf16.msra.mxu0 0
        %1863 = vmatprep.subr.bf16.mxu0 0
        %1864 = vmatpush1.bf16.msra.mxu0 0
        %1865 = vmatprep.subr.bf16.mxu0 0
        %1866 = vmatpush1.bf16.msra.mxu0 0
        %1867 = vmatprep.subr.bf16.mxu0 0
        %1868 = vmatpush1.bf16.msra.mxu0 0
        %1869 = vmatprep.mubr.bf16.mxu0 0
        %1870 = vmatmul.mubr.bf16.gmra.mrb[0].mxu0 %v1835
        %v1871 = vpop.f32.mrb[0].mxu0
        %v1872 = vadd.f32 0.0, %v1871
        %v1873 = vpop.f32.mrb[0].mxu0
        %v1874 = vpop.f32.mrb[0].mxu0
        %v1875 = vadd.f32 0.0, %v1874
        %v1876 = vpop.f32.mrb[0].mxu0
        %1877 = vdwg.mxu0
        %1878 = vrot.lane.b32.xlu0 %v1204, 64
        %v1879 = vpop.permute.xlu0 %1878
        %v1882 = vsel %vm1300, %v1830, 0
        %1884 = vmatprep.subr.bf16.mxu0 0
        %1885 = vmatpush1.bf16.msra.mxu0 %v1879
        %1886 = vmatprep.subr.bf16.mxu0 0
        %1887 = vmatpush1.bf16.msra.mxu0 0
        %1888 = vmatprep.subr.bf16.mxu0 0
        %1889 = vmatpush1.bf16.msra.mxu0 0
        %1890 = vmatprep.subr.bf16.mxu0 0
        %1891 = vmatpush1.bf16.msra.mxu0 0
        %1892 = vmatprep.subr.bf16.mxu0 0
        %1893 = vmatpush1.bf16.msra.mxu0 0
        %1894 = vmatprep.subr.bf16.mxu0 0
        %1895 = vmatpush1.bf16.msra.mxu0 0
        %1896 = vmatprep.subr.bf16.mxu0 0
        %1897 = vmatpush1.bf16.msra.mxu0 0
        %1898 = vmatprep.subr.bf16.mxu0 0
        %1899 = vmatpush1.bf16.msra.mxu0 0
        %1900 = vmatprep.subr.bf16.mxu0 0
        %1901 = vmatpush1.bf16.msra.mxu0 0
        %1902 = vmatprep.subr.bf16.mxu0 0
        %1903 = vmatpush1.bf16.msra.mxu0 0
        %1904 = vmatprep.subr.bf16.mxu0 0
        %1905 = vmatpush1.bf16.msra.mxu0 0
        %1906 = vmatprep.subr.bf16.mxu0 0
        %1907 = vmatpush1.bf16.msra.mxu0 0
        %1908 = vmatprep.subr.bf16.mxu0 0
        %1909 = vmatpush1.bf16.msra.mxu0 0
        %1910 = vmatprep.subr.bf16.mxu0 0
        %1911 = vmatpush1.bf16.msra.mxu0 0
        %1912 = vmatprep.subr.bf16.mxu0 0
        %1913 = vmatpush1.bf16.msra.mxu0 0
        %1914 = vmatprep.subr.bf16.mxu0 0
        %1915 = vmatpush1.bf16.msra.mxu0 0
        %1916 = vmatprep.mubr.bf16.mxu0 0
        %1917 = vmatmul.mubr.bf16.gmra.mrb[0].mxu0 %v1882
        %v1918 = vpop.f32.mrb[0].mxu0
        %v1919 = vadd.f32 0.0, %v1918
        %v1920 = vpop.f32.mrb[0].mxu0
        %v1921 = vpop.f32.mrb[0].mxu0
        %v1922 = vadd.f32 0.0, %v1921
        %v1923 = vpop.f32.mrb[0].mxu0
        %1924 = vdwg.mxu0
        %1925 = vrot.lane.b32.xlu0 %v1199, 32
        %v1926 = vpop.permute.xlu0 %1925
        %1927 = vrot.lane.b32.xlu0 %v1200, 32
        %v1928 = vpop.permute.xlu0 %1927
        %v1930 = vsel %vm1205, %v1926, 0
        %v1933 = vsel %vm1205, %v1928, 0
        %1935 = vmatprep.subr.bf16.mxu0 0
        %1936 = vmatpush1.bf16.xpose.msra.mxu0 %v1933
        %1937 = vmatprep.subr.bf16.mxu0 0
        %1938 = vmatpush1.bf16.xpose.msra.mxu0 0
        %1939 = vmatprep.subr.bf16.mxu0 0
        %1940 = vmatpush1.bf16.xpose.msra.mxu0 0
        %1941 = vmatprep.subr.bf16.mxu0 0
        %1942 = vmatpush1.bf16.xpose.msra.mxu0 0
        %1943 = vmatprep.subr.bf16.mxu0 0
        %1944 = vmatpush1.bf16.xpose.msra.mxu0 0
        %1945 = vmatprep.subr.bf16.mxu0 0
        %1946 = vmatpush1.bf16.xpose.msra.mxu0 0
        %1947 = vmatprep.subr.bf16.mxu0 0
        %1948 = vmatpush1.bf16.xpose.msra.mxu0 0
        %1949 = vmatprep.subr.bf16.mxu0 0
        %1950 = vmatpush1.bf16.xpose.msra.mxu0 0
        %1951 = vmatprep.subr.bf16.mxu0 0
        %1952 = vmatpush1.bf16.xpose.msra.mxu0 0
        %1953 = vmatprep.subr.bf16.mxu0 0
        %1954 = vmatpush1.bf16.xpose.msra.mxu0 0
        %1955 = vmatprep.subr.bf16.mxu0 0
        %1956 = vmatpush1.bf16.xpose.msra.mxu0 0
        %1957 = vmatprep.subr.bf16.mxu0 0
        %1958 = vmatpush1.bf16.xpose.msra.mxu0 0
        %1959 = vmatprep.subr.bf16.mxu0 0
        %1960 = vmatpush1.bf16.xpose.msra.mxu0 0
        %1961 = vmatprep.subr.bf16.mxu0 0
        %1962 = vmatpush1.bf16.xpose.msra.mxu0 0
        %1963 = vmatprep.subr.bf16.mxu0 0
        %1964 = vmatpush1.bf16.xpose.msra.mxu0 0
        %1965 = vmatprep.subr.bf16.mxu0 0
        %1966 = vmatpush1.bf16.xpose.msra.mxu0 0
        %1967 = vmatprep.mubr.bf16.mxu0 0
        %1968 = vmatmul.mubr.bf16.gmra.mrb[0].mxu0 %v1930
        %v1969 = vpop.f32.mrb[0].mxu0
        %v1970 = vadd.f32 %v852, %v1969
        %v1971 = vpop.f32.mrb[0].mxu0
        %v1972 = vpop.f32.mrb[0].mxu0
        %v1973 = vadd.f32 %v853, %v1972
        %v1974 = vpop.f32.mrb[0].mxu0
        %1975 = vdwg.mxu0
        %1976 = vrot.lane.b32.xlu0 %v1202, 32
        %v1977 = vpop.permute.xlu0 %1976
        %1978 = vrot.lane.b32.xlu0 %v1203, 32
        %v1979 = vpop.permute.xlu0 %1978
        %v1981 = vsel %vm1205, %v1977, 0
        %v1984 = vsel %vm1205, %v1979, 0
        %1986 = vmatprep.subr.bf16.mxu0 0
        %1987 = vmatpush1.bf16.xpose.msra.mxu0 %v1984
        %1988 = vmatprep.subr.bf16.mxu0 0
        %1989 = vmatpush1.bf16.xpose.msra.mxu0 0
        %1990 = vmatprep.subr.bf16.mxu0 0
        %1991 = vmatpush1.bf16.xpose.msra.mxu0 0
        %1992 = vmatprep.subr.bf16.mxu0 0
        %1993 = vmatpush1.bf16.xpose.msra.mxu0 0
        %1994 = vmatprep.subr.bf16.mxu0 0
        %1995 = vmatpush1.bf16.xpose.msra.mxu0 0
        %1996 = vmatprep.subr.bf16.mxu0 0
        %1997 = vmatpush1.bf16.xpose.msra.mxu0 0
        %1998 = vmatprep.subr.bf16.mxu0 0
        %1999 = vmatpush1.bf16.xpose.msra.mxu0 0
        %2000 = vmatprep.subr.bf16.mxu0 0
        %2001 = vmatpush1.bf16.xpose.msra.mxu0 0
        %2002 = vmatprep.subr.bf16.mxu0 0
        %2003 = vmatpush1.bf16.xpose.msra.mxu0 0
        %2004 = vmatprep.subr.bf16.mxu0 0
        %2005 = vmatpush1.bf16.xpose.msra.mxu0 0
        %2006 = vmatprep.subr.bf16.mxu0 0
        %2007 = vmatpush1.bf16.xpose.msra.mxu0 0
        %2008 = vmatprep.subr.bf16.mxu0 0
        %2009 = vmatpush1.bf16.xpose.msra.mxu0 0
        %2010 = vmatprep.subr.bf16.mxu0 0
        %2011 = vmatpush1.bf16.xpose.msra.mxu0 0
        %2012 = vmatprep.subr.bf16.mxu0 0
        %2013 = vmatpush1.bf16.xpose.msra.mxu0 0
        %2014 = vmatprep.subr.bf16.mxu0 0
        %2015 = vmatpush1.bf16.xpose.msra.mxu0 0
        %2016 = vmatprep.subr.bf16.mxu0 0
        %2017 = vmatpush1.bf16.xpose.msra.mxu0 0
        %2018 = vmatprep.mubr.bf16.mxu0 0
        %2019 = vmatmul.mubr.bf16.gmra.mrb[0].mxu0 %v1981
        %v2020 = vpop.f32.mrb[0].mxu0
        %v2021 = vadd.f32 %v854, %v2020
        %v2022 = vpop.f32.mrb[0].mxu0
        %v2023 = vpop.f32.mrb[0].mxu0
        %v2024 = vadd.f32 %v855, %v2023
        %v2025 = vpop.f32.mrb[0].mxu0
        %2026 = vdwg.mxu0
        %v2027 = vsel %vm1300, %v1970, -inf
        %2028 = vmax.xlane.f32.xlu0 %v2027
        %v2029 = vpop.xlane.xlu0 %2028
        %v2030 = vsel %vm1300, %v1973, -inf
        %2031 = vmax.xlane.f32.xlu0 %v2030
        %v2032 = vpop.xlane.xlu0 %2031
        %v2033 = vsel %vm1300, %v2021, -inf
        %2034 = vmax.xlane.f32.xlu0 %v2033
        %v2035 = vpop.xlane.xlu0 %2034
        %v2036 = vsel %vm1300, %v2024, -inf
        %2037 = vmax.xlane.f32.xlu0 %v2036
        %v2038 = vpop.xlane.xlu0 %2037
        %v2039 = vsub.f32 %v1970, %v2029
        %v2040 = vsub.f32 %v1973, %v2032
        %v2041 = vsub.f32 %v2021, %v2035
        %v2042 = vsub.f32 %v2024, %v2038
        %v2043 = vmul.f32 %v2039, 1.442695
        %v2044 = vpow.pop %v2043
        %v2045 = vmul.f32 %v2040, 1.442695
        %v2046 = vpow.pop %v2045
        %v2047 = vmul.f32 %v2041, 1.442695
        %v2048 = vpow.pop %v2047
        %v2049 = vmul.f32 %v2042, 1.442695
        %v2050 = vpow.pop %v2049
        %v2051 = vsel %vm1300, %v2044, 0.0
        %2052 = vadd.xlane.f32.xlu0 %v2051
        %v2053 = vpop.xlane.xlu0 %2052
        %v2054 = vsel %vm1300, %v2046, 0.0
        %2055 = vadd.xlane.f32.xlu0 %v2054
        %v2056 = vpop.xlane.xlu0 %2055
        %v2057 = vsel %vm1300, %v2048, 0.0
        %2058 = vadd.xlane.f32.xlu0 %v2057
        %v2059 = vpop.xlane.xlu0 %2058
        %v2060 = vsel %vm1300, %v2050, 0.0
        %2061 = vadd.xlane.f32.xlu0 %v2060
        %v2062 = vpop.xlane.xlu0 %2061
        %v2063 = vrcp.pop %v2053
        %v2064 = vrcp.pop %v2056
        %v2065 = vrcp.pop %v2059
        %v2066 = vrcp.pop %v2062
        %v2067 = vmul.f32 %v2044, %v2063
        %v2068 = vmul.f32 %v2046, %v2064
        %v2069 = vmul.f32 %v2048, %v2065
        %v2070 = vmul.f32 %v2050, %v2066
        %v2071 = vpack.c.bf16 %v2068, %v2067
        %v2072 = vpack.c.bf16 %v2070, %v2069
        %2073 = vrot.lane.b32.xlu0 %v1201, 32
        %v2074 = vpop.permute.xlu0 %2073
        %v2077 = vsel %vm1300, %v2071, 0
        %2079 = vmatprep.subr.bf16.mxu0 0
        %2080 = vmatpush1.bf16.msra.mxu0 %v2074
        %2081 = vmatprep.subr.bf16.mxu0 0
        %2082 = vmatpush1.bf16.msra.mxu0 0
        %2083 = vmatprep.subr.bf16.mxu0 0
        %2084 = vmatpush1.bf16.msra.mxu0 0
        %2085 = vmatprep.subr.bf16.mxu0 0
        %2086 = vmatpush1.bf16.msra.mxu0 0
        %2087 = vmatprep.subr.bf16.mxu0 0
        %2088 = vmatpush1.bf16.msra.mxu0 0
        %2089 = vmatprep.subr.bf16.mxu0 0
        %2090 = vmatpush1.bf16.msra.mxu0 0
        %2091 = vmatprep.subr.bf16.mxu0 0
        %2092 = vmatpush1.bf16.msra.mxu0 0
        %2093 = vmatprep.subr.bf16.mxu0 0
        %2094 = vmatpush1.bf16.msra.mxu0 0
        %2095 = vmatprep.subr.bf16.mxu0 0
        %2096 = vmatpush1.bf16.msra.mxu0 0
        %2097 = vmatprep.subr.bf16.mxu0 0
        %2098 = vmatpush1.bf16.msra.mxu0 0
        %2099 = vmatprep.subr.bf16.mxu0 0
        %2100 = vmatpush1.bf16.msra.mxu0 0
        %2101 = vmatprep.subr.bf16.mxu0 0
        %2102 = vmatpush1.bf16.msra.mxu0 0
        %2103 = vmatprep.subr.bf16.mxu0 0
        %2104 = vmatpush1.bf16.msra.mxu0 0
        %2105 = vmatprep.subr.bf16.mxu0 0
        %2106 = vmatpush1.bf16.msra.mxu0 0
        %2107 = vmatprep.subr.bf16.mxu0 0
        %2108 = vmatpush1.bf16.msra.mxu0 0
        %2109 = vmatprep.subr.bf16.mxu0 0
        %2110 = vmatpush1.bf16.msra.mxu0 0
        %2111 = vmatprep.mubr.bf16.mxu0 0
        %2112 = vmatmul.mubr.bf16.gmra.mrb[0].mxu0 %v2077
        %v2113 = vpop.f32.mrb[0].mxu0
        %v2114 = vadd.f32 0.0, %v2113
        %v2115 = vpop.f32.mrb[0].mxu0
        %v2116 = vpop.f32.mrb[0].mxu0
        %v2117 = vadd.f32 0.0, %v2116
        %v2118 = vpop.f32.mrb[0].mxu0
        %2119 = vdwg.mxu0
        %2120 = vrot.lane.b32.xlu0 %v1204, 32
        %v2121 = vpop.permute.xlu0 %2120
        %v2124 = vsel %vm1300, %v2072, 0
        %2126 = vmatprep.subr.bf16.mxu0 0
        %2127 = vmatpush1.bf16.msra.mxu0 %v2121
        %2128 = vmatprep.subr.bf16.mxu0 0
        %2129 = vmatpush1.bf16.msra.mxu0 0
        %2130 = vmatprep.subr.bf16.mxu0 0
        %2131 = vmatpush1.bf16.msra.mxu0 0
        %2132 = vmatprep.subr.bf16.mxu0 0
        %2133 = vmatpush1.bf16.msra.mxu0 0
        %2134 = vmatprep.subr.bf16.mxu0 0
        %2135 = vmatpush1.bf16.msra.mxu0 0
        %2136 = vmatprep.subr.bf16.mxu0 0
        %2137 = vmatpush1.bf16.msra.mxu0 0
        %2138 = vmatprep.subr.bf16.mxu0 0
        %2139 = vmatpush1.bf16.msra.mxu0 0
        %2140 = vmatprep.subr.bf16.mxu0 0
        %2141 = vmatpush1.bf16.msra.mxu0 0
        %2142 = vmatprep.subr.bf16.mxu0 0
        %2143 = vmatpush1.bf16.msra.mxu0 0
        %2144 = vmatprep.subr.bf16.mxu0 0
        %2145 = vmatpush1.bf16.msra.mxu0 0
        %2146 = vmatprep.subr.bf16.mxu0 0
        %2147 = vmatpush1.bf16.msra.mxu0 0
        %2148 = vmatprep.subr.bf16.mxu0 0
        %2149 = vmatpush1.bf16.msra.mxu0 0
        %2150 = vmatprep.subr.bf16.mxu0 0
        %2151 = vmatpush1.bf16.msra.mxu0 0
        %2152 = vmatprep.subr.bf16.mxu0 0
        %2153 = vmatpush1.bf16.msra.mxu0 0
        %2154 = vmatprep.subr.bf16.mxu0 0
        %2155 = vmatpush1.bf16.msra.mxu0 0
        %2156 = vmatprep.subr.bf16.mxu0 0
        %2157 = vmatpush1.bf16.msra.mxu0 0
        %2158 = vmatprep.mubr.bf16.mxu0 0
        %2159 = vmatmul.mubr.bf16.gmra.mrb[0].mxu0 %v2124
        %v2160 = vpop.f32.mrb[0].mxu0
        %v2161 = vadd.f32 0.0, %v2160
        %v2162 = vpop.f32.mrb[0].mxu0
        %v2163 = vpop.f32.mrb[0].mxu0
        %v2164 = vadd.f32 0.0, %v2163
        %v2165 = vpop.f32.mrb[0].mxu0
        %2166 = vdwg.mxu0
        %2171 = vrot.lane.b32.xlu0 %v1629, 32
        %v2172 = vpop.permute.xlu0 %2171
        %2173 = vrot.lane.b32.xlu0 %v1632, 32
        %v2174 = vpop.permute.xlu0 %2173
        %2175 = vrot.lane.b32.xlu0 %v1677, 32
        %v2176 = vpop.permute.xlu0 %2175
        %2177 = vrot.lane.b32.xlu0 %v1680, 32
        %v2178 = vpop.permute.xlu0 %2177
        %2187 = vrot.lane.b32.xlu0 %v1872, 64
        %v2188 = vpop.permute.xlu0 %2187
        %2189 = vrot.lane.b32.xlu0 %v1875, 64
        %v2190 = vpop.permute.xlu0 %2189
        %2191 = vrot.lane.b32.xlu0 %v1919, 64
        %v2192 = vpop.permute.xlu0 %2191
        %2193 = vrot.lane.b32.xlu0 %v1922, 64
        %v2194 = vpop.permute.xlu0 %2193
        %2203 = vrot.lane.b32.xlu0 %v2114, 96
        %v2204 = vpop.permute.xlu0 %2203
        %2205 = vrot.lane.b32.xlu0 %v2117, 96
        %v2206 = vpop.permute.xlu0 %2205
        %2207 = vrot.lane.b32.xlu0 %v2161, 96
        %v2208 = vpop.permute.xlu0 %2207
        %2209 = vrot.lane.b32.xlu0 %v2164, 96
        %v2210 = vpop.permute.xlu0 %2209
        %v2215 = vsel %vm1205, %v1385, %v2172
        %v2216 = vsel %vm1205, %v1388, %v2174
        %v2217 = vsel %vm1205, %v1429, %v2176
        %v2218 = vsel %vm1205, %v1432, %v2178
        %vm2219 = vcmask 523264
        %v2220 = vsel %vm2219, %v2215, %v2188
        %v2221 = vsel %vm2219, %v2216, %v2190
        %v2222 = vsel %vm2219, %v2217, %v2192
        %v2223 = vsel %vm2219, %v2218, %v2194
        %vm2224 = vcmask 785408
        %v2225 = vsel %vm2224, %v2220, %v2204
        %v2226 = vsel %vm2224, %v2221, %v2206
        %v2227 = vsel %vm2224, %v2222, %v2208
        %v2228 = vsel %vm2224, %v2223, %v2210
        %v2229 = vpack.c.bf16 %v2226, %v2225
        %v2230 = vpack.c.bf16 %v2228, %v2227
        %v2231 = vld [vmem:[%s666] sm:$0xf]
        %v2232 = vld [vmem:[%s666 + $0x4] sm:$0xf]
        %v2233 = vld [vmem:[%s666 + $0x8] sm:$0xf]
        %v2234 = vld [vmem:[%s666 + $0xc] sm:$0xf]
        %v2235 = vld [vmem:[%s666 + $0x10] sm:$0xf]
        %v2236 = vld [vmem:[%s666 + $0x14] sm:$0xf]
        %v2237 = vld [vmem:[%s666 + $0x18] sm:$0xf]
        %v2238 = vld [vmem:[%s666 + $0x1c] sm:$0xf]
        %v2239 = vld [vmem:[%s666 + $0x20] sm:$0xf]
        %v2240 = vld [vmem:[%s666 + $0x24] sm:$0xf]
        %v2241 = vld [vmem:[%s666 + $0x28] sm:$0xf]
        %v2242 = vld [vmem:[%s666 + $0x2c] sm:$0xf]
        %v2243 = vld [vmem:[%s666 + $0x30] sm:$0xf]
        %v2244 = vld [vmem:[%s666 + $0x34] sm:$0xf]
        %v2245 = vld [vmem:[%s666 + $0x38] sm:$0xf]
        %v2246 = vld [vmem:[%s666 + $0x3c] sm:$0xf]
        %v2247 = vlaneseq
        %v2248 = vshrl.u32 %v2247, 7
        %v2249 = vsub.s32 4, %v2248
        %v2250 = vrot.slane %v856, %v2249
        %v2267 = vunpack.c.l.b16 %v2231
        %v2268 = vunpack.c.l.b16 %v2232
        %v2269 = vunpack.c.l.b16 %v2233
        %v2270 = vunpack.c.l.b16 %v2234
        %v2271 = vunpack.c.l.b16 %v2235
        %v2272 = vunpack.c.l.b16 %v2236
        %v2273 = vunpack.c.l.b16 %v2237
        %v2274 = vunpack.c.l.b16 %v2238
        %v2275 = vunpack.c.l.b16 %v2239
        %v2276 = vunpack.c.l.b16 %v2240
        %v2277 = vunpack.c.l.b16 %v2241
        %v2278 = vunpack.c.l.b16 %v2242
        %v2279 = vunpack.c.l.b16 %v2243
        %v2280 = vunpack.c.l.b16 %v2244
        %v2281 = vunpack.c.l.b16 %v2245
        %v2282 = vunpack.c.l.b16 %v2246
        %v2283 = vpack.c.b16 %v2268, %v2267
        %v2284 = vpack.c.b16 %v2270, %v2269
        %v2285 = vpack.c.b16 %v2272, %v2271
        %v2286 = vpack.c.b16 %v2274, %v2273
        %v2287 = vpack.c.b16 %v2276, %v2275
        %v2288 = vpack.c.b16 %v2278, %v2277
        %v2289 = vpack.c.b16 %v2280, %v2279
        %v2290 = vpack.c.b16 %v2282, %v2281
        %2299 = vmatprep.subr.bf16.mxu0 0
        %2300 = vmatpush1.bf16.msra.mxu0 %v2283
        %2301 = vmatprep.subr.bf16.mxu0 0
        %2302 = vmatpush1.bf16.msra.mxu0 %v2284
        %2303 = vmatprep.subr.bf16.mxu0 0
        %2304 = vmatpush1.bf16.msra.mxu0 %v2285
        %2305 = vmatprep.subr.bf16.mxu0 0
        %2306 = vmatpush1.bf16.msra.mxu0 %v2286
        %2307 = vmatprep.subr.bf16.mxu0 0
        %2308 = vmatpush1.bf16.msra.mxu0 %v2287
        %2309 = vmatprep.subr.bf16.mxu0 0
        %2310 = vmatpush1.bf16.msra.mxu0 %v2288
        %2311 = vmatprep.subr.bf16.mxu0 0
        %2312 = vmatpush1.bf16.msra.mxu0 %v2289
        %2313 = vmatprep.subr.bf16.mxu0 0
        %2314 = vmatpush1.bf16.msra.mxu0 %v2290
        %2315 = vmatprep.subr.bf16.mxu0 0
        %2316 = vmatpush1.bf16.msra.mxu0 0
        %2317 = vmatprep.subr.bf16.mxu0 0
        %2318 = vmatpush1.bf16.msra.mxu0 0
        %2319 = vmatprep.subr.bf16.mxu0 0
        %2320 = vmatpush1.bf16.msra.mxu0 0
        %2321 = vmatprep.subr.bf16.mxu0 0
        %2322 = vmatpush1.bf16.msra.mxu0 0
        %2323 = vmatprep.subr.bf16.mxu0 0
        %2324 = vmatpush1.bf16.msra.mxu0 0
        %2325 = vmatprep.subr.bf16.mxu0 0
        %2326 = vmatpush1.bf16.msra.mxu0 0
        %2327 = vmatprep.subr.bf16.mxu0 0
        %2328 = vmatpush1.bf16.msra.mxu0 0
        %2329 = vmatprep.subr.bf16.mxu0 0
        %2330 = vmatpush1.bf16.msra.mxu0 0
        %2331 = vmatprep.mubr.bf16.mxu0 0
        %2332 = vmatmul.mubr.bf16.gmra.mrb[0].mxu0 %v2229
        %v2333 = vpop.f32.mrb[0].mxu0
        %v2334 = vadd.f32 %v2250, %v2333
        %v2335 = vpop.f32.mrb[0].mxu0
        %v2336 = vpop.f32.mrb[0].mxu0
        %v2337 = vadd.f32 %v2250, %v2336
        %v2338 = vpop.f32.mrb[0].mxu0
        %2339 = vmatprep.mubr.bf16.mxu0 0
        %2340 = vmatmul.mubr.bf16.gmra.mrb[0].mxu0 %v2230
        %v2341 = vpop.f32.mrb[0].mxu0
        %v2342 = vadd.f32 %v2250, %v2341
        %v2343 = vpop.f32.mrb[0].mxu0
        %v2344 = vpop.f32.mrb[0].mxu0
        %v2345 = vadd.f32 %v2250, %v2344
        %v2346 = vpop.f32.mrb[0].mxu0
        %2347 = vdwg.mxu0
        %v2348 = vadd.f32 %v844, %v2334
        %v2349 = vadd.f32 %v845, %v2337
        %v2350 = vadd.f32 %v846, %v2342
        %v2351 = vadd.f32 %v847, %v2345
        %2352 = vadd.xlane.f32.xlu0 %v2348
        %v2353 = vpop.xlane.xlu0 %2352
        %2354 = vadd.xlane.f32.xlu0 %v2349
        %v2355 = vpop.xlane.xlu0 %2354
        %2356 = vadd.xlane.f32.xlu0 %v2350
        %v2357 = vpop.xlane.xlu0 %2356
        %2358 = vadd.xlane.f32.xlu0 %v2351
        %v2359 = vpop.xlane.xlu0 %2358
        %v2360 = vmul.f32 %v2353, %v865
        %v2361 = vmul.f32 %v2355, %v865
        %v2362 = vmul.f32 %v2357, %v865
        %v2363 = vmul.f32 %v2359, %v865
        %v2364 = vsub.f32 %v2348, %v2360
        %v2365 = vsub.f32 %v2349, %v2361
        %v2366 = vsub.f32 %v2350, %v2362
        %v2367 = vsub.f32 %v2351, %v2363
        %v2368 = vmul.f32 %v2364, %v2364
        %v2369 = vmul.f32 %v2365, %v2365
        %v2370 = vmul.f32 %v2366, %v2366
        %v2371 = vmul.f32 %v2367, %v2367
        %2372 = vadd.xlane.f32.xlu0 %v2368
        %v2373 = vpop.xlane.xlu0 %2372
        %2374 = vadd.xlane.f32.xlu0 %v2369
        %v2375 = vpop.xlane.xlu0 %2374
        %2376 = vadd.xlane.f32.xlu0 %v2370
        %v2377 = vpop.xlane.xlu0 %2376
        %2378 = vadd.xlane.f32.xlu0 %v2371
        %v2379 = vpop.xlane.xlu0 %2378
        %v2380 = vmul.f32 %v2373, %v865
        %v2381 = vmul.f32 %v2375, %v865
        %v2382 = vmul.f32 %v2377, %v865
        %v2383 = vmul.f32 %v2379, %v865
        %v2384 = vadd.f32 %v2380, 1e-05
        %v2385 = vadd.f32 %v2381, 1e-05
        %v2386 = vadd.f32 %v2382, 1e-05
        %v2387 = vadd.f32 %v2383, 1e-05
        %v2388 = vrsqrt.pop %v2384
        %v2389 = vrsqrt.pop %v2385
        %v2390 = vrsqrt.pop %v2386
        %v2391 = vrsqrt.pop %v2387
        %v2392 = vmul.f32 %v2364, %v2388
        %v2393 = vmul.f32 %v2365, %v2389
        %v2394 = vmul.f32 %v2366, %v2390
        %v2395 = vmul.f32 %v2367, %v2391
        %v2396 = vlaneseq
        %v2397 = vshrl.u32 %v2396, 7
        %v2398 = vsub.s32 2, %v2397
        %v2399 = vrot.slane %v856, %v2398
        %v2400 = vmul.f32 %v2392, %v2399
        %v2401 = vmul.f32 %v2393, %v2399
        %v2402 = vmul.f32 %v2394, %v2399
        %v2403 = vmul.f32 %v2395, %v2399
        %v2404 = vlaneseq
        %v2405 = vshrl.u32 %v2404, 7
        %v2406 = vsub.s32 3, %v2405
        %v2407 = vrot.slane %v856, %v2406
        %v2408 = vadd.f32 %v2400, %v2407
        %v2409 = vadd.f32 %v2401, %v2407
        %v2410 = vadd.f32 %v2402, %v2407
        %v2411 = vadd.f32 %v2403, %v2407
        %v2412 = vpack.c.bf16 %v2409, %v2408
        %v2413 = vpack.c.bf16 %v2411, %v2410
        %v2414 = vld [vmem:[%s675] sm:$0xff]
        %v2415 = vld [vmem:[%s675 + $0x8] sm:$0xff]
        %v2416 = vld [vmem:[%s675 + $0x10] sm:$0xff]
        %v2417 = vld [vmem:[%s675 + $0x18] sm:$0xff]
        %v2418 = vld [vmem:[%s675 + $0x20] sm:$0xff]
        %v2419 = vld [vmem:[%s675 + $0x28] sm:$0xff]
        %v2420 = vld [vmem:[%s675 + $0x30] sm:$0xff]
        %v2421 = vld [vmem:[%s675 + $0x38] sm:$0xff]
        %v2422 = vld [vmem:[%s675 + $0x40] sm:$0xff]
        %v2423 = vld [vmem:[%s675 + $0x48] sm:$0xff]
        %v2424 = vld [vmem:[%s675 + $0x50] sm:$0xff]
        %v2425 = vld [vmem:[%s675 + $0x58] sm:$0xff]
        %v2426 = vld [vmem:[%s675 + $0x60] sm:$0xff]
        %v2427 = vld [vmem:[%s675 + $0x68] sm:$0xff]
        %v2428 = vld [vmem:[%s675 + $0x70] sm:$0xff]
        %v2429 = vld [vmem:[%s675 + $0x78] sm:$0xff]
        %v2430 = vld [vmem:[%s675 + $0x80] sm:$0xff]
        %v2431 = vld [vmem:[%s675 + $0x88] sm:$0xff]
        %v2432 = vld [vmem:[%s675 + $0x90] sm:$0xff]
        %v2433 = vld [vmem:[%s675 + $0x98] sm:$0xff]
        %v2434 = vld [vmem:[%s675 + $0xa0] sm:$0xff]
        %v2435 = vld [vmem:[%s675 + $0xa8] sm:$0xff]
        %v2436 = vld [vmem:[%s675 + $0xb0] sm:$0xff]
        %v2437 = vld [vmem:[%s675 + $0xb8] sm:$0xff]
        %v2438 = vld [vmem:[%s675 + $0xc0] sm:$0xff]
        %v2439 = vld [vmem:[%s675 + $0xc8] sm:$0xff]
        %v2440 = vld [vmem:[%s675 + $0xd0] sm:$0xff]
        %v2441 = vld [vmem:[%s675 + $0xd8] sm:$0xff]
        %v2442 = vld [vmem:[%s675 + $0xe0] sm:$0xff]
        %v2443 = vld [vmem:[%s675 + $0xe8] sm:$0xff]
        %v2444 = vld [vmem:[%s675 + $0xf0] sm:$0xff]
        %v2445 = vld [vmem:[%s675 + $0xf8] sm:$0xff]
        %v2446 = vld [vmem:[%s648] sm:$0xf]
        %v2448 = vlaneseq
        %v2449 = vshrl.u32 %v2448, 7
        %v2450 = vsub.s32 0, %v2449
        %v2451 = vrot.slane %v2446, %v2450
        %v2452 = vlaneseq
        %v2453 = vshrl.u32 %v2452, 7
        %v2454 = vsub.s32 1, %v2453
        %v2455 = vrot.slane %v2446, %v2454
        %v2456 = vlaneseq
        %v2457 = vshrl.u32 %v2456, 7
        %v2458 = vsub.s32 2, %v2457
        %v2459 = vrot.slane %v2446, %v2458
        %v2460 = vlaneseq
        %v2461 = vshrl.u32 %v2460, 7
        %v2462 = vsub.s32 3, %v2461
        %v2463 = vrot.slane %v2446, %v2462
        %v2500 = vunpack.c.l.b16 %v2414
        %v2501 = vunpack.c.h.b16 %v2414
        %v2502 = vunpack.c.l.b16 %v2415
        %v2503 = vunpack.c.h.b16 %v2415
        %v2504 = vunpack.c.l.b16 %v2416
        %v2505 = vunpack.c.h.b16 %v2416
        %v2506 = vunpack.c.l.b16 %v2417
        %v2507 = vunpack.c.h.b16 %v2417
        %v2508 = vunpack.c.l.b16 %v2418
        %v2509 = vunpack.c.h.b16 %v2418
        %v2510 = vunpack.c.l.b16 %v2419
        %v2511 = vunpack.c.h.b16 %v2419
        %v2512 = vunpack.c.l.b16 %v2420
        %v2513 = vunpack.c.h.b16 %v2420
        %v2514 = vunpack.c.l.b16 %v2421
        %v2515 = vunpack.c.h.b16 %v2421
        %v2516 = vunpack.c.l.b16 %v2422
        %v2517 = vunpack.c.h.b16 %v2422
        %v2518 = vunpack.c.l.b16 %v2423
        %v2519 = vunpack.c.h.b16 %v2423
        %v2520 = vunpack.c.l.b16 %v2424
        %v2521 = vunpack.c.h.b16 %v2424
        %v2522 = vunpack.c.l.b16 %v2425
        %v2523 = vunpack.c.h.b16 %v2425
        %v2524 = vunpack.c.l.b16 %v2426
        %v2525 = vunpack.c.h.b16 %v2426
        %v2526 = vunpack.c.l.b16 %v2427
        %v2527 = vunpack.c.h.b16 %v2427
        %v2528 = vunpack.c.l.b16 %v2428
        %v2529 = vunpack.c.h.b16 %v2428
        %v2530 = vunpack.c.l.b16 %v2429
        %v2531 = vunpack.c.h.b16 %v2429
        %v2532 = vunpack.c.l.b16 %v2430
        %v2533 = vunpack.c.h.b16 %v2430
        %v2534 = vunpack.c.l.b16 %v2431
        %v2535 = vunpack.c.h.b16 %v2431
        %v2536 = vunpack.c.l.b16 %v2432
        %v2537 = vunpack.c.h.b16 %v2432
        %v2538 = vunpack.c.l.b16 %v2433
        %v2539 = vunpack.c.h.b16 %v2433
        %v2540 = vunpack.c.l.b16 %v2434
        %v2541 = vunpack.c.h.b16 %v2434
        %v2542 = vunpack.c.l.b16 %v2435
        %v2543 = vunpack.c.h.b16 %v2435
        %v2544 = vunpack.c.l.b16 %v2436
        %v2545 = vunpack.c.h.b16 %v2436
        %v2546 = vunpack.c.l.b16 %v2437
        %v2547 = vunpack.c.h.b16 %v2437
        %v2548 = vunpack.c.l.b16 %v2438
        %v2549 = vunpack.c.h.b16 %v2438
        %v2550 = vunpack.c.l.b16 %v2439
        %v2551 = vunpack.c.h.b16 %v2439
        %v2552 = vunpack.c.l.b16 %v2440
        %v2553 = vunpack.c.h.b16 %v2440
        %v2554 = vunpack.c.l.b16 %v2441
        %v2555 = vunpack.c.h.b16 %v2441
        %v2556 = vunpack.c.l.b16 %v2442
        %v2557 = vunpack.c.h.b16 %v2442
        %v2558 = vunpack.c.l.b16 %v2443
        %v2559 = vunpack.c.h.b16 %v2443
        %v2560 = vunpack.c.l.b16 %v2444
        %v2561 = vunpack.c.h.b16 %v2444
        %v2562 = vunpack.c.l.b16 %v2445
        %v2563 = vunpack.c.h.b16 %v2445
        %v2564 = vpack.c.b16 %v2504, %v2500
        %v2565 = vpack.c.b16 %v2505, %v2501
        %v2566 = vpack.c.b16 %v2506, %v2502
        %v2567 = vpack.c.b16 %v2507, %v2503
        %v2568 = vpack.c.b16 %v2512, %v2508
        %v2569 = vpack.c.b16 %v2513, %v2509
        %v2570 = vpack.c.b16 %v2514, %v2510
        %v2571 = vpack.c.b16 %v2515, %v2511
        %v2572 = vpack.c.b16 %v2520, %v2516
        %v2573 = vpack.c.b16 %v2521, %v2517
        %v2574 = vpack.c.b16 %v2522, %v2518
        %v2575 = vpack.c.b16 %v2523, %v2519
        %v2576 = vpack.c.b16 %v2528, %v2524
        %v2577 = vpack.c.b16 %v2529, %v2525
        %v2578 = vpack.c.b16 %v2530, %v2526
        %v2579 = vpack.c.b16 %v2531, %v2527
        %v2580 = vpack.c.b16 %v2536, %v2532
        %v2581 = vpack.c.b16 %v2537, %v2533
        %v2582 = vpack.c.b16 %v2538, %v2534
        %v2583 = vpack.c.b16 %v2539, %v2535
        %v2584 = vpack.c.b16 %v2544, %v2540
        %v2585 = vpack.c.b16 %v2545, %v2541
        %v2586 = vpack.c.b16 %v2546, %v2542
        %v2587 = vpack.c.b16 %v2547, %v2543
        %v2588 = vpack.c.b16 %v2552, %v2548
        %v2589 = vpack.c.b16 %v2553, %v2549
        %v2590 = vpack.c.b16 %v2554, %v2550
        %v2591 = vpack.c.b16 %v2555, %v2551
        %v2592 = vpack.c.b16 %v2560, %v2556
        %v2593 = vpack.c.b16 %v2561, %v2557
        %v2594 = vpack.c.b16 %v2562, %v2558
        %v2595 = vpack.c.b16 %v2563, %v2559
        %2628 = vmatprep.subr.bf16.mxu0 %v2565
        %2629 = vmatpush1.bf16.msra.mxu0 %v2564
        %2630 = vmatprep.subr.bf16.mxu0 %v2569
        %2631 = vmatpush1.bf16.msra.mxu0 %v2568
        %2632 = vmatprep.subr.bf16.mxu0 %v2573
        %2633 = vmatpush1.bf16.msra.mxu0 %v2572
        %2634 = vmatprep.subr.bf16.mxu0 %v2577
        %2635 = vmatpush1.bf16.msra.mxu0 %v2576
        %2636 = vmatprep.subr.bf16.mxu0 %v2581
        %2637 = vmatpush1.bf16.msra.mxu0 %v2580
        %2638 = vmatprep.subr.bf16.mxu0 %v2585
        %2639 = vmatpush1.bf16.msra.mxu0 %v2584
        %2640 = vmatprep.subr.bf16.mxu0 %v2589
        %2641 = vmatpush1.bf16.msra.mxu0 %v2588
        %2642 = vmatprep.subr.bf16.mxu0 %v2593
        %2643 = vmatpush1.bf16.msra.mxu0 %v2592
        %2644 = vmatprep.subr.bf16.mxu0 0
        %2645 = vmatpush1.bf16.msra.mxu0 0
        %2646 = vmatprep.subr.bf16.mxu0 0
        %2647 = vmatpush1.bf16.msra.mxu0 0
        %2648 = vmatprep.subr.bf16.mxu0 0
        %2649 = vmatpush1.bf16.msra.mxu0 0
        %2650 = vmatprep.subr.bf16.mxu0 0
        %2651 = vmatpush1.bf16.msra.mxu0 0
        %2652 = vmatprep.subr.bf16.mxu0 0
        %2653 = vmatpush1.bf16.msra.mxu0 0
        %2654 = vmatprep.subr.bf16.mxu0 0
        %2655 = vmatpush1.bf16.msra.mxu0 0
        %2656 = vmatprep.subr.bf16.mxu0 0
        %2657 = vmatpush1.bf16.msra.mxu0 0
        %2658 = vmatprep.subr.bf16.mxu0 0
        %2659 = vmatpush1.bf16.msra.mxu0 0
        %2660 = vmatprep.mubr.bf16.mxu0 0
        %2661 = vmatmul.mubr.bf16.gmra.mrb[0].mxu0 %v2412
        %v2662 = vpop.f32.mrb[0].mxu0
        %v2663 = vadd.f32 %v2451, %v2662
        %v2664 = vpop.f32.mrb[0].mxu0
        %v2665 = vadd.f32 %v2455, %v2664
        %v2666 = vpop.f32.mrb[0].mxu0
        %v2667 = vadd.f32 %v2451, %v2666
        %v2668 = vpop.f32.mrb[0].mxu0
        %v2669 = vadd.f32 %v2455, %v2668
        %2670 = vmatprep.mubr.bf16.mxu0 0
        %2671 = vmatmul.mubr.bf16.gmra.mrb[0].mxu0 %v2413
        %v2672 = vpop.f32.mrb[0].mxu0
        %v2673 = vadd.f32 %v2451, %v2672
        %v2674 = vpop.f32.mrb[0].mxu0
        %v2675 = vadd.f32 %v2455, %v2674
        %v2676 = vpop.f32.mrb[0].mxu0
        %v2677 = vadd.f32 %v2451, %v2676
        %v2678 = vpop.f32.mrb[0].mxu0
        %v2679 = vadd.f32 %v2455, %v2678
        %2680 = vdwg.mxu0
        %2681 = vmatprep.subr.bf16.mxu0 %v2567
        %2682 = vmatpush1.bf16.msra.mxu0 %v2566
        %2683 = vmatprep.subr.bf16.mxu0 %v2571
        %2684 = vmatpush1.bf16.msra.mxu0 %v2570
        %2685 = vmatprep.subr.bf16.mxu0 %v2575
        %2686 = vmatpush1.bf16.msra.mxu0 %v2574
        %2687 = vmatprep.subr.bf16.mxu0 %v2579
        %2688 = vmatpush1.bf16.msra.mxu0 %v2578
        %2689 = vmatprep.subr.bf16.mxu0 %v2583
        %2690 = vmatpush1.bf16.msra.mxu0 %v2582
        %2691 = vmatprep.subr.bf16.mxu0 %v2587
        %2692 = vmatpush1.bf16.msra.mxu0 %v2586
        %2693 = vmatprep.subr.bf16.mxu0 %v2591
        %2694 = vmatpush1.bf16.msra.mxu0 %v2590
        %2695 = vmatprep.subr.bf16.mxu0 %v2595
        %2696 = vmatpush1.bf16.msra.mxu0 %v2594
        %2697 = vmatprep.subr.bf16.mxu0 0
        %2698 = vmatpush1.bf16.msra.mxu0 0
        %2699 = vmatprep.subr.bf16.mxu0 0
        %2700 = vmatpush1.bf16.msra.mxu0 0
        %2701 = vmatprep.subr.bf16.mxu0 0
        %2702 = vmatpush1.bf16.msra.mxu0 0
        %2703 = vmatprep.subr.bf16.mxu0 0
        %2704 = vmatpush1.bf16.msra.mxu0 0
        %2705 = vmatprep.subr.bf16.mxu0 0
        %2706 = vmatpush1.bf16.msra.mxu0 0
        %2707 = vmatprep.subr.bf16.mxu0 0
        %2708 = vmatpush1.bf16.msra.mxu0 0
        %2709 = vmatprep.subr.bf16.mxu0 0
        %2710 = vmatpush1.bf16.msra.mxu0 0
        %2711 = vmatprep.subr.bf16.mxu0 0
        %2712 = vmatpush1.bf16.msra.mxu0 0
        %2713 = vmatprep.mubr.bf16.mxu0 0
        %2714 = vmatmul.mubr.bf16.gmra.mrb[0].mxu0 %v2412
        %v2715 = vpop.f32.mrb[0].mxu0
        %v2716 = vadd.f32 %v2459, %v2715
        %v2717 = vpop.f32.mrb[0].mxu0
        %v2718 = vadd.f32 %v2463, %v2717
        %v2719 = vpop.f32.mrb[0].mxu0
        %v2720 = vadd.f32 %v2459, %v2719
        %v2721 = vpop.f32.mrb[0].mxu0
        %v2722 = vadd.f32 %v2463, %v2721
        %2723 = vmatprep.mubr.bf16.mxu0 0
        %2724 = vmatmul.mubr.bf16.gmra.mrb[0].mxu0 %v2413
        %v2725 = vpop.f32.mrb[0].mxu0
        %v2726 = vadd.f32 %v2459, %v2725
        %v2727 = vpop.f32.mrb[0].mxu0
        %v2728 = vadd.f32 %v2463, %v2727
        %v2729 = vpop.f32.mrb[0].mxu0
        %v2730 = vadd.f32 %v2459, %v2729
        %v2731 = vpop.f32.mrb[0].mxu0
        %v2732 = vadd.f32 %v2463, %v2731
        %2733 = vdwg.mxu0
        %v2734 = vmul.f32 %v2663, %v2663
        %v2735 = vmul.f32 %v2665, %v2665
        %v2736 = vmul.f32 %v2716, %v2716
        %v2737 = vmul.f32 %v2718, %v2718
        %v2738 = vmul.f32 %v2667, %v2667
        %v2739 = vmul.f32 %v2669, %v2669
        %v2740 = vmul.f32 %v2720, %v2720
        %v2741 = vmul.f32 %v2722, %v2722
        %v2742 = vmul.f32 %v2673, %v2673
        %v2743 = vmul.f32 %v2675, %v2675
        %v2744 = vmul.f32 %v2726, %v2726
        %v2745 = vmul.f32 %v2728, %v2728
        %v2746 = vmul.f32 %v2677, %v2677
        %v2747 = vmul.f32 %v2679, %v2679
        %v2748 = vmul.f32 %v2730, %v2730
        %v2749 = vmul.f32 %v2732, %v2732
        %v2750 = vmul.f32 %v2663, %v2734
        %v2751 = vmul.f32 %v2665, %v2735
        %v2752 = vmul.f32 %v2716, %v2736
        %v2753 = vmul.f32 %v2718, %v2737
        %v2754 = vmul.f32 %v2667, %v2738
        %v2755 = vmul.f32 %v2669, %v2739
        %v2756 = vmul.f32 %v2720, %v2740
        %v2757 = vmul.f32 %v2722, %v2741
        %v2758 = vmul.f32 %v2673, %v2742
        %v2759 = vmul.f32 %v2675, %v2743
        %v2760 = vmul.f32 %v2726, %v2744
        %v2761 = vmul.f32 %v2728, %v2745
        %v2762 = vmul.f32 %v2677, %v2746
        %v2763 = vmul.f32 %v2679, %v2747
        %v2764 = vmul.f32 %v2730, %v2748
        %v2765 = vmul.f32 %v2732, %v2749
        %v2766 = vmul.f32 %v2750, 0.044715
        %v2767 = vmul.f32 %v2751, 0.044715
        %v2768 = vmul.f32 %v2752, 0.044715
        %v2769 = vmul.f32 %v2753, 0.044715
        %v2770 = vmul.f32 %v2754, 0.044715
        %v2771 = vmul.f32 %v2755, 0.044715
        %v2772 = vmul.f32 %v2756, 0.044715
        %v2773 = vmul.f32 %v2757, 0.044715
        %v2774 = vmul.f32 %v2758, 0.044715
        %v2775 = vmul.f32 %v2759, 0.044715
        %v2776 = vmul.f32 %v2760, 0.044715
        %v2777 = vmul.f32 %v2761, 0.044715
        %v2778 = vmul.f32 %v2762, 0.044715
        %v2779 = vmul.f32 %v2763, 0.044715
        %v2780 = vmul.f32 %v2764, 0.044715
        %v2781 = vmul.f32 %v2765, 0.044715
        %v2782 = vadd.f32 %v2663, %v2766
        %v2783 = vadd.f32 %v2665, %v2767
        %v2784 = vadd.f32 %v2716, %v2768
        %v2785 = vadd.f32 %v2718, %v2769
        %v2786 = vadd.f32 %v2667, %v2770
        %v2787 = vadd.f32 %v2669, %v2771
        %v2788 = vadd.f32 %v2720, %v2772
        %v2789 = vadd.f32 %v2722, %v2773
        %v2790 = vadd.f32 %v2673, %v2774
        %v2791 = vadd.f32 %v2675, %v2775
        %v2792 = vadd.f32 %v2726, %v2776
        %v2793 = vadd.f32 %v2728, %v2777
        %v2794 = vadd.f32 %v2677, %v2778
        %v2795 = vadd.f32 %v2679, %v2779
        %v2796 = vadd.f32 %v2730, %v2780
        %v2797 = vadd.f32 %v2732, %v2781
        %v2798 = vmul.f32 %v2782, 0.7978846
        %v2799 = vmul.f32 %v2783, 0.7978846
        %v2800 = vmul.f32 %v2784, 0.7978846
        %v2801 = vmul.f32 %v2785, 0.7978846
        %v2802 = vmul.f32 %v2786, 0.7978846
        %v2803 = vmul.f32 %v2787, 0.7978846
        %v2804 = vmul.f32 %v2788, 0.7978846
        %v2805 = vmul.f32 %v2789, 0.7978846
        %v2806 = vmul.f32 %v2790, 0.7978846
        %v2807 = vmul.f32 %v2791, 0.7978846
        %v2808 = vmul.f32 %v2792, 0.7978846
        %v2809 = vmul.f32 %v2793, 0.7978846
        %v2810 = vmul.f32 %v2794, 0.7978846
        %v2811 = vmul.f32 %v2795, 0.7978846
        %v2812 = vmul.f32 %v2796, 0.7978846
        %v2813 = vmul.f32 %v2797, 0.7978846
        %v2814 = vtanh.pop %v2798
        %v2815 = vtanh.pop %v2799
        %v2816 = vtanh.pop %v2800
        %v2817 = vtanh.pop %v2801
        %v2818 = vtanh.pop %v2802
        %v2819 = vtanh.pop %v2803
        %v2820 = vtanh.pop %v2804
        %v2821 = vtanh.pop %v2805
        %v2822 = vtanh.pop %v2806
        %v2823 = vtanh.pop %v2807
        %v2824 = vtanh.pop %v2808
        %v2825 = vtanh.pop %v2809
        %v2826 = vtanh.pop %v2810
        %v2827 = vtanh.pop %v2811
        %v2828 = vtanh.pop %v2812
        %v2829 = vtanh.pop %v2813
        %v2830 = vadd.f32 %v2814, 1.0
        %v2831 = vadd.f32 %v2815, 1.0
        %v2832 = vadd.f32 %v2816, 1.0
        %v2833 = vadd.f32 %v2817, 1.0
        %v2834 = vadd.f32 %v2818, 1.0
        %v2835 = vadd.f32 %v2819, 1.0
        %v2836 = vadd.f32 %v2820, 1.0
        %v2837 = vadd.f32 %v2821, 1.0
        %v2838 = vadd.f32 %v2822, 1.0
        %v2839 = vadd.f32 %v2823, 1.0
        %v2840 = vadd.f32 %v2824, 1.0
        %v2841 = vadd.f32 %v2825, 1.0
        %v2842 = vadd.f32 %v2826, 1.0
        %v2843 = vadd.f32 %v2827, 1.0
        %v2844 = vadd.f32 %v2828, 1.0
        %v2845 = vadd.f32 %v2829, 1.0
        %v2846 = vmul.f32 %v2830, 0.5
        %v2847 = vmul.f32 %v2831, 0.5
        %v2848 = vmul.f32 %v2832, 0.5
        %v2849 = vmul.f32 %v2833, 0.5
        %v2850 = vmul.f32 %v2834, 0.5
        %v2851 = vmul.f32 %v2835, 0.5
        %v2852 = vmul.f32 %v2836, 0.5
        %v2853 = vmul.f32 %v2837, 0.5
        %v2854 = vmul.f32 %v2838, 0.5
        %v2855 = vmul.f32 %v2839, 0.5
        %v2856 = vmul.f32 %v2840, 0.5
        %v2857 = vmul.f32 %v2841, 0.5
        %v2858 = vmul.f32 %v2842, 0.5
        %v2859 = vmul.f32 %v2843, 0.5
        %v2860 = vmul.f32 %v2844, 0.5
        %v2861 = vmul.f32 %v2845, 0.5
        %v2862 = vmul.f32 %v2663, %v2846
        %v2863 = vmul.f32 %v2665, %v2847
        %v2864 = vmul.f32 %v2716, %v2848
        %v2865 = vmul.f32 %v2718, %v2849
        %v2866 = vmul.f32 %v2667, %v2850
        %v2867 = vmul.f32 %v2669, %v2851
        %v2868 = vmul.f32 %v2720, %v2852
        %v2869 = vmul.f32 %v2722, %v2853
        %v2870 = vmul.f32 %v2673, %v2854
        %v2871 = vmul.f32 %v2675, %v2855
        %v2872 = vmul.f32 %v2726, %v2856
        %v2873 = vmul.f32 %v2728, %v2857
        %v2874 = vmul.f32 %v2677, %v2858
        %v2875 = vmul.f32 %v2679, %v2859
        %v2876 = vmul.f32 %v2730, %v2860
        %v2877 = vmul.f32 %v2732, %v2861
        %v2878 = vpack.c.bf16 %v2866, %v2862
        %v2879 = vpack.c.bf16 %v2867, %v2863
        %v2880 = vpack.c.bf16 %v2868, %v2864
        %v2881 = vpack.c.bf16 %v2869, %v2865
        %v2882 = vpack.c.bf16 %v2874, %v2870
        %v2883 = vpack.c.bf16 %v2875, %v2871
        %v2884 = vpack.c.bf16 %v2876, %v2872
        %v2885 = vpack.c.bf16 %v2877, %v2873
        %v2886 = vld [vmem:[%s684] sm:$0xf]
        %v2887 = vld [vmem:[%s684 + $0x4] sm:$0xf]
        %v2888 = vld [vmem:[%s684 + $0x8] sm:$0xf]
        %v2889 = vld [vmem:[%s684 + $0xc] sm:$0xf]
        %v2890 = vld [vmem:[%s684 + $0x10] sm:$0xf]
        %v2891 = vld [vmem:[%s684 + $0x14] sm:$0xf]
        %v2892 = vld [vmem:[%s684 + $0x18] sm:$0xf]
        %v2893 = vld [vmem:[%s684 + $0x1c] sm:$0xf]
        %v2894 = vld [vmem:[%s684 + $0x20] sm:$0xf]
        %v2895 = vld [vmem:[%s684 + $0x24] sm:$0xf]
        %v2896 = vld [vmem:[%s684 + $0x28] sm:$0xf]
        %v2897 = vld [vmem:[%s684 + $0x2c] sm:$0xf]
        %v2898 = vld [vmem:[%s684 + $0x30] sm:$0xf]
        %v2899 = vld [vmem:[%s684 + $0x34] sm:$0xf]
        %v2900 = vld [vmem:[%s684 + $0x38] sm:$0xf]
        %v2901 = vld [vmem:[%s684 + $0x3c] sm:$0xf]
        %v2902 = vld [vmem:[%s684 + $0x40] sm:$0xf]
        %v2903 = vld [vmem:[%s684 + $0x44] sm:$0xf]
        %v2904 = vld [vmem:[%s684 + $0x48] sm:$0xf]
        %v2905 = vld [vmem:[%s684 + $0x4c] sm:$0xf]
        %v2906 = vld [vmem:[%s684 + $0x50] sm:$0xf]
        %v2907 = vld [vmem:[%s684 + $0x54] sm:$0xf]
        %v2908 = vld [vmem:[%s684 + $0x58] sm:$0xf]
        %v2909 = vld [vmem:[%s684 + $0x5c] sm:$0xf]
        %v2910 = vld [vmem:[%s684 + $0x60] sm:$0xf]
        %v2911 = vld [vmem:[%s684 + $0x64] sm:$0xf]
        %v2912 = vld [vmem:[%s684 + $0x68] sm:$0xf]
        %v2913 = vld [vmem:[%s684 + $0x6c] sm:$0xf]
        %v2914 = vld [vmem:[%s684 + $0x70] sm:$0xf]
        %v2915 = vld [vmem:[%s684 + $0x74] sm:$0xf]
        %v2916 = vld [vmem:[%s684 + $0x78] sm:$0xf]
        %v2917 = vld [vmem:[%s684 + $0x7c] sm:$0xf]
        %v2918 = vld [vmem:[%s684 + $0x80] sm:$0xf]
        %v2919 = vld [vmem:[%s684 + $0x84] sm:$0xf]
        %v2920 = vld [vmem:[%s684 + $0x88] sm:$0xf]
        %v2921 = vld [vmem:[%s684 + $0x8c] sm:$0xf]
        %v2922 = vld [vmem:[%s684 + $0x90] sm:$0xf]
        %v2923 = vld [vmem:[%s684 + $0x94] sm:$0xf]
        %v2924 = vld [vmem:[%s684 + $0x98] sm:$0xf]
        %v2925 = vld [vmem:[%s684 + $0x9c] sm:$0xf]
        %v2926 = vld [vmem:[%s684 + $0xa0] sm:$0xf]
        %v2927 = vld [vmem:[%s684 + $0xa4] sm:$0xf]
        %v2928 = vld [vmem:[%s684 + $0xa8] sm:$0xf]
        %v2929 = vld [vmem:[%s684 + $0xac] sm:$0xf]
        %v2930 = vld [vmem:[%s684 + $0xb0] sm:$0xf]
        %v2931 = vld [vmem:[%s684 + $0xb4] sm:$0xf]
        %v2932 = vld [vmem:[%s684 + $0xb8] sm:$0xf]
        %v2933 = vld [vmem:[%s684 + $0xbc] sm:$0xf]
        %v2934 = vld [vmem:[%s684 + $0xc0] sm:$0xf]
        %v2935 = vld [vmem:[%s684 + $0xc4] sm:$0xf]
        %v2936 = vld [vmem:[%s684 + $0xc8] sm:$0xf]
        %v2937 = vld [vmem:[%s684 + $0xcc] sm:$0xf]
        %v2938 = vld [vmem:[%s684 + $0xd0] sm:$0xf]
        %v2939 = vld [vmem:[%s684 + $0xd4] sm:$0xf]
        %v2940 = vld [vmem:[%s684 + $0xd8] sm:$0xf]
        %v2941 = vld [vmem:[%s684 + $0xdc] sm:$0xf]
        %v2942 = vld [vmem:[%s684 + $0xe0] sm:$0xf]
        %v2943 = vld [vmem:[%s684 + $0xe4] sm:$0xf]
        %v2944 = vld [vmem:[%s684 + $0xe8] sm:$0xf]
        %v2945 = vld [vmem:[%s684 + $0xec] sm:$0xf]
        %v2946 = vld [vmem:[%s684 + $0xf0] sm:$0xf]
        %v2947 = vld [vmem:[%s684 + $0xf4] sm:$0xf]
        %v2948 = vld [vmem:[%s684 + $0xf8] sm:$0xf]
        %v2949 = vld [vmem:[%s684 + $0xfc] sm:$0xf]
        %v2950 = vlaneseq
        %v2951 = vshrl.u32 %v2950, 7
        %v2952 = vsub.s32 5, %v2951
        %v2953 = vrot.slane %v856, %v2952
        %v3018 = vunpack.c.l.b16 %v2886
        %v3019 = vunpack.c.l.b16 %v2887
        %v3020 = vunpack.c.l.b16 %v2888
        %v3021 = vunpack.c.l.b16 %v2889
        %v3022 = vunpack.c.l.b16 %v2890
        %v3023 = vunpack.c.l.b16 %v2891
        %v3024 = vunpack.c.l.b16 %v2892
        %v3025 = vunpack.c.l.b16 %v2893
        %v3026 = vunpack.c.l.b16 %v2894
        %v3027 = vunpack.c.l.b16 %v2895
        %v3028 = vunpack.c.l.b16 %v2896
        %v3029 = vunpack.c.l.b16 %v2897
        %v3030 = vunpack.c.l.b16 %v2898
        %v3031 = vunpack.c.l.b16 %v2899
        %v3032 = vunpack.c.l.b16 %v2900
        %v3033 = vunpack.c.l.b16 %v2901
        %v3034 = vunpack.c.l.b16 %v2902
        %v3035 = vunpack.c.l.b16 %v2903
        %v3036 = vunpack.c.l.b16 %v2904
        %v3037 = vunpack.c.l.b16 %v2905
        %v3038 = vunpack.c.l.b16 %v2906
        %v3039 = vunpack.c.l.b16 %v2907
        %v3040 = vunpack.c.l.b16 %v2908
        %v3041 = vunpack.c.l.b16 %v2909
        %v3042 = vunpack.c.l.b16 %v2910
        %v3043 = vunpack.c.l.b16 %v2911
        %v3044 = vunpack.c.l.b16 %v2912
        %v3045 = vunpack.c.l.b16 %v2913
        %v3046 = vunpack.c.l.b16 %v2914
        %v3047 = vunpack.c.l.b16 %v2915
        %v3048 = vunpack.c.l.b16 %v2916
        %v3049 = vunpack.c.l.b16 %v2917
        %v3050 = vunpack.c.l.b16 %v2918
        %v3051 = vunpack.c.l.b16 %v2919
        %v3052 = vunpack.c.l.b16 %v2920
        %v3053 = vunpack.c.l.b16 %v2921
        %v3054 = vunpack.c.l.b16 %v2922
        %v3055 = vunpack.c.l.b16 %v2923
        %v3056 = vunpack.c.l.b16 %v2924
        %v3057 = vunpack.c.l.b16 %v2925
        %v3058 = vunpack.c.l.b16 %v2926
        %v3059 = vunpack.c.l.b16 %v2927
        %v3060 = vunpack.c.l.b16 %v2928
        %v3061 = vunpack.c.l.b16 %v2929
        %v3062 = vunpack.c.l.b16 %v2930
        %v3063 = vunpack.c.l.b16 %v2931
        %v3064 = vunpack.c.l.b16 %v2932
        %v3065 = vunpack.c.l.b16 %v2933
        %v3066 = vunpack.c.l.b16 %v2934
        %v3067 = vunpack.c.l.b16 %v2935
        %v3068 = vunpack.c.l.b16 %v2936
        %v3069 = vunpack.c.l.b16 %v2937
        %v3070 = vunpack.c.l.b16 %v2938
        %v3071 = vunpack.c.l.b16 %v2939
        %v3072 = vunpack.c.l.b16 %v2940
        %v3073 = vunpack.c.l.b16 %v2941
        %v3074 = vunpack.c.l.b16 %v2942
        %v3075 = vunpack.c.l.b16 %v2943
        %v3076 = vunpack.c.l.b16 %v2944
        %v3077 = vunpack.c.l.b16 %v2945
        %v3078 = vunpack.c.l.b16 %v2946
        %v3079 = vunpack.c.l.b16 %v2947
        %v3080 = vunpack.c.l.b16 %v2948
        %v3081 = vunpack.c.l.b16 %v2949
        %v3082 = vpack.c.b16 %v3019, %v3018
        %v3083 = vpack.c.b16 %v3021, %v3020
        %v3084 = vpack.c.b16 %v3023, %v3022
        %v3085 = vpack.c.b16 %v3025, %v3024
        %v3086 = vpack.c.b16 %v3027, %v3026
        %v3087 = vpack.c.b16 %v3029, %v3028
        %v3088 = vpack.c.b16 %v3031, %v3030
        %v3089 = vpack.c.b16 %v3033, %v3032
        %v3090 = vpack.c.b16 %v3035, %v3034
        %v3091 = vpack.c.b16 %v3037, %v3036
        %v3092 = vpack.c.b16 %v3039, %v3038
        %v3093 = vpack.c.b16 %v3041, %v3040
        %v3094 = vpack.c.b16 %v3043, %v3042
        %v3095 = vpack.c.b16 %v3045, %v3044
        %v3096 = vpack.c.b16 %v3047, %v3046
        %v3097 = vpack.c.b16 %v3049, %v3048
        %v3098 = vpack.c.b16 %v3051, %v3050
        %v3099 = vpack.c.b16 %v3053, %v3052
        %v3100 = vpack.c.b16 %v3055, %v3054
        %v3101 = vpack.c.b16 %v3057, %v3056
        %v3102 = vpack.c.b16 %v3059, %v3058
        %v3103 = vpack.c.b16 %v3061, %v3060
        %v3104 = vpack.c.b16 %v3063, %v3062
        %v3105 = vpack.c.b16 %v3065, %v3064
        %v3106 = vpack.c.b16 %v3067, %v3066
        %v3107 = vpack.c.b16 %v3069, %v3068
        %v3108 = vpack.c.b16 %v3071, %v3070
        %v3109 = vpack.c.b16 %v3073, %v3072
        %v3110 = vpack.c.b16 %v3075, %v3074
        %v3111 = vpack.c.b16 %v3077, %v3076
        %v3112 = vpack.c.b16 %v3079, %v3078
        %v3113 = vpack.c.b16 %v3081, %v3080
        %3146 = vmatprep.subr.bf16.mxu0 0
        %3147 = vmatpush1.bf16.msra.mxu0 %v3082
        %3148 = vmatprep.subr.bf16.mxu0 0
        %3149 = vmatpush1.bf16.msra.mxu0 %v3083
        %3150 = vmatprep.subr.bf16.mxu0 0
        %3151 = vmatpush1.bf16.msra.mxu0 %v3084
        %3152 = vmatprep.subr.bf16.mxu0 0
        %3153 = vmatpush1.bf16.msra.mxu0 %v3085
        %3154 = vmatprep.subr.bf16.mxu0 0
        %3155 = vmatpush1.bf16.msra.mxu0 %v3086
        %3156 = vmatprep.subr.bf16.mxu0 0
        %3157 = vmatpush1.bf16.msra.mxu0 %v3087
        %3158 = vmatprep.subr.bf16.mxu0 0
        %3159 = vmatpush1.bf16.msra.mxu0 %v3088
        %3160 = vmatprep.subr.bf16.mxu0 0
        %3161 = vmatpush1.bf16.msra.mxu0 %v3089
        %3162 = vmatprep.subr.bf16.mxu0 0
        %3163 = vmatpush1.bf16.msra.mxu0 %v3090
        %3164 = vmatprep.subr.bf16.mxu0 0
        %3165 = vmatpush1.bf16.msra.mxu0 %v3091
        %3166 = vmatprep.subr.bf16.mxu0 0
        %3167 = vmatpush1.bf16.msra.mxu0 %v3092
        %3168 = vmatprep.subr.bf16.mxu0 0
        %3169 = vmatpush1.bf16.msra.mxu0 %v3093
        %3170 = vmatprep.subr.bf16.mxu0 0
        %3171 = vmatpush1.bf16.msra.mxu0 %v3094
        %3172 = vmatprep.subr.bf16.mxu0 0
        %3173 = vmatpush1.bf16.msra.mxu0 %v3095
        %3174 = vmatprep.subr.bf16.mxu0 0
        %3175 = vmatpush1.bf16.msra.mxu0 %v3096
        %3176 = vmatprep.subr.bf16.mxu0 0
        %3177 = vmatpush1.bf16.msra.mxu0 %v3097
        %3178 = vmatprep.mubr.bf16.mxu0 %v2879
        %3179 = vmatmul.mubr.bf16.gmra.mrb[0].mxu0 %v2878
        %v3180 = vpop.f32.mrb[0].mxu0
        %v3181 = vadd.f32 %v2953, %v3180
        %v3182 = vpop.f32.mrb[0].mxu0
        %v3183 = vpop.f32.mrb[0].mxu0
        %v3184 = vadd.f32 %v2953, %v3183
        %v3185 = vpop.f32.mrb[0].mxu0
        %3186 = vmatprep.mubr.bf16.mxu0 %v2883
        %3187 = vmatmul.mubr.bf16.gmra.mrb[0].mxu0 %v2882
        %v3188 = vpop.f32.mrb[0].mxu0
        %v3189 = vadd.f32 %v2953, %v3188
        %v3190 = vpop.f32.mrb[0].mxu0
        %v3191 = vpop.f32.mrb[0].mxu0
        %v3192 = vadd.f32 %v2953, %v3191
        %v3193 = vpop.f32.mrb[0].mxu0
        %3194 = vdwg.mxu0
        %3195 = vmatprep.subr.bf16.mxu0 0
        %3196 = vmatpush1.bf16.msra.mxu0 %v3098
        %3197 = vmatprep.subr.bf16.mxu0 0
        %3198 = vmatpush1.bf16.msra.mxu0 %v3099
        %3199 = vmatprep.subr.bf16.mxu0 0
        %3200 = vmatpush1.bf16.msra.mxu0 %v3100
        %3201 = vmatprep.subr.bf16.mxu0 0
        %3202 = vmatpush1.bf16.msra.mxu0 %v3101
        %3203 = vmatprep.subr.bf16.mxu0 0
        %3204 = vmatpush1.bf16.msra.mxu0 %v3102
        %3205 = vmatprep.subr.bf16.mxu0 0
        %3206 = vmatpush1.bf16.msra.mxu0 %v3103
        %3207 = vmatprep.subr.bf16.mxu0 0
        %3208 = vmatpush1.bf16.msra.mxu0 %v3104
        %3209 = vmatprep.subr.bf16.mxu0 0
        %3210 = vmatpush1.bf16.msra.mxu0 %v3105
        %3211 = vmatprep.subr.bf16.mxu0 0
        %3212 = vmatpush1.bf16.msra.mxu0 %v3106
        %3213 = vmatprep.subr.bf16.mxu0 0
        %3214 = vmatpush1.bf16.msra.mxu0 %v3107
        %3215 = vmatprep.subr.bf16.mxu0 0
        %3216 = vmatpush1.bf16.msra.mxu0 %v3108
        %3217 = vmatprep.subr.bf16.mxu0 0
        %3218 = vmatpush1.bf16.msra.mxu0 %v3109
        %3219 = vmatprep.subr.bf16.mxu0 0
        %3220 = vmatpush1.bf16.msra.mxu0 %v3110
        %3221 = vmatprep.subr.bf16.mxu0 0
        %3222 = vmatpush1.bf16.msra.mxu0 %v3111
        %3223 = vmatprep.subr.bf16.mxu0 0
        %3224 = vmatpush1.bf16.msra.mxu0 %v3112
        %3225 = vmatprep.subr.bf16.mxu0 0
        %3226 = vmatpush1.bf16.msra.mxu0 %v3113
        %3227 = vmatprep.mubr.bf16.mxu0 %v2881
        %3228 = vmatmul.mubr.bf16.gmra.mrb[0].mxu0 %v2880
        %v3229 = vpop.f32.mrb[0].mxu0
        %v3230 = vadd.f32 %v3181, %v3229
        %v3231 = vpop.f32.mrb[0].mxu0
        %v3232 = vpop.f32.mrb[0].mxu0
        %v3233 = vadd.f32 %v3184, %v3232
        %v3234 = vpop.f32.mrb[0].mxu0
        %3235 = vmatprep.mubr.bf16.mxu0 %v2885
        %3236 = vmatmul.mubr.bf16.gmra.mrb[0].mxu0 %v2884
        %v3237 = vpop.f32.mrb[0].mxu0
        %v3238 = vadd.f32 %v3189, %v3237
        %v3239 = vpop.f32.mrb[0].mxu0
        %v3240 = vpop.f32.mrb[0].mxu0
        %v3241 = vadd.f32 %v3192, %v3240
        %v3242 = vpop.f32.mrb[0].mxu0
        %3243 = vdwg.mxu0
        %v3244 = vadd.f32 %v2348, %v3230
        %v3245 = vadd.f32 %v2349, %v3233
        %v3246 = vadd.f32 %v2350, %v3238
        %v3247 = vadd.f32 %v2351, %v3241
        %3249 = vset.pattern.permute.xlu0 0
        %3250 = vperm.xlu0 %3249, %v848
        %v3251 = vpop.permute.xlu0 %3250
        %3254 = vset.pattern.permute.xlu0 0
        %3255 = vperm.xlu0 %3254, %v849
        %v3256 = vpop.permute.xlu0 %3255
        %3259 = vset.pattern.permute.xlu0 0
        %3260 = vperm.xlu0 %3259, %v850
        %v3261 = vpop.permute.xlu0 %3260
        %3264 = vset.pattern.permute.xlu0 0
        %3265 = vperm.xlu0 %3264, %v851
        %v3266 = vpop.permute.xlu0 %3265
        %v3268 = vmul.f32 %v3244, %v3251
        %v3269 = vmul.f32 %v3245, %v3256
        %v3270 = vmul.f32 %v3246, %v3261
        %v3271 = vmul.f32 %v3247, %v3266
        %3272 = vst [vmem:[#allocation2] sm:$0xff] %v3268
        %3273 = vst [vmem:[#allocation2 + $0x8] sm:$0xff] %v3269
        %3274 = vst [vmem:[#allocation2 + $0x10] sm:$0xff] %v3270
        %3275 = vst [vmem:[#allocation2 + $0x18] sm:$0xff] %v3271
        %p3276 = scmp.eq.s32.totalorder %s48, 1
        // Predicated region
        $region113: #{semantic_transformer.1} parent=63 // pred_check
          %p3277 = pneg %p3276
        $region114: #{semantic_transformer.1} parent=63 // pred_check_branch
          %3279 = sbr.rel (%p3277) target = $region116
        $region115: #{semantic_transformer.1} parent=63 // pred_region
          %v3280 = vld [vmem:[#allocation21] sm:$0x1]
          %v3281 = vld [vmem:[#allocation21 + $0x1] sm:$0x1]
          %3282 = vadd.xlane.f32.xlu0 %v3268
          %v3283 = vpop.xlane.xlu0 %3282
          %3284 = vadd.xlane.f32.xlu0 %v3269
          %v3285 = vpop.xlane.xlu0 %3284
          %3286 = vadd.xlane.f32.xlu0 %v3270
          %v3287 = vpop.xlane.xlu0 %3286
          %3288 = vadd.xlane.f32.xlu0 %v3271
          %v3289 = vpop.xlane.xlu0 %3288
          %v3290 = vmul.f32 %v3283, %v865
          %v3291 = vmul.f32 %v3285, %v865
          %v3292 = vmul.f32 %v3287, %v865
          %v3293 = vmul.f32 %v3289, %v865
          %v3294 = vsub.f32 %v3268, %v3290
          %v3295 = vsub.f32 %v3269, %v3291
          %v3296 = vsub.f32 %v3270, %v3292
          %v3297 = vsub.f32 %v3271, %v3293
          %v3298 = vmul.f32 %v3294, %v3294
          %v3299 = vmul.f32 %v3295, %v3295
          %v3300 = vmul.f32 %v3296, %v3296
          %v3301 = vmul.f32 %v3297, %v3297
          %3302 = vadd.xlane.f32.xlu0 %v3298
          %v3303 = vpop.xlane.xlu0 %3302
          %3304 = vadd.xlane.f32.xlu0 %v3299
          %v3305 = vpop.xlane.xlu0 %3304
          %3306 = vadd.xlane.f32.xlu0 %v3300
          %v3307 = vpop.xlane.xlu0 %3306
          %3308 = vadd.xlane.f32.xlu0 %v3301
          %v3309 = vpop.xlane.xlu0 %3308
          %v3310 = vmul.f32 %v3303, %v865
          %v3311 = vmul.f32 %v3305, %v865
          %v3312 = vmul.f32 %v3307, %v865
          %v3313 = vmul.f32 %v3309, %v865
          %v3314 = vadd.f32 %v3310, 1e-05
          %v3315 = vadd.f32 %v3311, 1e-05
          %v3316 = vadd.f32 %v3312, 1e-05
          %v3317 = vadd.f32 %v3313, 1e-05
          %v3318 = vrsqrt.pop %v3314
          %v3319 = vrsqrt.pop %v3315
          %v3320 = vrsqrt.pop %v3316
          %v3321 = vrsqrt.pop %v3317
          %v3322 = vmul.f32 %v3294, %v3318
          %v3323 = vmul.f32 %v3295, %v3319
          %v3324 = vmul.f32 %v3296, %v3320
          %v3325 = vmul.f32 %v3297, %v3321
          %v3326 = vlaneseq
          %v3327 = vshrl.u32 %v3326, 7
          %v3328 = vsub.s32 0, %v3327
          %v3329 = vrot.slane %v3280, %v3328
          %v3330 = vmul.f32 %v3322, %v3329
          %v3331 = vmul.f32 %v3323, %v3329
          %v3332 = vmul.f32 %v3324, %v3329
          %v3333 = vmul.f32 %v3325, %v3329
          %v3334 = vlaneseq
          %v3335 = vshrl.u32 %v3334, 7
          %v3336 = vsub.s32 0, %v3335
          %v3337 = vrot.slane %v3281, %v3336
          %v3338 = vadd.f32 %v3330, %v3337
          %v3339 = vadd.f32 %v3331, %v3337
          %v3340 = vadd.f32 %v3332, %v3337
          %v3341 = vadd.f32 %v3333, %v3337
          %3342 = vst [vmem:[%s771] sm:$0xff] %v3338
          %3343 = vst [vmem:[%s771 + $0x8] sm:$0xff] %v3339
          %3344 = vst [vmem:[%s771 + $0x10] sm:$0xff] %v3340
          %3345 = vst [vmem:[%s771 + $0x18] sm:$0xff] %v3341
        $region116: #{semantic_transformer.1} parent=63 // pred_fallthru
          _
        %s3346 = sand.u32 %s344, 1
        %s3347 = scalar_lea.sflag [#allocation6], %s3346
        %s3348 = sand.u32 %s344, 1
        %s3349 = smul.addr %s3348, 32
        %s3350 = scalar_lea.vmem [#allocation22], %s3349
        // Predicated region
        $region117: #{semantic_transformer.1} parent=63 // pred_check
          %p3351 = pneg %p354
        $region118: #{semantic_transformer.1} parent=63 // pred_check_branch
          %3353 = sbr.rel (%p3351) target = $region120
        $region119: #{semantic_transformer.1} parent=63 // pred_region
          %s3354 = smul.u32 2, %s47
          %s3356 = ssub.s32 512, 512
          %3357 = vsyncadd %s3347, %s3356
          %s3358 = smul.addr %s3354, 2
          %s3359 = smul.addr %s3358, 128
          %s3360 = scalar_lea.hbm %s11, %s3359
          %s3361 = sshll.u32 %s3350, 4
          %s3362 = int_to_ptr.vmem [resolvable:$true] %s3361
          %3367 = dma.vmem_to_hbm [thread:$0]  %s3362, 512, %s3360, %s3347, 128, 128, 8
        $region120: #{semantic_transformer.1} parent=63 // pred_fallthru
          _
      $region64: #{semantic_transformer.1} parent=5 // pred_fallthru
        _
      %p3368 = scmp.le.s32.totalorder 2, %s38
      // Predicated region
      $region121: #{semantic_transformer.1} parent=5 // pred_check
        %p3369 = pneg %p3368
      $region122: #{semantic_transformer.1} parent=5 // pred_check_branch
        %3371 = sbr.rel (%p3369) target = $region124
      $region123: #{semantic_transformer.1} parent=5 // pred_region
        %s3372 = ssub.s32 %s38, 2
        // Predicated region
        $region125: #{semantic_transformer.1} parent=123 // pred_check
          %p3373 = pneg %p360
        $region126: #{semantic_transformer.1} parent=123 // pred_check_branch
          %3375 = sbr.rel (%p3373) target = $region128
        $region127: #{semantic_transformer.1} parent=123 // pred_region
          %s3376 = sand.u32 %s345, 1
          %s3377 = scalar_lea.sflag [#allocation6], %s3376
          %s3378 = sand.u32 %s345, 1
          %s3379 = smul.addr %s3378, 32
          %s3380 = scalar_lea.vmem [#allocation22], %s3379
          %3381 = dma.done %s3377, 512
        $region128: #{semantic_transformer.1} parent=123 // pred_fallthru
          _
      $region124: #{semantic_transformer.1} parent=5 // pred_fallthru
        _
    $region6: #{semantic_transformer.1} parent=1 // loop_footer
      %s42 = sadd.s32 1, %s38
    $region7: #{semantic_transformer.1} parent=1 // loop_footer_branch
      %37 = sbr.rel target = $region3
    $region8: #{semantic_transformer.1} parent=1 // loop_exit
      _
    %3382 = vsyncpa [#allocation5], 1
    %s3383 = scalar_lea.sflag [#allocation5], 1
    %3384 = vsyncpa %s3383, 1
    %3385 = vsyncpa [#allocation8], 1
    %s3386 = scalar_lea.sflag [#allocation8], 1
    %3387 = vsyncpa %s3386, 1
    %3388 = vsyncpa [#allocation11], 1
    %s3389 = scalar_lea.sflag [#allocation11], 1
    %3390 = vsyncpa %s3389, 1
    %3391 = vsyncpa [#allocation14], 1
    %s3392 = scalar_lea.sflag [#allocation14], 1
    %3393 = vsyncpa %s3392, 1
    %3394 = vsyncpa [#allocation17], 1
    %s3395 = scalar_lea.sflag [#allocation17], 1
    %3396 = vsyncpa %s3395, 1
    %3397 = vsyncpa [#allocation20], 1
    %s3398 = scalar_lea.sflag [#allocation20], 1
    %3399 = vsyncpa %s3398, 1
    %3400 = vsyncpa [#allocation6], 1
    %s3401 = scalar_lea.sflag [#allocation6], 1
    %3402 = vsyncpa %s3401, 1

</llo_original>
